<compile_context>
chip_gen: v7x
topology: tpu7x:2x2x1
jax: 0.10.0
libtpu: 0.0.40
codegen_flags: <defaults>
</compile_context>

<pallas_src>
import functools

import jax
import jax.numpy as jnp
from jax.experimental import pallas as pl
from jax.experimental.pallas import tpu as pltpu


def _round_up(x, m):
    return (x + m - 1) // m * m


def capsule_kernel(x_ref, w_ref, segb_ref, segsel_ref, out_ref, *,
                   ni, no, do, pair, n_routing=3):
    lanes = no * do              # per-input-capsule slab width (No*Do)
    pw = pair * lanes            # chunk width fed to each selector matmul
    nchunks = ni // pair
    lane_axis = 1

    x = x_ref[...]               # (TB, ni*di)        lane-dense
    w = w_ref[...]               # (ni*di, ni*lanes)  block-diagonal over i
    segb = segb_ref[...]         # (lanes, lanes)     1 where same Do-segment
    segsel = segsel_ref[...]     # (pw, pw)           same pattern, pw lanes

    def cross_seg_sum(e):
        # denom[b, j*do+o] = sum_j' e[b, j'*do+o] via cyclic lane rolls (XLU),
        # replacing the former crossb MXU matmul.  Shifts are multiples of Do,
        # so the in-segment offset o is preserved.
        if no & (no - 1) == 0:                       # power-of-two #segments
            shift = do
            while shift < lanes:
                e = e + pltpu.roll(e, shift=shift, axis=lane_axis)
                shift *= 2
            return e
        acc = e
        for k in range(1, no):
            acc = acc + pltpu.roll(e, shift=k * do, axis=lane_axis)
        return acc

    def seg_scale(sumsq):
        # squash scale; matches torch: norm/(1+norm**2) * 1/(norm+1e-8)
        norm = jnp.sqrt(sumsq)
        return norm / ((1.0 + sumsq) * (norm + 1e-8))

    def squash1(t):              # squash a single (TB, lanes) slab (MXU segsum)
        sumsq = jnp.dot(t * t, segb, preferred_element_type=jnp.float32)
        return t * seg_scale(sumsq)

    def seg_sum_chunk(t):        # per-Do-segment sum of a (TB, pw) chunk (MXU)
        return jnp.dot(t, segsel, preferred_element_type=jnp.float32)

    # ---- prediction step: ONE MXU matmul --------------------------------
    # u[b, i*lanes + j*do + o] = sum_d x[b,i,d] * W[j,i,d,o]
    u = jnp.dot(x, w, preferred_element_type=jnp.float32)   # (TB, ni*lanes)

    # ---- squash u over each Do-segment, pw lanes per selector matmul -----
    u_hat = []                                               # nchunks x (TB, pw)
    for k in range(nchunks):
        uc = u[:, k * pw:(k + 1) * pw]                       # free lane slice
        u_hat.append(uc * seg_scale(seg_sum_chunk(uc * uc)))

    # free 128-lane per-input-capsule views of u_hat
    uh = [u_hat[k][:, p * lanes:(p + 1) * lanes]
          for k in range(nchunks) for p in range(pair)]

    def vtile(v):                # (TB, lanes) -> (TB, pw)
        return v if pair == 1 else jnp.concatenate([v] * pair, axis=lane_axis)

    # ---- routing iteration 0: b == 0  =>  c == 1/no exactly --------------
    s = uh[0]
    for i in range(1, ni):
        s = s + uh[i]
    v = squash1(s * (1.0 / no))

    # b kept in broadcast form, chunked:
    #   b_c[k][b, p*lanes + j*do + o] == b[b, j, i = k*pair + p]  for all o
    vv = vtile(v)
    b_c = [seg_sum_chunk(u_hat[k] * vv) for k in range(nchunks)]

    # ---- routing iterations 1 .. n_routing-1 -----------------------------
    # |b| <= 0.5 for n_routing == 3 (each increment is a product of two
    # squashed norms <= 0.5), so exp() needs no max-subtraction.  Re-check
    # this bound if n_routing is ever raised.
    for it in range(1, n_routing):
        s = None
        for k in range(nchunks):
            e = jnp.exp(b_c[k])                              # EUP
            for p in range(pair):
                ep = e[:, p * lanes:(p + 1) * lanes]         # free lane slice
                c = ep / cross_seg_sum(ep)                   # softmax over j
                cu = c * uh[k * pair + p]
                s = cu if s is None else s + cu
        v = squash1(s)
        if it < n_routing - 1:
            vv = vtile(v)
            for k in range(nchunks):
                b_c[k] = b_c[k] + seg_sum_chunk(u_hat[k] * vv)

    out_ref[...] = v             # (TB, lanes) unmasked lane-dense store


def _selector_pair_width(ni):
    """2 when the MXU is 256x256 (v6e / v7x) and Ni is even, else 1 (v5e & older)."""
    try:
        kind = jax.devices()[0].device_kind.lower()
    except Exception:
        return 1
    wide_mxu = ("v6" in kind) or ("v7" in kind) or ("7x" in kind)
    return 2 if (wide_mxu and ni % 2 == 0) else 1


@functools.partial(jax.jit, static_argnames=("tb",))
def capsule_layer(x, W, *, tb=512):
    """x: (B, Ni, Di), W: (No, Ni, Di, Do) -> v: (B, No, Do) float32."""
    B, Ni, Di = x.shape
    No, Ni2, Di2, Do = W.shape
    assert (Ni, Di) == (Ni2, Di2)
    lanes = No * Do            # 128 for the reference config (4 * 32)
    kdim = Ni * Di             # 128 for the reference config (8 * 16)

    pair = _selector_pair_width(Ni)
    pw = pair * lanes

    x2 = x.reshape(B, kdim).astype(jnp.float32)

    # Pack W into a block-diagonal (Ni*Di, Ni*No*Do) matrix so that
    #   (x2 @ Wbig)[b, i*lanes + j*Do + o] = sum_d x[b,i,d] * W[j,i,d,o].
    Wp = jnp.transpose(W.astype(jnp.float32), (1, 2, 0, 3)).reshape(Ni, Di, lanes)
    eye = jnp.eye(Ni, dtype=jnp.float32)
    Wbig = jnp.einsum('idl,ik->idkl', Wp, eye).reshape(kdim, Ni * lanes)

    # Constant 0/1 selector matrices for Do-segment reductions on the MXU.
    # Kept f32 (exact); bf16/mixed-precision selector dots would need separate
    # verification against the 1e-5 gate (review follow-up).
    def seg_selector(n):
        lane = jnp.arange(n)
        return (lane[:, None] // Do == lane[None, :] // Do).astype(jnp.float32)

    segb = seg_selector(lanes)         # (lanes, lanes) single-slab squash
    segsel = seg_selector(pw)          # (pw, pw)       paired-chunk reductions

    # ---- batch tiling -----------------------------------------------------
    TB = min(tb, B)
    if B > 8:
        # Ensure >= 2 grid steps so ("parallel",) can split work across both
        # v7x TensorCores, and keep blocks sublane-aligned (multiple of 8).
        TB = min(TB, _round_up(pl.cdiv(B, 2), 8))
        TB = max(8, (TB // 8) * 8)
    nb = pl.cdiv(B, TB)
    Bp = nb * TB
    if Bp != B:                # zero-pad batch; padded rows produce v == 0
        x2 = jnp.pad(x2, ((0, Bp - B), (0, 0)))

    # Intermediates scale ~linearly with TB (~28 KiB/row incl. double buffers
    # and constants); stay well under v7x's 64 MiB physical VMEM.
    vmem_bytes = int(min(48 * 2**20, max(24 * 2**20, TB * 28 * 1024 + 4 * 2**20)))

    kernel = functools.partial(capsule_kernel, ni=Ni, no=No, do=Do, pair=pair)
    out = pl.pallas_call(
        kernel,
        out_shape=jax.ShapeDtypeStruct((Bp, lanes), jnp.float32),
        grid=(nb,),
        in_specs=[
            pl.BlockSpec((TB, kdim), lambda b: (b, 0)),
            pl.BlockSpec((kdim, Ni * lanes), lambda b: (0, 0)),
            pl.BlockSpec((lanes, lanes), lambda b: (0, 0)),
            pl.BlockSpec((pw, pw), lambda b: (0, 0)),
        ],
        out_specs=pl.BlockSpec((TB, lanes), lambda b: (b, 0)),
        compiler_params=pltpu.CompilerParams(
            dimension_semantics=("parallel",),
            vmem_limit_bytes=vmem_bytes),
    )(x2, Wbig, segb, segsel)
    return out[:B].reshape(B, No, Do)


# ---------------- pure-JAX reference (mirrors the PyTorch forward) -----------
def _squash_ref(t):
    norm = jnp.sqrt(jnp.sum(t * t, axis=-1, keepdims=True))
    return norm / (1.0 + norm * norm) * (t / (norm + 1e-8))


def capsule_layer_ref(x, W):
    u = jnp.einsum('bid,jido->bjio', x, W)          # (B, No, Ni, Do)
    u_hat = _squash_ref(u)
    B, No, Ni, Do = u_hat.shape
    b = jnp.zeros((B, No, Ni), jnp.float32)
    v = None
    for i in range(3):
        c = jax.nn.softmax(b, axis=1)
        s = jnp.sum(c[..., None] * u_hat, axis=2)
        v = _squash_ref(s)
        if i < 2:
            b = b + jnp.sum(u_hat * v[:, :, None, :], axis=-1)
    return v


if __name__ == "__main__":
    num_input_capsules = 8
    num_output_capsules = 4
    input_dim = 16
    output_dim = 32

    key = jax.random.PRNGKey(0)
    kx, kw, kx2 = jax.random.split(key, 3)
    W = jax.random.normal(
        kw, (num_output_capsules, num_input_capsules, input_dim, output_dim),
        jnp.float32)

    # Small smoke test (single grid step, TB == B == 2).
    batch = 2
    x = jax.random.normal(kx, (batch, num_input_capsules, input_dim), jnp.float32)
    v = capsule_layer(x, W)
    jax.block_until_ready(v)
    v_ref = capsule_layer_ref(x, W)
    assert v.shape == (batch, num_output_capsules, output_dim)
    assert jnp.allclose(v, v_ref, atol=1e-5, rtol=1e-5), \
        float(jnp.max(jnp.abs(v - v_ref)))

    # Larger batch: exercises the 2-step batch-tiled grid (megacore split)
    # and the zero-padded tail rows.
    batch2 = 300
    xb = jax.random.normal(kx2, (batch2, num_input_capsules, input_dim),
                           jnp.float32)
    vb = capsule_layer(xb, W)
    jax.block_until_ready(vb)
    vb_ref = capsule_layer_ref(xb, W)
    assert vb.shape == (batch2, num_output_capsules, output_dim)
    assert jnp.allclose(vb, vb_ref, atol=1e-5, rtol=1e-5), \
        float(jnp.max(jnp.abs(vb - vb_ref)))

    print("KERNEL_OK")
</pallas_src>

<mosaic_0001>
module attributes {stable_mosaic.version = 11 : i64} {
  func.func @capsule_kernel(%arg0: i32, %arg1: memref<2x128xf32, #tpu.memory_space<vmem>>, %arg2: memref<128x1024xf32, #tpu.memory_space<vmem>>, %arg3: memref<128x128xf32, #tpu.memory_space<vmem>>, %arg4: memref<128x128xf32, #tpu.memory_space<vmem>>, %arg5: memref<2x128xf32, #tpu.memory_space<vmem>>) attributes {dimension_semantics = [#tpu.dimension_semantics<parallel>], iteration_bounds = array<i64: 1>, scalar_prefetch = 0 : i64, scratch_operands = 0 : i64, tpu.core_type = #tpu.core_type<tc>, window_params = [{transform_indices = @transform_0, window_bounds = array<i64: 2, 128>}, {pipeline_mode = #tpu.pipeline_mode<synchronous>, transform_indices = @transform_1, window_bounds = array<i64: 128, 1024>}, {pipeline_mode = #tpu.pipeline_mode<synchronous>, transform_indices = @transform_2, window_bounds = array<i64: 128, 128>}, {pipeline_mode = #tpu.pipeline_mode<synchronous>, transform_indices = @transform_3, window_bounds = array<i64: 128, 128>}, {transform_indices = @transform_4, window_bounds = array<i64: 2, 128>}]} {
    %c0 = arith.constant 0 : index
    %c0_0 = arith.constant 0 : index
    %0 = vector.load %arg1[%c0, %c0_0] : memref<2x128xf32, #tpu.memory_space<vmem>>, vector<2x128xf32>
    %c0_1 = arith.constant 0 : index
    %c0_2 = arith.constant 0 : index
    %1 = vector.load %arg2[%c0_1, %c0_2] : memref<128x1024xf32, #tpu.memory_space<vmem>>, vector<128x1024xf32>
    %c0_3 = arith.constant 0 : index
    %c0_4 = arith.constant 0 : index
    %2 = vector.load %arg3[%c0_3, %c0_4] : memref<128x128xf32, #tpu.memory_space<vmem>>, vector<128x128xf32>
    %c0_5 = arith.constant 0 : index
    %c0_6 = arith.constant 0 : index
    %3 = vector.load %arg4[%c0_5, %c0_6] : memref<128x128xf32, #tpu.memory_space<vmem>>, vector<128x128xf32>
    %cst = arith.constant dense<0.000000e+00> : vector<2x1024xf32>
    %4 = tpu.matmul %0, %1, %cst {dimension_numbers = #tpu.dot_dimension_numbers<[1], [0], [0], [1], [0, 0, 1, 1], [], []>} : vector<2x128xf32>, vector<128x1024xf32>, vector<2x1024xf32> -> vector<2x1024xf32>
    %5 = vector.extract_strided_slice %4 {offsets = [0, 0], sizes = [2, 128], strides = [1, 1]} : vector<2x1024xf32> to vector<2x128xf32>
    %6 = arith.mulf %5, %5 : vector<2x128xf32>
    %cst_7 = arith.constant dense<0.000000e+00> : vector<2x128xf32>
    %7 = tpu.matmul %6, %3, %cst_7 {dimension_numbers = #tpu.dot_dimension_numbers<[1], [0], [0], [1], [0, 0, 1, 1], [], []>} : vector<2x128xf32>, vector<128x128xf32>, vector<2x128xf32> -> vector<2x128xf32>
    %8 = math.sqrt %7 : vector<2x128xf32>
    %cst_8 = arith.constant 1.000000e+00 : f32
    %9 = vector.broadcast %cst_8 : f32 to vector<2x128xf32>
    %10 = arith.addf %9, %7 : vector<2x128xf32>
    %cst_9 = arith.constant 9.99999993E-9 : f32
    %11 = vector.broadcast %cst_9 : f32 to vector<2x128xf32>
    %12 = arith.addf %8, %11 : vector<2x128xf32>
    %13 = arith.mulf %10, %12 : vector<2x128xf32>
    %14 = arith.divf %8, %13 : vector<2x128xf32>
    %15 = arith.mulf %5, %14 : vector<2x128xf32>
    %16 = vector.extract_strided_slice %4 {offsets = [0, 128], sizes = [2, 128], strides = [1, 1]} : vector<2x1024xf32> to vector<2x128xf32>
    %17 = arith.mulf %16, %16 : vector<2x128xf32>
    %cst_10 = arith.constant dense<0.000000e+00> : vector<2x128xf32>
    %18 = tpu.matmul %17, %3, %cst_10 {dimension_numbers = #tpu.dot_dimension_numbers<[1], [0], [0], [1], [0, 0, 1, 1], [], []>} : vector<2x128xf32>, vector<128x128xf32>, vector<2x128xf32> -> vector<2x128xf32>
    %19 = math.sqrt %18 : vector<2x128xf32>
    %cst_11 = arith.constant 1.000000e+00 : f32
    %20 = vector.broadcast %cst_11 : f32 to vector<2x128xf32>
    %21 = arith.addf %20, %18 : vector<2x128xf32>
    %cst_12 = arith.constant 9.99999993E-9 : f32
    %22 = vector.broadcast %cst_12 : f32 to vector<2x128xf32>
    %23 = arith.addf %19, %22 : vector<2x128xf32>
    %24 = arith.mulf %21, %23 : vector<2x128xf32>
    %25 = arith.divf %19, %24 : vector<2x128xf32>
    %26 = arith.mulf %16, %25 : vector<2x128xf32>
    %27 = vector.extract_strided_slice %4 {offsets = [0, 256], sizes = [2, 128], strides = [1, 1]} : vector<2x1024xf32> to vector<2x128xf32>
    %28 = arith.mulf %27, %27 : vector<2x128xf32>
    %cst_13 = arith.constant dense<0.000000e+00> : vector<2x128xf32>
    %29 = tpu.matmul %28, %3, %cst_13 {dimension_numbers = #tpu.dot_dimension_numbers<[1], [0], [0], [1], [0, 0, 1, 1], [], []>} : vector<2x128xf32>, vector<128x128xf32>, vector<2x128xf32> -> vector<2x128xf32>
    %30 = math.sqrt %29 : vector<2x128xf32>
    %cst_14 = arith.constant 1.000000e+00 : f32
    %31 = vector.broadcast %cst_14 : f32 to vector<2x128xf32>
    %32 = arith.addf %31, %29 : vector<2x128xf32>
    %cst_15 = arith.constant 9.99999993E-9 : f32
    %33 = vector.broadcast %cst_15 : f32 to vector<2x128xf32>
    %34 = arith.addf %30, %33 : vector<2x128xf32>
    %35 = arith.mulf %32, %34 : vector<2x128xf32>
    %36 = arith.divf %30, %35 : vector<2x128xf32>
    %37 = arith.mulf %27, %36 : vector<2x128xf32>
    %38 = vector.extract_strided_slice %4 {offsets = [0, 384], sizes = [2, 128], strides = [1, 1]} : vector<2x1024xf32> to vector<2x128xf32>
    %39 = arith.mulf %38, %38 : vector<2x128xf32>
    %cst_16 = arith.constant dense<0.000000e+00> : vector<2x128xf32>
    %40 = tpu.matmul %39, %3, %cst_16 {dimension_numbers = #tpu.dot_dimension_numbers<[1], [0], [0], [1], [0, 0, 1, 1], [], []>} : vector<2x128xf32>, vector<128x128xf32>, vector<2x128xf32> -> vector<2x128xf32>
    %41 = math.sqrt %40 : vector<2x128xf32>
    %cst_17 = arith.constant 1.000000e+00 : f32
    %42 = vector.broadcast %cst_17 : f32 to vector<2x128xf32>
    %43 = arith.addf %42, %40 : vector<2x128xf32>
    %cst_18 = arith.constant 9.99999993E-9 : f32
    %44 = vector.broadcast %cst_18 : f32 to vector<2x128xf32>
    %45 = arith.addf %41, %44 : vector<2x128xf32>
    %46 = arith.mulf %43, %45 : vector<2x128xf32>
    %47 = arith.divf %41, %46 : vector<2x128xf32>
    %48 = arith.mulf %38, %47 : vector<2x128xf32>
    %49 = vector.extract_strided_slice %4 {offsets = [0, 512], sizes = [2, 128], strides = [1, 1]} : vector<2x1024xf32> to vector<2x128xf32>
    %50 = arith.mulf %49, %49 : vector<2x128xf32>
    %cst_19 = arith.constant dense<0.000000e+00> : vector<2x128xf32>
    %51 = tpu.matmul %50, %3, %cst_19 {dimension_numbers = #tpu.dot_dimension_numbers<[1], [0], [0], [1], [0, 0, 1, 1], [], []>} : vector<2x128xf32>, vector<128x128xf32>, vector<2x128xf32> -> vector<2x128xf32>
    %52 = math.sqrt %51 : vector<2x128xf32>
    %cst_20 = arith.constant 1.000000e+00 : f32
    %53 = vector.broadcast %cst_20 : f32 to vector<2x128xf32>
    %54 = arith.addf %53, %51 : vector<2x128xf32>
    %cst_21 = arith.constant 9.99999993E-9 : f32
    %55 = vector.broadcast %cst_21 : f32 to vector<2x128xf32>
    %56 = arith.addf %52, %55 : vector<2x128xf32>
    %57 = arith.mulf %54, %56 : vector<2x128xf32>
    %58 = arith.divf %52, %57 : vector<2x128xf32>
    %59 = arith.mulf %49, %58 : vector<2x128xf32>
    %60 = vector.extract_strided_slice %4 {offsets = [0, 640], sizes = [2, 128], strides = [1, 1]} : vector<2x1024xf32> to vector<2x128xf32>
    %61 = arith.mulf %60, %60 : vector<2x128xf32>
    %cst_22 = arith.constant dense<0.000000e+00> : vector<2x128xf32>
    %62 = tpu.matmul %61, %3, %cst_22 {dimension_numbers = #tpu.dot_dimension_numbers<[1], [0], [0], [1], [0, 0, 1, 1], [], []>} : vector<2x128xf32>, vector<128x128xf32>, vector<2x128xf32> -> vector<2x128xf32>
    %63 = math.sqrt %62 : vector<2x128xf32>
    %cst_23 = arith.constant 1.000000e+00 : f32
    %64 = vector.broadcast %cst_23 : f32 to vector<2x128xf32>
    %65 = arith.addf %64, %62 : vector<2x128xf32>
    %cst_24 = arith.constant 9.99999993E-9 : f32
    %66 = vector.broadcast %cst_24 : f32 to vector<2x128xf32>
    %67 = arith.addf %63, %66 : vector<2x128xf32>
    %68 = arith.mulf %65, %67 : vector<2x128xf32>
    %69 = arith.divf %63, %68 : vector<2x128xf32>
    %70 = arith.mulf %60, %69 : vector<2x128xf32>
    %71 = vector.extract_strided_slice %4 {offsets = [0, 768], sizes = [2, 128], strides = [1, 1]} : vector<2x1024xf32> to vector<2x128xf32>
    %72 = arith.mulf %71, %71 : vector<2x128xf32>
    %cst_25 = arith.constant dense<0.000000e+00> : vector<2x128xf32>
    %73 = tpu.matmul %72, %3, %cst_25 {dimension_numbers = #tpu.dot_dimension_numbers<[1], [0], [0], [1], [0, 0, 1, 1], [], []>} : vector<2x128xf32>, vector<128x128xf32>, vector<2x128xf32> -> vector<2x128xf32>
    %74 = math.sqrt %73 : vector<2x128xf32>
    %cst_26 = arith.constant 1.000000e+00 : f32
    %75 = vector.broadcast %cst_26 : f32 to vector<2x128xf32>
    %76 = arith.addf %75, %73 : vector<2x128xf32>
    %cst_27 = arith.constant 9.99999993E-9 : f32
    %77 = vector.broadcast %cst_27 : f32 to vector<2x128xf32>
    %78 = arith.addf %74, %77 : vector<2x128xf32>
    %79 = arith.mulf %76, %78 : vector<2x128xf32>
    %80 = arith.divf %74, %79 : vector<2x128xf32>
    %81 = arith.mulf %71, %80 : vector<2x128xf32>
    %82 = vector.extract_strided_slice %4 {offsets = [0, 896], sizes = [2, 128], strides = [1, 1]} : vector<2x1024xf32> to vector<2x128xf32>
    %83 = arith.mulf %82, %82 : vector<2x128xf32>
    %cst_28 = arith.constant dense<0.000000e+00> : vector<2x128xf32>
    %84 = tpu.matmul %83, %3, %cst_28 {dimension_numbers = #tpu.dot_dimension_numbers<[1], [0], [0], [1], [0, 0, 1, 1], [], []>} : vector<2x128xf32>, vector<128x128xf32>, vector<2x128xf32> -> vector<2x128xf32>
    %85 = math.sqrt %84 : vector<2x128xf32>
    %cst_29 = arith.constant 1.000000e+00 : f32
    %86 = vector.broadcast %cst_29 : f32 to vector<2x128xf32>
    %87 = arith.addf %86, %84 : vector<2x128xf32>
    %cst_30 = arith.constant 9.99999993E-9 : f32
    %88 = vector.broadcast %cst_30 : f32 to vector<2x128xf32>
    %89 = arith.addf %85, %88 : vector<2x128xf32>
    %90 = arith.mulf %87, %89 : vector<2x128xf32>
    %91 = arith.divf %85, %90 : vector<2x128xf32>
    %92 = arith.mulf %82, %91 : vector<2x128xf32>
    %93 = arith.addf %15, %26 : vector<2x128xf32>
    %94 = arith.addf %93, %37 : vector<2x128xf32>
    %95 = arith.addf %94, %48 : vector<2x128xf32>
    %96 = arith.addf %95, %59 : vector<2x128xf32>
    %97 = arith.addf %96, %70 : vector<2x128xf32>
    %98 = arith.addf %97, %81 : vector<2x128xf32>
    %99 = arith.addf %98, %92 : vector<2x128xf32>
    %cst_31 = arith.constant 2.500000e-01 : f32
    %100 = vector.broadcast %cst_31 : f32 to vector<2x128xf32>
    %101 = arith.mulf %99, %100 : vector<2x128xf32>
    %102 = arith.mulf %101, %101 : vector<2x128xf32>
    %cst_32 = arith.constant dense<0.000000e+00> : vector<2x128xf32>
    %103 = tpu.matmul %102, %2, %cst_32 {dimension_numbers = #tpu.dot_dimension_numbers<[1], [0], [0], [1], [0, 0, 1, 1], [], []>} : vector<2x128xf32>, vector<128x128xf32>, vector<2x128xf32> -> vector<2x128xf32>
    %104 = math.sqrt %103 : vector<2x128xf32>
    %cst_33 = arith.constant 1.000000e+00 : f32
    %105 = vector.broadcast %cst_33 : f32 to vector<2x128xf32>
    %106 = arith.addf %105, %103 : vector<2x128xf32>
    %cst_34 = arith.constant 9.99999993E-9 : f32
    %107 = vector.broadcast %cst_34 : f32 to vector<2x128xf32>
    %108 = arith.addf %104, %107 : vector<2x128xf32>
    %109 = arith.mulf %106, %108 : vector<2x128xf32>
    %110 = arith.divf %104, %109 : vector<2x128xf32>
    %111 = arith.mulf %101, %110 : vector<2x128xf32>
    %112 = arith.mulf %15, %111 : vector<2x128xf32>
    %cst_35 = arith.constant dense<0.000000e+00> : vector<2x128xf32>
    %113 = tpu.matmul %112, %3, %cst_35 {dimension_numbers = #tpu.dot_dimension_numbers<[1], [0], [0], [1], [0, 0, 1, 1], [], []>} : vector<2x128xf32>, vector<128x128xf32>, vector<2x128xf32> -> vector<2x128xf32>
    %114 = arith.mulf %26, %111 : vector<2x128xf32>
    %cst_36 = arith.constant dense<0.000000e+00> : vector<2x128xf32>
    %115 = tpu.matmul %114, %3, %cst_36 {dimension_numbers = #tpu.dot_dimension_numbers<[1], [0], [0], [1], [0, 0, 1, 1], [], []>} : vector<2x128xf32>, vector<128x128xf32>, vector<2x128xf32> -> vector<2x128xf32>
    %116 = arith.mulf %37, %111 : vector<2x128xf32>
    %cst_37 = arith.constant dense<0.000000e+00> : vector<2x128xf32>
    %117 = tpu.matmul %116, %3, %cst_37 {dimension_numbers = #tpu.dot_dimension_numbers<[1], [0], [0], [1], [0, 0, 1, 1], [], []>} : vector<2x128xf32>, vector<128x128xf32>, vector<2x128xf32> -> vector<2x128xf32>
    %118 = arith.mulf %48, %111 : vector<2x128xf32>
    %cst_38 = arith.constant dense<0.000000e+00> : vector<2x128xf32>
    %119 = tpu.matmul %118, %3, %cst_38 {dimension_numbers = #tpu.dot_dimension_numbers<[1], [0], [0], [1], [0, 0, 1, 1], [], []>} : vector<2x128xf32>, vector<128x128xf32>, vector<2x128xf32> -> vector<2x128xf32>
    %120 = arith.mulf %59, %111 : vector<2x128xf32>
    %cst_39 = arith.constant dense<0.000000e+00> : vector<2x128xf32>
    %121 = tpu.matmul %120, %3, %cst_39 {dimension_numbers = #tpu.dot_dimension_numbers<[1], [0], [0], [1], [0, 0, 1, 1], [], []>} : vector<2x128xf32>, vector<128x128xf32>, vector<2x128xf32> -> vector<2x128xf32>
    %122 = arith.mulf %70, %111 : vector<2x128xf32>
    %cst_40 = arith.constant dense<0.000000e+00> : vector<2x128xf32>
    %123 = tpu.matmul %122, %3, %cst_40 {dimension_numbers = #tpu.dot_dimension_numbers<[1], [0], [0], [1], [0, 0, 1, 1], [], []>} : vector<2x128xf32>, vector<128x128xf32>, vector<2x128xf32> -> vector<2x128xf32>
    %124 = arith.mulf %81, %111 : vector<2x128xf32>
    %cst_41 = arith.constant dense<0.000000e+00> : vector<2x128xf32>
    %125 = tpu.matmul %124, %3, %cst_41 {dimension_numbers = #tpu.dot_dimension_numbers<[1], [0], [0], [1], [0, 0, 1, 1], [], []>} : vector<2x128xf32>, vector<128x128xf32>, vector<2x128xf32> -> vector<2x128xf32>
    %126 = arith.mulf %92, %111 : vector<2x128xf32>
    %cst_42 = arith.constant dense<0.000000e+00> : vector<2x128xf32>
    %127 = tpu.matmul %126, %3, %cst_42 {dimension_numbers = #tpu.dot_dimension_numbers<[1], [0], [0], [1], [0, 0, 1, 1], [], []>} : vector<2x128xf32>, vector<128x128xf32>, vector<2x128xf32> -> vector<2x128xf32>
    %128 = math.exp %113 : vector<2x128xf32>
    %c32_i32 = arith.constant 32 : i32
    %129 = tpu.dynamic_rotate %128 by %c32_i32 dim 1 : vector<2x128xf32>, i32 -> vector<2x128xf32>
    %130 = arith.addf %128, %129 : vector<2x128xf32>
    %c64_i32 = arith.constant 64 : i32
    %131 = tpu.dynamic_rotate %130 by %c64_i32 dim 1 : vector<2x128xf32>, i32 -> vector<2x128xf32>
    %132 = arith.addf %130, %131 : vector<2x128xf32>
    %133 = arith.divf %128, %132 : vector<2x128xf32>
    %134 = arith.mulf %133, %15 : vector<2x128xf32>
    %135 = math.exp %115 : vector<2x128xf32>
    %c32_i32_43 = arith.constant 32 : i32
    %136 = tpu.dynamic_rotate %135 by %c32_i32_43 dim 1 : vector<2x128xf32>, i32 -> vector<2x128xf32>
    %137 = arith.addf %135, %136 : vector<2x128xf32>
    %c64_i32_44 = arith.constant 64 : i32
    %138 = tpu.dynamic_rotate %137 by %c64_i32_44 dim 1 : vector<2x128xf32>, i32 -> vector<2x128xf32>
    %139 = arith.addf %137, %138 : vector<2x128xf32>
    %140 = arith.divf %135, %139 : vector<2x128xf32>
    %141 = arith.mulf %140, %26 : vector<2x128xf32>
    %142 = arith.addf %134, %141 : vector<2x128xf32>
    %143 = math.exp %117 : vector<2x128xf32>
    %c32_i32_45 = arith.constant 32 : i32
    %144 = tpu.dynamic_rotate %143 by %c32_i32_45 dim 1 : vector<2x128xf32>, i32 -> vector<2x128xf32>
    %145 = arith.addf %143, %144 : vector<2x128xf32>
    %c64_i32_46 = arith.constant 64 : i32
    %146 = tpu.dynamic_rotate %145 by %c64_i32_46 dim 1 : vector<2x128xf32>, i32 -> vector<2x128xf32>
    %147 = arith.addf %145, %146 : vector<2x128xf32>
    %148 = arith.divf %143, %147 : vector<2x128xf32>
    %149 = arith.mulf %148, %37 : vector<2x128xf32>
    %150 = arith.addf %142, %149 : vector<2x128xf32>
    %151 = math.exp %119 : vector<2x128xf32>
    %c32_i32_47 = arith.constant 32 : i32
    %152 = tpu.dynamic_rotate %151 by %c32_i32_47 dim 1 : vector<2x128xf32>, i32 -> vector<2x128xf32>
    %153 = arith.addf %151, %152 : vector<2x128xf32>
    %c64_i32_48 = arith.constant 64 : i32
    %154 = tpu.dynamic_rotate %153 by %c64_i32_48 dim 1 : vector<2x128xf32>, i32 -> vector<2x128xf32>
    %155 = arith.addf %153, %154 : vector<2x128xf32>
    %156 = arith.divf %151, %155 : vector<2x128xf32>
    %157 = arith.mulf %156, %48 : vector<2x128xf32>
    %158 = arith.addf %150, %157 : vector<2x128xf32>
    %159 = math.exp %121 : vector<2x128xf32>
    %c32_i32_49 = arith.constant 32 : i32
    %160 = tpu.dynamic_rotate %159 by %c32_i32_49 dim 1 : vector<2x128xf32>, i32 -> vector<2x128xf32>
    %161 = arith.addf %159, %160 : vector<2x128xf32>
    %c64_i32_50 = arith.constant 64 : i32
    %162 = tpu.dynamic_rotate %161 by %c64_i32_50 dim 1 : vector<2x128xf32>, i32 -> vector<2x128xf32>
    %163 = arith.addf %161, %162 : vector<2x128xf32>
    %164 = arith.divf %159, %163 : vector<2x128xf32>
    %165 = arith.mulf %164, %59 : vector<2x128xf32>
    %166 = arith.addf %158, %165 : vector<2x128xf32>
    %167 = math.exp %123 : vector<2x128xf32>
    %c32_i32_51 = arith.constant 32 : i32
    %168 = tpu.dynamic_rotate %167 by %c32_i32_51 dim 1 : vector<2x128xf32>, i32 -> vector<2x128xf32>
    %169 = arith.addf %167, %168 : vector<2x128xf32>
    %c64_i32_52 = arith.constant 64 : i32
    %170 = tpu.dynamic_rotate %169 by %c64_i32_52 dim 1 : vector<2x128xf32>, i32 -> vector<2x128xf32>
    %171 = arith.addf %169, %170 : vector<2x128xf32>
    %172 = arith.divf %167, %171 : vector<2x128xf32>
    %173 = arith.mulf %172, %70 : vector<2x128xf32>
    %174 = arith.addf %166, %173 : vector<2x128xf32>
    %175 = math.exp %125 : vector<2x128xf32>
    %c32_i32_53 = arith.constant 32 : i32
    %176 = tpu.dynamic_rotate %175 by %c32_i32_53 dim 1 : vector<2x128xf32>, i32 -> vector<2x128xf32>
    %177 = arith.addf %175, %176 : vector<2x128xf32>
    %c64_i32_54 = arith.constant 64 : i32
    %178 = tpu.dynamic_rotate %177 by %c64_i32_54 dim 1 : vector<2x128xf32>, i32 -> vector<2x128xf32>
    %179 = arith.addf %177, %178 : vector<2x128xf32>
    %180 = arith.divf %175, %179 : vector<2x128xf32>
    %181 = arith.mulf %180, %81 : vector<2x128xf32>
    %182 = arith.addf %174, %181 : vector<2x128xf32>
    %183 = math.exp %127 : vector<2x128xf32>
    %c32_i32_55 = arith.constant 32 : i32
    %184 = tpu.dynamic_rotate %183 by %c32_i32_55 dim 1 : vector<2x128xf32>, i32 -> vector<2x128xf32>
    %185 = arith.addf %183, %184 : vector<2x128xf32>
    %c64_i32_56 = arith.constant 64 : i32
    %186 = tpu.dynamic_rotate %185 by %c64_i32_56 dim 1 : vector<2x128xf32>, i32 -> vector<2x128xf32>
    %187 = arith.addf %185, %186 : vector<2x128xf32>
    %188 = arith.divf %183, %187 : vector<2x128xf32>
    %189 = arith.mulf %188, %92 : vector<2x128xf32>
    %190 = arith.addf %182, %189 : vector<2x128xf32>
    %191 = arith.mulf %190, %190 : vector<2x128xf32>
    %cst_57 = arith.constant dense<0.000000e+00> : vector<2x128xf32>
    %192 = tpu.matmul %191, %2, %cst_57 {dimension_numbers = #tpu.dot_dimension_numbers<[1], [0], [0], [1], [0, 0, 1, 1], [], []>} : vector<2x128xf32>, vector<128x128xf32>, vector<2x128xf32> -> vector<2x128xf32>
    %193 = math.sqrt %192 : vector<2x128xf32>
    %cst_58 = arith.constant 1.000000e+00 : f32
    %194 = vector.broadcast %cst_58 : f32 to vector<2x128xf32>
    %195 = arith.addf %194, %192 : vector<2x128xf32>
    %cst_59 = arith.constant 9.99999993E-9 : f32
    %196 = vector.broadcast %cst_59 : f32 to vector<2x128xf32>
    %197 = arith.addf %193, %196 : vector<2x128xf32>
    %198 = arith.mulf %195, %197 : vector<2x128xf32>
    %199 = arith.divf %193, %198 : vector<2x128xf32>
    %200 = arith.mulf %190, %199 : vector<2x128xf32>
    %201 = arith.mulf %15, %200 : vector<2x128xf32>
    %cst_60 = arith.constant dense<0.000000e+00> : vector<2x128xf32>
    %202 = tpu.matmul %201, %3, %cst_60 {dimension_numbers = #tpu.dot_dimension_numbers<[1], [0], [0], [1], [0, 0, 1, 1], [], []>} : vector<2x128xf32>, vector<128x128xf32>, vector<2x128xf32> -> vector<2x128xf32>
    %203 = arith.addf %113, %202 : vector<2x128xf32>
    %204 = arith.mulf %26, %200 : vector<2x128xf32>
    %cst_61 = arith.constant dense<0.000000e+00> : vector<2x128xf32>
    %205 = tpu.matmul %204, %3, %cst_61 {dimension_numbers = #tpu.dot_dimension_numbers<[1], [0], [0], [1], [0, 0, 1, 1], [], []>} : vector<2x128xf32>, vector<128x128xf32>, vector<2x128xf32> -> vector<2x128xf32>
    %206 = arith.addf %115, %205 : vector<2x128xf32>
    %207 = arith.mulf %37, %200 : vector<2x128xf32>
    %cst_62 = arith.constant dense<0.000000e+00> : vector<2x128xf32>
    %208 = tpu.matmul %207, %3, %cst_62 {dimension_numbers = #tpu.dot_dimension_numbers<[1], [0], [0], [1], [0, 0, 1, 1], [], []>} : vector<2x128xf32>, vector<128x128xf32>, vector<2x128xf32> -> vector<2x128xf32>
    %209 = arith.addf %117, %208 : vector<2x128xf32>
    %210 = arith.mulf %48, %200 : vector<2x128xf32>
    %cst_63 = arith.constant dense<0.000000e+00> : vector<2x128xf32>
    %211 = tpu.matmul %210, %3, %cst_63 {dimension_numbers = #tpu.dot_dimension_numbers<[1], [0], [0], [1], [0, 0, 1, 1], [], []>} : vector<2x128xf32>, vector<128x128xf32>, vector<2x128xf32> -> vector<2x128xf32>
    %212 = arith.addf %119, %211 : vector<2x128xf32>
    %213 = arith.mulf %59, %200 : vector<2x128xf32>
    %cst_64 = arith.constant dense<0.000000e+00> : vector<2x128xf32>
    %214 = tpu.matmul %213, %3, %cst_64 {dimension_numbers = #tpu.dot_dimension_numbers<[1], [0], [0], [1], [0, 0, 1, 1], [], []>} : vector<2x128xf32>, vector<128x128xf32>, vector<2x128xf32> -> vector<2x128xf32>
    %215 = arith.addf %121, %214 : vector<2x128xf32>
    %216 = arith.mulf %70, %200 : vector<2x128xf32>
    %cst_65 = arith.constant dense<0.000000e+00> : vector<2x128xf32>
    %217 = tpu.matmul %216, %3, %cst_65 {dimension_numbers = #tpu.dot_dimension_numbers<[1], [0], [0], [1], [0, 0, 1, 1], [], []>} : vector<2x128xf32>, vector<128x128xf32>, vector<2x128xf32> -> vector<2x128xf32>
    %218 = arith.addf %123, %217 : vector<2x128xf32>
    %219 = arith.mulf %81, %200 : vector<2x128xf32>
    %cst_66 = arith.constant dense<0.000000e+00> : vector<2x128xf32>
    %220 = tpu.matmul %219, %3, %cst_66 {dimension_numbers = #tpu.dot_dimension_numbers<[1], [0], [0], [1], [0, 0, 1, 1], [], []>} : vector<2x128xf32>, vector<128x128xf32>, vector<2x128xf32> -> vector<2x128xf32>
    %221 = arith.addf %125, %220 : vector<2x128xf32>
    %222 = arith.mulf %92, %200 : vector<2x128xf32>
    %cst_67 = arith.constant dense<0.000000e+00> : vector<2x128xf32>
    %223 = tpu.matmul %222, %3, %cst_67 {dimension_numbers = #tpu.dot_dimension_numbers<[1], [0], [0], [1], [0, 0, 1, 1], [], []>} : vector<2x128xf32>, vector<128x128xf32>, vector<2x128xf32> -> vector<2x128xf32>
    %224 = arith.addf %127, %223 : vector<2x128xf32>
    %225 = math.exp %203 : vector<2x128xf32>
    %c32_i32_68 = arith.constant 32 : i32
    %226 = tpu.dynamic_rotate %225 by %c32_i32_68 dim 1 : vector<2x128xf32>, i32 -> vector<2x128xf32>
    %227 = arith.addf %225, %226 : vector<2x128xf32>
    %c64_i32_69 = arith.constant 64 : i32
    %228 = tpu.dynamic_rotate %227 by %c64_i32_69 dim 1 : vector<2x128xf32>, i32 -> vector<2x128xf32>
    %229 = arith.addf %227, %228 : vector<2x128xf32>
    %230 = arith.divf %225, %229 : vector<2x128xf32>
    %231 = arith.mulf %230, %15 : vector<2x128xf32>
    %232 = math.exp %206 : vector<2x128xf32>
    %c32_i32_70 = arith.constant 32 : i32
    %233 = tpu.dynamic_rotate %232 by %c32_i32_70 dim 1 : vector<2x128xf32>, i32 -> vector<2x128xf32>
    %234 = arith.addf %232, %233 : vector<2x128xf32>
    %c64_i32_71 = arith.constant 64 : i32
    %235 = tpu.dynamic_rotate %234 by %c64_i32_71 dim 1 : vector<2x128xf32>, i32 -> vector<2x128xf32>
    %236 = arith.addf %234, %235 : vector<2x128xf32>
    %237 = arith.divf %232, %236 : vector<2x128xf32>
    %238 = arith.mulf %237, %26 : vector<2x128xf32>
    %239 = arith.addf %231, %238 : vector<2x128xf32>
    %240 = math.exp %209 : vector<2x128xf32>
    %c32_i32_72 = arith.constant 32 : i32
    %241 = tpu.dynamic_rotate %240 by %c32_i32_72 dim 1 : vector<2x128xf32>, i32 -> vector<2x128xf32>
    %242 = arith.addf %240, %241 : vector<2x128xf32>
    %c64_i32_73 = arith.constant 64 : i32
    %243 = tpu.dynamic_rotate %242 by %c64_i32_73 dim 1 : vector<2x128xf32>, i32 -> vector<2x128xf32>
    %244 = arith.addf %242, %243 : vector<2x128xf32>
    %245 = arith.divf %240, %244 : vector<2x128xf32>
    %246 = arith.mulf %245, %37 : vector<2x128xf32>
    %247 = arith.addf %239, %246 : vector<2x128xf32>
    %248 = math.exp %212 : vector<2x128xf32>
    %c32_i32_74 = arith.constant 32 : i32
    %249 = tpu.dynamic_rotate %248 by %c32_i32_74 dim 1 : vector<2x128xf32>, i32 -> vector<2x128xf32>
    %250 = arith.addf %248, %249 : vector<2x128xf32>
    %c64_i32_75 = arith.constant 64 : i32
    %251 = tpu.dynamic_rotate %250 by %c64_i32_75 dim 1 : vector<2x128xf32>, i32 -> vector<2x128xf32>
    %252 = arith.addf %250, %251 : vector<2x128xf32>
    %253 = arith.divf %248, %252 : vector<2x128xf32>
    %254 = arith.mulf %253, %48 : vector<2x128xf32>
    %255 = arith.addf %247, %254 : vector<2x128xf32>
    %256 = math.exp %215 : vector<2x128xf32>
    %c32_i32_76 = arith.constant 32 : i32
    %257 = tpu.dynamic_rotate %256 by %c32_i32_76 dim 1 : vector<2x128xf32>, i32 -> vector<2x128xf32>
    %258 = arith.addf %256, %257 : vector<2x128xf32>
    %c64_i32_77 = arith.constant 64 : i32
    %259 = tpu.dynamic_rotate %258 by %c64_i32_77 dim 1 : vector<2x128xf32>, i32 -> vector<2x128xf32>
    %260 = arith.addf %258, %259 : vector<2x128xf32>
    %261 = arith.divf %256, %260 : vector<2x128xf32>
    %262 = arith.mulf %261, %59 : vector<2x128xf32>
    %263 = arith.addf %255, %262 : vector<2x128xf32>
    %264 = math.exp %218 : vector<2x128xf32>
    %c32_i32_78 = arith.constant 32 : i32
    %265 = tpu.dynamic_rotate %264 by %c32_i32_78 dim 1 : vector<2x128xf32>, i32 -> vector<2x128xf32>
    %266 = arith.addf %264, %265 : vector<2x128xf32>
    %c64_i32_79 = arith.constant 64 : i32
    %267 = tpu.dynamic_rotate %266 by %c64_i32_79 dim 1 : vector<2x128xf32>, i32 -> vector<2x128xf32>
    %268 = arith.addf %266, %267 : vector<2x128xf32>
    %269 = arith.divf %264, %268 : vector<2x128xf32>
    %270 = arith.mulf %269, %70 : vector<2x128xf32>
    %271 = arith.addf %263, %270 : vector<2x128xf32>
    %272 = math.exp %221 : vector<2x128xf32>
    %c32_i32_80 = arith.constant 32 : i32
    %273 = tpu.dynamic_rotate %272 by %c32_i32_80 dim 1 : vector<2x128xf32>, i32 -> vector<2x128xf32>
    %274 = arith.addf %272, %273 : vector<2x128xf32>
    %c64_i32_81 = arith.constant 64 : i32
    %275 = tpu.dynamic_rotate %274 by %c64_i32_81 dim 1 : vector<2x128xf32>, i32 -> vector<2x128xf32>
    %276 = arith.addf %274, %275 : vector<2x128xf32>
    %277 = arith.divf %272, %276 : vector<2x128xf32>
    %278 = arith.mulf %277, %81 : vector<2x128xf32>
    %279 = arith.addf %271, %278 : vector<2x128xf32>
    %280 = math.exp %224 : vector<2x128xf32>
    %c32_i32_82 = arith.constant 32 : i32
    %281 = tpu.dynamic_rotate %280 by %c32_i32_82 dim 1 : vector<2x128xf32>, i32 -> vector<2x128xf32>
    %282 = arith.addf %280, %281 : vector<2x128xf32>
    %c64_i32_83 = arith.constant 64 : i32
    %283 = tpu.dynamic_rotate %282 by %c64_i32_83 dim 1 : vector<2x128xf32>, i32 -> vector<2x128xf32>
    %284 = arith.addf %282, %283 : vector<2x128xf32>
    %285 = arith.divf %280, %284 : vector<2x128xf32>
    %286 = arith.mulf %285, %92 : vector<2x128xf32>
    %287 = arith.addf %279, %286 : vector<2x128xf32>
    %288 = arith.mulf %287, %287 : vector<2x128xf32>
    %cst_84 = arith.constant dense<0.000000e+00> : vector<2x128xf32>
    %289 = tpu.matmul %288, %2, %cst_84 {dimension_numbers = #tpu.dot_dimension_numbers<[1], [0], [0], [1], [0, 0, 1, 1], [], []>} : vector<2x128xf32>, vector<128x128xf32>, vector<2x128xf32> -> vector<2x128xf32>
    %290 = math.sqrt %289 : vector<2x128xf32>
    %cst_85 = arith.constant 1.000000e+00 : f32
    %291 = vector.broadcast %cst_85 : f32 to vector<2x128xf32>
    %292 = arith.addf %291, %289 : vector<2x128xf32>
    %cst_86 = arith.constant 9.99999993E-9 : f32
    %293 = vector.broadcast %cst_86 : f32 to vector<2x128xf32>
    %294 = arith.addf %290, %293 : vector<2x128xf32>
    %295 = arith.mulf %292, %294 : vector<2x128xf32>
    %296 = arith.divf %290, %295 : vector<2x128xf32>
    %297 = arith.mulf %287, %296 : vector<2x128xf32>
    %c0_87 = arith.constant 0 : index
    %c0_88 = arith.constant 0 : index
    %298 = vector.load %arg5[%c0_87, %c0_88] : memref<2x128xf32, #tpu.memory_space<vmem>>, vector<2x128xf32>
    tpu.vector_store %arg5[%c0_87, %c0_88], %297 {strides = array<i32>} : memref<2x128xf32, #tpu.memory_space<vmem>>, vector<2x128xf32>,
    return
  }
  func.func @transform_0(%arg0: i32) -> (i32, i32) {
    %c0_i32 = arith.constant 0 : i32
    %c0_i32_0 = arith.constant 0 : i32
    return %arg0, %c0_i32 : i32, i32
  }
  func.func @transform_1(%arg0: i32) -> (i32, i32) {
    %c0_i32 = arith.constant 0 : i32
    %c0_i32_0 = arith.constant 0 : i32
    %c0_i32_1 = arith.constant 0 : i32
    return %c0_i32, %c0_i32_0 : i32, i32
  }
  func.func @transform_2(%arg0: i32) -> (i32, i32) {
    %c0_i32 = arith.constant 0 : i32
    %c0_i32_0 = arith.constant 0 : i32
    %c0_i32_1 = arith.constant 0 : i32
    return %c0_i32, %c0_i32_0 : i32, i32
  }
  func.func @transform_3(%arg0: i32) -> (i32, i32) {
    %c0_i32 = arith.constant 0 : i32
    %c0_i32_0 = arith.constant 0 : i32
    %c0_i32_1 = arith.constant 0 : i32
    return %c0_i32, %c0_i32_0 : i32, i32
  }
  func.func @transform_4(%arg0: i32) -> (i32, i32) {
    %c0_i32 = arith.constant 0 : i32
    %c0_i32_0 = arith.constant 0 : i32
    return %arg0, %c0_i32 : i32, i32
  }
}

</mosaic_0001>

<llo_original>
// kernel: capsule_layer.1
$region0: #{capsule_layer.1}
  #allocation0 [shape = 'u32[]', space=smem, size = 0x4, offset = 0x4, fixed_abs, tag = 'smem constant byte address 0x4 - core index']
  #allocation1 [shape = 'u32[144,128]{1,0:T(1,128)}', space=vmem, size = 0x12000, scoped, tag = 'internal scratch']
  %s0 = inlined_call_operand.vmem [shape: f32[2,128], index: 0, kind: input, shape index: {}]
  %s1 = inlined_call_operand.vmem [shape: f32[128,1024], index: 1, kind: input, shape index: {}]
  %s2 = inlined_call_operand.vmem [shape: f32[128,128], index: 2, kind: input, shape index: {}, may-alias: {2,3}]
  %s3 = inlined_call_operand.vmem [shape: f32[128,128], index: 3, kind: input, shape index: {}, may-alias: {2,3}]
  %s4 = inlined_call_operand.vmem [shape: f32[2,128], index: 4, kind: output, shape index: {}]
  %s5 = sld [smem:[#allocation0]]
  $region26: #{capsule_layer.1} parent=0
    _
  %s7 = ssub.s32 1, %s5
  %s8 = scalar_select 0, %s7, %s5
  // Predicated region
  $region2: #{capsule_layer.1} parent=0 // pred_check
    _
  $region3: #{capsule_layer.1} parent=0 // pred_check_branch
    %10 = sbr.rel (0) target = $region5
  $region4: #{capsule_layer.1} parent=0 // pred_region
    _
  $region5: #{capsule_layer.1} parent=0 // pred_fallthru
    _
  // Predicated region
  $region6: #{capsule_layer.1} parent=0 // pred_check
    _
  $region7: #{capsule_layer.1} parent=0 // pred_check_branch
    %12 = sbr.rel (0) target = $region9
  $region8: #{capsule_layer.1} parent=0 // pred_region
    _
  $region9: #{capsule_layer.1} parent=0 // pred_fallthru
    _
  // Predicated region
  $region10: #{capsule_layer.1} parent=0 // pred_check
    _
  $region11: #{capsule_layer.1} parent=0 // pred_check_branch
    %14 = sbr.rel (0) target = $region13
  $region12: #{capsule_layer.1} parent=0 // pred_region
    _
  $region13: #{capsule_layer.1} parent=0 // pred_fallthru
    _
  // Predicated region
  $region14: #{capsule_layer.1} parent=0 // pred_check
    _
  $region15: #{capsule_layer.1} parent=0 // pred_check_branch
    %16 = sbr.rel (0) target = $region17
  $region16: #{capsule_layer.1} parent=0 // pred_region
    _
  $region17: #{capsule_layer.1} parent=0 // pred_fallthru
    _
  %v17 = vld [vmem:[%s0] sm:$0x3]
  %v18 = vld [vmem:[%s1] sm:$0xff]
  %v19 = vld [vmem:[%s1 + $0x8] sm:$0xff]
  %v20 = vld [vmem:[%s1 + $0x10] sm:$0xff]
  %v21 = vld [vmem:[%s1 + $0x18] sm:$0xff]
  %v22 = vld [vmem:[%s1 + $0x20] sm:$0xff]
  %v23 = vld [vmem:[%s1 + $0x28] sm:$0xff]
  %v24 = vld [vmem:[%s1 + $0x30] sm:$0xff]
  %v25 = vld [vmem:[%s1 + $0x38] sm:$0xff]
  %v26 = vld [vmem:[%s1 + $0x40] sm:$0xff]
  %v27 = vld [vmem:[%s1 + $0x48] sm:$0xff]
  %v28 = vld [vmem:[%s1 + $0x50] sm:$0xff]
  %v29 = vld [vmem:[%s1 + $0x58] sm:$0xff]
  %v30 = vld [vmem:[%s1 + $0x60] sm:$0xff]
  %v31 = vld [vmem:[%s1 + $0x68] sm:$0xff]
  %v32 = vld [vmem:[%s1 + $0x70] sm:$0xff]
  %v33 = vld [vmem:[%s1 + $0x78] sm:$0xff]
  %v34 = vld [vmem:[%s1 + $0x80] sm:$0xff]
  %v35 = vld [vmem:[%s1 + $0x88] sm:$0xff]
  %v36 = vld [vmem:[%s1 + $0x90] sm:$0xff]
  %v37 = vld [vmem:[%s1 + $0x98] sm:$0xff]
  %v38 = vld [vmem:[%s1 + $0xa0] sm:$0xff]
  %v39 = vld [vmem:[%s1 + $0xa8] sm:$0xff]
  %v40 = vld [vmem:[%s1 + $0xb0] sm:$0xff]
  %v41 = vld [vmem:[%s1 + $0xb8] sm:$0xff]
  %v42 = vld [vmem:[%s1 + $0xc0] sm:$0xff]
  %v43 = vld [vmem:[%s1 + $0xc8] sm:$0xff]
  %v44 = vld [vmem:[%s1 + $0xd0] sm:$0xff]
  %v45 = vld [vmem:[%s1 + $0xd8] sm:$0xff]
  %v46 = vld [vmem:[%s1 + $0xe0] sm:$0xff]
  %v47 = vld [vmem:[%s1 + $0xe8] sm:$0xff]
  %v48 = vld [vmem:[%s1 + $0xf0] sm:$0xff]
  %v49 = vld [vmem:[%s1 + $0xf8] sm:$0xff]
  %v50 = vld [vmem:[%s1 + $0x100] sm:$0xff]
  %v51 = vld [vmem:[%s1 + $0x108] sm:$0xff]
  %v52 = vld [vmem:[%s1 + $0x110] sm:$0xff]
  %v53 = vld [vmem:[%s1 + $0x118] sm:$0xff]
  %v54 = vld [vmem:[%s1 + $0x120] sm:$0xff]
  %v55 = vld [vmem:[%s1 + $0x128] sm:$0xff]
  %v56 = vld [vmem:[%s1 + $0x130] sm:$0xff]
  %v57 = vld [vmem:[%s1 + $0x138] sm:$0xff]
  %v58 = vld [vmem:[%s1 + $0x140] sm:$0xff]
  %v59 = vld [vmem:[%s1 + $0x148] sm:$0xff]
  %v60 = vld [vmem:[%s1 + $0x150] sm:$0xff]
  %v61 = vld [vmem:[%s1 + $0x158] sm:$0xff]
  %v62 = vld [vmem:[%s1 + $0x160] sm:$0xff]
  %v63 = vld [vmem:[%s1 + $0x168] sm:$0xff]
  %v64 = vld [vmem:[%s1 + $0x170] sm:$0xff]
  %v65 = vld [vmem:[%s1 + $0x178] sm:$0xff]
  %v66 = vld [vmem:[%s1 + $0x180] sm:$0xff]
  %v67 = vld [vmem:[%s1 + $0x188] sm:$0xff]
  %v68 = vld [vmem:[%s1 + $0x190] sm:$0xff]
  %v69 = vld [vmem:[%s1 + $0x198] sm:$0xff]
  %v70 = vld [vmem:[%s1 + $0x1a0] sm:$0xff]
  %v71 = vld [vmem:[%s1 + $0x1a8] sm:$0xff]
  %v72 = vld [vmem:[%s1 + $0x1b0] sm:$0xff]
  %v73 = vld [vmem:[%s1 + $0x1b8] sm:$0xff]
  %v74 = vld [vmem:[%s1 + $0x1c0] sm:$0xff]
  %v75 = vld [vmem:[%s1 + $0x1c8] sm:$0xff]
  %v76 = vld [vmem:[%s1 + $0x1d0] sm:$0xff]
  %v77 = vld [vmem:[%s1 + $0x1d8] sm:$0xff]
  %v78 = vld [vmem:[%s1 + $0x1e0] sm:$0xff]
  %v79 = vld [vmem:[%s1 + $0x1e8] sm:$0xff]
  %v80 = vld [vmem:[%s1 + $0x1f0] sm:$0xff]
  %v81 = vld [vmem:[%s1 + $0x1f8] sm:$0xff]
  %v82 = vld [vmem:[%s1 + $0x200] sm:$0xff]
  %v83 = vld [vmem:[%s1 + $0x208] sm:$0xff]
  %v84 = vld [vmem:[%s1 + $0x210] sm:$0xff]
  %v85 = vld [vmem:[%s1 + $0x218] sm:$0xff]
  %v86 = vld [vmem:[%s1 + $0x220] sm:$0xff]
  %v87 = vld [vmem:[%s1 + $0x228] sm:$0xff]
  %v88 = vld [vmem:[%s1 + $0x230] sm:$0xff]
  %v89 = vld [vmem:[%s1 + $0x238] sm:$0xff]
  %v90 = vld [vmem:[%s1 + $0x240] sm:$0xff]
  %v91 = vld [vmem:[%s1 + $0x248] sm:$0xff]
  %v92 = vld [vmem:[%s1 + $0x250] sm:$0xff]
  %v93 = vld [vmem:[%s1 + $0x258] sm:$0xff]
  %v94 = vld [vmem:[%s1 + $0x260] sm:$0xff]
  %v95 = vld [vmem:[%s1 + $0x268] sm:$0xff]
  %v96 = vld [vmem:[%s1 + $0x270] sm:$0xff]
  %v97 = vld [vmem:[%s1 + $0x278] sm:$0xff]
  %v98 = vld [vmem:[%s1 + $0x280] sm:$0xff]
  %v99 = vld [vmem:[%s1 + $0x288] sm:$0xff]
  %v100 = vld [vmem:[%s1 + $0x290] sm:$0xff]
  %v101 = vld [vmem:[%s1 + $0x298] sm:$0xff]
  %v102 = vld [vmem:[%s1 + $0x2a0] sm:$0xff]
  %v103 = vld [vmem:[%s1 + $0x2a8] sm:$0xff]
  %v104 = vld [vmem:[%s1 + $0x2b0] sm:$0xff]
  %v105 = vld [vmem:[%s1 + $0x2b8] sm:$0xff]
  %v106 = vld [vmem:[%s1 + $0x2c0] sm:$0xff]
  %v107 = vld [vmem:[%s1 + $0x2c8] sm:$0xff]
  %v108 = vld [vmem:[%s1 + $0x2d0] sm:$0xff]
  %v109 = vld [vmem:[%s1 + $0x2d8] sm:$0xff]
  %v110 = vld [vmem:[%s1 + $0x2e0] sm:$0xff]
  %v111 = vld [vmem:[%s1 + $0x2e8] sm:$0xff]
  %v112 = vld [vmem:[%s1 + $0x2f0] sm:$0xff]
  %v113 = vld [vmem:[%s1 + $0x2f8] sm:$0xff]
  %v114 = vld [vmem:[%s1 + $0x300] sm:$0xff]
  %v115 = vld [vmem:[%s1 + $0x308] sm:$0xff]
  %v116 = vld [vmem:[%s1 + $0x310] sm:$0xff]
  %v117 = vld [vmem:[%s1 + $0x318] sm:$0xff]
  %v118 = vld [vmem:[%s1 + $0x320] sm:$0xff]
  %v119 = vld [vmem:[%s1 + $0x328] sm:$0xff]
  %v120 = vld [vmem:[%s1 + $0x330] sm:$0xff]
  %v121 = vld [vmem:[%s1 + $0x338] sm:$0xff]
  %v122 = vld [vmem:[%s1 + $0x340] sm:$0xff]
  %v123 = vld [vmem:[%s1 + $0x348] sm:$0xff]
  %v124 = vld [vmem:[%s1 + $0x350] sm:$0xff]
  %v125 = vld [vmem:[%s1 + $0x358] sm:$0xff]
  %v126 = vld [vmem:[%s1 + $0x360] sm:$0xff]
  %v127 = vld [vmem:[%s1 + $0x368] sm:$0xff]
  %v128 = vld [vmem:[%s1 + $0x370] sm:$0xff]
  %v129 = vld [vmem:[%s1 + $0x378] sm:$0xff]
  %v130 = vld [vmem:[%s1 + $0x380] sm:$0xff]
  %v131 = vld [vmem:[%s1 + $0x388] sm:$0xff]
  %v132 = vld [vmem:[%s1 + $0x390] sm:$0xff]
  %v133 = vld [vmem:[%s1 + $0x398] sm:$0xff]
  %v134 = vld [vmem:[%s1 + $0x3a0] sm:$0xff]
  %v135 = vld [vmem:[%s1 + $0x3a8] sm:$0xff]
  %v136 = vld [vmem:[%s1 + $0x3b0] sm:$0xff]
  %v137 = vld [vmem:[%s1 + $0x3b8] sm:$0xff]
  %v138 = vld [vmem:[%s1 + $0x3c0] sm:$0xff]
  %v139 = vld [vmem:[%s1 + $0x3c8] sm:$0xff]
  %v140 = vld [vmem:[%s1 + $0x3d0] sm:$0xff]
  %v141 = vld [vmem:[%s1 + $0x3d8] sm:$0xff]
  %v142 = vld [vmem:[%s1 + $0x3e0] sm:$0xff]
  %v143 = vld [vmem:[%s1 + $0x3e8] sm:$0xff]
  %v144 = vld [vmem:[%s1 + $0x3f0] sm:$0xff]
  %v145 = vld [vmem:[%s1 + $0x3f8] sm:$0xff]
  %v146 = vld [vmem:[%s2] sm:$0xff]
  %v147 = vld [vmem:[%s2 + $0x8] sm:$0xff]
  %v148 = vld [vmem:[%s2 + $0x10] sm:$0xff]
  %v149 = vld [vmem:[%s2 + $0x18] sm:$0xff]
  %v150 = vld [vmem:[%s2 + $0x20] sm:$0xff]
  %v151 = vld [vmem:[%s2 + $0x28] sm:$0xff]
  %v152 = vld [vmem:[%s2 + $0x30] sm:$0xff]
  %v153 = vld [vmem:[%s2 + $0x38] sm:$0xff]
  %v154 = vld [vmem:[%s2 + $0x40] sm:$0xff]
  %v155 = vld [vmem:[%s2 + $0x48] sm:$0xff]
  %v156 = vld [vmem:[%s2 + $0x50] sm:$0xff]
  %v157 = vld [vmem:[%s2 + $0x58] sm:$0xff]
  %v158 = vld [vmem:[%s2 + $0x60] sm:$0xff]
  %v159 = vld [vmem:[%s2 + $0x68] sm:$0xff]
  %v160 = vld [vmem:[%s2 + $0x70] sm:$0xff]
  %v161 = vld [vmem:[%s2 + $0x78] sm:$0xff]
  %v162 = vld [vmem:[%s3] sm:$0xff]
  %v163 = vld [vmem:[%s3 + $0x8] sm:$0xff]
  %v164 = vld [vmem:[%s3 + $0x10] sm:$0xff]
  %v165 = vld [vmem:[%s3 + $0x18] sm:$0xff]
  %v166 = vld [vmem:[%s3 + $0x20] sm:$0xff]
  %v167 = vld [vmem:[%s3 + $0x28] sm:$0xff]
  %v168 = vld [vmem:[%s3 + $0x30] sm:$0xff]
  %v169 = vld [vmem:[%s3 + $0x38] sm:$0xff]
  %v170 = vld [vmem:[%s3 + $0x40] sm:$0xff]
  %v171 = vld [vmem:[%s3 + $0x48] sm:$0xff]
  %v172 = vld [vmem:[%s3 + $0x50] sm:$0xff]
  %v173 = vld [vmem:[%s3 + $0x58] sm:$0xff]
  %v174 = vld [vmem:[%s3 + $0x60] sm:$0xff]
  %v175 = vld [vmem:[%s3 + $0x68] sm:$0xff]
  %v176 = vld [vmem:[%s3 + $0x70] sm:$0xff]
  %v177 = vld [vmem:[%s3 + $0x78] sm:$0xff]
  %178 = vmatprep.subr.mxu0 %v19
  %179 = vmatpush1.msra.mxu0 %v18
  %180 = vmatprep.subr.mxu0 %v27
  %181 = vmatpush1.msra.mxu0 %v26
  %182 = vmatprep.subr.mxu0 %v35
  %183 = vmatpush1.msra.mxu0 %v34
  %184 = vmatprep.subr.mxu0 %v43
  %185 = vmatpush1.msra.mxu0 %v42
  %186 = vmatprep.subr.mxu0 %v51
  %187 = vmatpush1.msra.mxu0 %v50
  %188 = vmatprep.subr.mxu0 %v59
  %189 = vmatpush1.msra.mxu0 %v58
  %190 = vmatprep.subr.mxu0 %v67
  %191 = vmatpush1.msra.mxu0 %v66
  %192 = vmatprep.subr.mxu0 %v75
  %193 = vmatpush1.msra.mxu0 %v74
  %194 = vmatprep.subr.mxu0 %v83
  %195 = vmatpush1.msra.mxu0 %v82
  %196 = vmatprep.subr.mxu0 %v91
  %197 = vmatpush1.msra.mxu0 %v90
  %198 = vmatprep.subr.mxu0 %v99
  %199 = vmatpush1.msra.mxu0 %v98
  %200 = vmatprep.subr.mxu0 %v107
  %201 = vmatpush1.msra.mxu0 %v106
  %202 = vmatprep.subr.mxu0 %v115
  %203 = vmatpush1.msra.mxu0 %v114
  %204 = vmatprep.subr.mxu0 %v123
  %205 = vmatpush1.msra.mxu0 %v122
  %206 = vmatprep.subr.mxu0 %v131
  %207 = vmatpush1.msra.mxu0 %v130
  %208 = vmatprep.subr.mxu0 %v139
  %209 = vmatpush1.msra.mxu0 %v138
  %210 = vmatprep.subr.mxu0 0.0
  %211 = vmatpush1.msra.mxu0 0.0
  %212 = vmatprep.subr.mxu0 0.0
  %213 = vmatpush1.msra.mxu0 0.0
  %214 = vmatprep.subr.mxu0 0.0
  %215 = vmatpush1.msra.mxu0 0.0
  %216 = vmatprep.subr.mxu0 0.0
  %217 = vmatpush1.msra.mxu0 0.0
  %218 = vmatprep.subr.mxu0 0.0
  %219 = vmatpush1.msra.mxu0 0.0
  %220 = vmatprep.subr.mxu0 0.0
  %221 = vmatpush1.msra.mxu0 0.0
  %222 = vmatprep.subr.mxu0 0.0
  %223 = vmatpush1.msra.mxu0 0.0
  %224 = vmatprep.subr.mxu0 0.0
  %225 = vmatpush1.msra.mxu0 0.0
  %226 = vmatprep.subr.mxu0 0.0
  %227 = vmatpush1.msra.mxu0 0.0
  %228 = vmatprep.subr.mxu0 0.0
  %229 = vmatpush1.msra.mxu0 0.0
  %230 = vmatprep.subr.mxu0 0.0
  %231 = vmatpush1.msra.mxu0 0.0
  %232 = vmatprep.subr.mxu0 0.0
  %233 = vmatpush1.msra.mxu0 0.0
  %234 = vmatprep.subr.mxu0 0.0
  %235 = vmatpush1.msra.mxu0 0.0
  %236 = vmatprep.subr.mxu0 0.0
  %237 = vmatpush1.msra.mxu0 0.0
  %238 = vmatprep.subr.mxu0 0.0
  %239 = vmatpush1.msra.mxu0 0.0
  %240 = vmatprep.subr.mxu0 0.0
  %241 = vmatpush1.msra.mxu0 0.0
  %242 = vmatprep.mubr.f32.mxu0 0.0
  %243 = vmatmul.mubr.f32.gmra.mrb[0].mxu0 %v17
  %v244 = vpop.f32.mrb[0].mxu0
  %v245 = vadd.f32 0.0, %v244
  %v246 = vpop.f32.mrb[0].mxu0
  %v247 = vadd.f32 0.0, %v246
  %248 = vdwg.mxu0
  %249 = vmatprep.subr.mxu0 %v21
  %250 = vmatpush1.msra.mxu0 %v20
  %251 = vmatprep.subr.mxu0 %v29
  %252 = vmatpush1.msra.mxu0 %v28
  %253 = vmatprep.subr.mxu0 %v37
  %254 = vmatpush1.msra.mxu0 %v36
  %255 = vmatprep.subr.mxu0 %v45
  %256 = vmatpush1.msra.mxu0 %v44
  %257 = vmatprep.subr.mxu0 %v53
  %258 = vmatpush1.msra.mxu0 %v52
  %259 = vmatprep.subr.mxu0 %v61
  %260 = vmatpush1.msra.mxu0 %v60
  %261 = vmatprep.subr.mxu0 %v69
  %262 = vmatpush1.msra.mxu0 %v68
  %263 = vmatprep.subr.mxu0 %v77
  %264 = vmatpush1.msra.mxu0 %v76
  %265 = vmatprep.subr.mxu0 %v85
  %266 = vmatpush1.msra.mxu0 %v84
  %267 = vmatprep.subr.mxu0 %v93
  %268 = vmatpush1.msra.mxu0 %v92
  %269 = vmatprep.subr.mxu0 %v101
  %270 = vmatpush1.msra.mxu0 %v100
  %271 = vmatprep.subr.mxu0 %v109
  %272 = vmatpush1.msra.mxu0 %v108
  %273 = vmatprep.subr.mxu0 %v117
  %274 = vmatpush1.msra.mxu0 %v116
  %275 = vmatprep.subr.mxu0 %v125
  %276 = vmatpush1.msra.mxu0 %v124
  %277 = vmatprep.subr.mxu0 %v133
  %278 = vmatpush1.msra.mxu0 %v132
  %279 = vmatprep.subr.mxu0 %v141
  %280 = vmatpush1.msra.mxu0 %v140
  %281 = vmatprep.subr.mxu0 0.0
  %282 = vmatpush1.msra.mxu0 0.0
  %283 = vmatprep.subr.mxu0 0.0
  %284 = vmatpush1.msra.mxu0 0.0
  %285 = vmatprep.subr.mxu0 0.0
  %286 = vmatpush1.msra.mxu0 0.0
  %287 = vmatprep.subr.mxu0 0.0
  %288 = vmatpush1.msra.mxu0 0.0
  %289 = vmatprep.subr.mxu0 0.0
  %290 = vmatpush1.msra.mxu0 0.0
  %291 = vmatprep.subr.mxu0 0.0
  %292 = vmatpush1.msra.mxu0 0.0
  %293 = vmatprep.subr.mxu0 0.0
  %294 = vmatpush1.msra.mxu0 0.0
  %295 = vmatprep.subr.mxu0 0.0
  %296 = vmatpush1.msra.mxu0 0.0
  %297 = vmatprep.subr.mxu0 0.0
  %298 = vmatpush1.msra.mxu0 0.0
  %299 = vmatprep.subr.mxu0 0.0
  %300 = vmatpush1.msra.mxu0 0.0
  %301 = vmatprep.subr.mxu0 0.0
  %302 = vmatpush1.msra.mxu0 0.0
  %303 = vmatprep.subr.mxu0 0.0
  %304 = vmatpush1.msra.mxu0 0.0
  %305 = vmatprep.subr.mxu0 0.0
  %306 = vmatpush1.msra.mxu0 0.0
  %307 = vmatprep.subr.mxu0 0.0
  %308 = vmatpush1.msra.mxu0 0.0
  %309 = vmatprep.subr.mxu0 0.0
  %310 = vmatpush1.msra.mxu0 0.0
  %311 = vmatprep.subr.mxu0 0.0
  %312 = vmatpush1.msra.mxu0 0.0
  %313 = vmatprep.mubr.f32.mxu0 0.0
  %314 = vmatmul.mubr.f32.gmra.mrb[0].mxu0 %v17
  %v315 = vpop.f32.mrb[0].mxu0
  %v316 = vadd.f32 0.0, %v315
  %v317 = vpop.f32.mrb[0].mxu0
  %v318 = vadd.f32 0.0, %v317
  %319 = vdwg.mxu0
  %320 = vmatprep.subr.mxu0 %v23
  %321 = vmatpush1.msra.mxu0 %v22
  %322 = vmatprep.subr.mxu0 %v31
  %323 = vmatpush1.msra.mxu0 %v30
  %324 = vmatprep.subr.mxu0 %v39
  %325 = vmatpush1.msra.mxu0 %v38
  %326 = vmatprep.subr.mxu0 %v47
  %327 = vmatpush1.msra.mxu0 %v46
  %328 = vmatprep.subr.mxu0 %v55
  %329 = vmatpush1.msra.mxu0 %v54
  %330 = vmatprep.subr.mxu0 %v63
  %331 = vmatpush1.msra.mxu0 %v62
  %332 = vmatprep.subr.mxu0 %v71
  %333 = vmatpush1.msra.mxu0 %v70
  %334 = vmatprep.subr.mxu0 %v79
  %335 = vmatpush1.msra.mxu0 %v78
  %336 = vmatprep.subr.mxu0 %v87
  %337 = vmatpush1.msra.mxu0 %v86
  %338 = vmatprep.subr.mxu0 %v95
  %339 = vmatpush1.msra.mxu0 %v94
  %340 = vmatprep.subr.mxu0 %v103
  %341 = vmatpush1.msra.mxu0 %v102
  %342 = vmatprep.subr.mxu0 %v111
  %343 = vmatpush1.msra.mxu0 %v110
  %344 = vmatprep.subr.mxu0 %v119
  %345 = vmatpush1.msra.mxu0 %v118
  %346 = vmatprep.subr.mxu0 %v127
  %347 = vmatpush1.msra.mxu0 %v126
  %348 = vmatprep.subr.mxu0 %v135
  %349 = vmatpush1.msra.mxu0 %v134
  %350 = vmatprep.subr.mxu0 %v143
  %351 = vmatpush1.msra.mxu0 %v142
  %352 = vmatprep.subr.mxu0 0.0
  %353 = vmatpush1.msra.mxu0 0.0
  %354 = vmatprep.subr.mxu0 0.0
  %355 = vmatpush1.msra.mxu0 0.0
  %356 = vmatprep.subr.mxu0 0.0
  %357 = vmatpush1.msra.mxu0 0.0
  %358 = vmatprep.subr.mxu0 0.0
  %359 = vmatpush1.msra.mxu0 0.0
  %360 = vmatprep.subr.mxu0 0.0
  %361 = vmatpush1.msra.mxu0 0.0
  %362 = vmatprep.subr.mxu0 0.0
  %363 = vmatpush1.msra.mxu0 0.0
  %364 = vmatprep.subr.mxu0 0.0
  %365 = vmatpush1.msra.mxu0 0.0
  %366 = vmatprep.subr.mxu0 0.0
  %367 = vmatpush1.msra.mxu0 0.0
  %368 = vmatprep.subr.mxu0 0.0
  %369 = vmatpush1.msra.mxu0 0.0
  %370 = vmatprep.subr.mxu0 0.0
  %371 = vmatpush1.msra.mxu0 0.0
  %372 = vmatprep.subr.mxu0 0.0
  %373 = vmatpush1.msra.mxu0 0.0
  %374 = vmatprep.subr.mxu0 0.0
  %375 = vmatpush1.msra.mxu0 0.0
  %376 = vmatprep.subr.mxu0 0.0
  %377 = vmatpush1.msra.mxu0 0.0
  %378 = vmatprep.subr.mxu0 0.0
  %379 = vmatpush1.msra.mxu0 0.0
  %380 = vmatprep.subr.mxu0 0.0
  %381 = vmatpush1.msra.mxu0 0.0
  %382 = vmatprep.subr.mxu0 0.0
  %383 = vmatpush1.msra.mxu0 0.0
  %384 = vmatprep.mubr.f32.mxu0 0.0
  %385 = vmatmul.mubr.f32.gmra.mrb[0].mxu0 %v17
  %v386 = vpop.f32.mrb[0].mxu0
  %v387 = vadd.f32 0.0, %v386
  %v388 = vpop.f32.mrb[0].mxu0
  %v389 = vadd.f32 0.0, %v388
  %390 = vdwg.mxu0
  %391 = vmatprep.subr.mxu0 %v25
  %392 = vmatpush1.msra.mxu0 %v24
  %393 = vmatprep.subr.mxu0 %v33
  %394 = vmatpush1.msra.mxu0 %v32
  %395 = vmatprep.subr.mxu0 %v41
  %396 = vmatpush1.msra.mxu0 %v40
  %397 = vmatprep.subr.mxu0 %v49
  %398 = vmatpush1.msra.mxu0 %v48
  %399 = vmatprep.subr.mxu0 %v57
  %400 = vmatpush1.msra.mxu0 %v56
  %401 = vmatprep.subr.mxu0 %v65
  %402 = vmatpush1.msra.mxu0 %v64
  %403 = vmatprep.subr.mxu0 %v73
  %404 = vmatpush1.msra.mxu0 %v72
  %405 = vmatprep.subr.mxu0 %v81
  %406 = vmatpush1.msra.mxu0 %v80
  %407 = vmatprep.subr.mxu0 %v89
  %408 = vmatpush1.msra.mxu0 %v88
  %409 = vmatprep.subr.mxu0 %v97
  %410 = vmatpush1.msra.mxu0 %v96
  %411 = vmatprep.subr.mxu0 %v105
  %412 = vmatpush1.msra.mxu0 %v104
  %413 = vmatprep.subr.mxu0 %v113
  %414 = vmatpush1.msra.mxu0 %v112
  %415 = vmatprep.subr.mxu0 %v121
  %416 = vmatpush1.msra.mxu0 %v120
  %417 = vmatprep.subr.mxu0 %v129
  %418 = vmatpush1.msra.mxu0 %v128
  %419 = vmatprep.subr.mxu0 %v137
  %420 = vmatpush1.msra.mxu0 %v136
  %421 = vmatprep.subr.mxu0 %v145
  %422 = vmatpush1.msra.mxu0 %v144
  %423 = vmatprep.subr.mxu0 0.0
  %424 = vmatpush1.msra.mxu0 0.0
  %425 = vmatprep.subr.mxu0 0.0
  %426 = vmatpush1.msra.mxu0 0.0
  %427 = vmatprep.subr.mxu0 0.0
  %428 = vmatpush1.msra.mxu0 0.0
  %429 = vmatprep.subr.mxu0 0.0
  %430 = vmatpush1.msra.mxu0 0.0
  %431 = vmatprep.subr.mxu0 0.0
  %432 = vmatpush1.msra.mxu0 0.0
  %433 = vmatprep.subr.mxu0 0.0
  %434 = vmatpush1.msra.mxu0 0.0
  %435 = vmatprep.subr.mxu0 0.0
  %436 = vmatpush1.msra.mxu0 0.0
  %437 = vmatprep.subr.mxu0 0.0
  %438 = vmatpush1.msra.mxu0 0.0
  %439 = vmatprep.subr.mxu0 0.0
  %440 = vmatpush1.msra.mxu0 0.0
  %441 = vmatprep.subr.mxu0 0.0
  %442 = vmatpush1.msra.mxu0 0.0
  %443 = vmatprep.subr.mxu0 0.0
  %444 = vmatpush1.msra.mxu0 0.0
  %445 = vmatprep.subr.mxu0 0.0
  %446 = vmatpush1.msra.mxu0 0.0
  %447 = vmatprep.subr.mxu0 0.0
  %448 = vmatpush1.msra.mxu0 0.0
  %449 = vmatprep.subr.mxu0 0.0
  %450 = vmatpush1.msra.mxu0 0.0
  %451 = vmatprep.subr.mxu0 0.0
  %452 = vmatpush1.msra.mxu0 0.0
  %453 = vmatprep.subr.mxu0 0.0
  %454 = vmatpush1.msra.mxu0 0.0
  %455 = vmatprep.mubr.f32.mxu0 0.0
  %456 = vmatmul.mubr.f32.gmra.mrb[0].mxu0 %v17
  %v457 = vpop.f32.mrb[0].mxu0
  %v458 = vadd.f32 0.0, %v457
  %v459 = vpop.f32.mrb[0].mxu0
  %v460 = vadd.f32 0.0, %v459
  %461 = vdwg.mxu0
  %v462 = vmul.f32 %v245, %v245
  %463 = vmatprep.subr.mxu0 0.0
  %464 = vmatpush1.msra.mxu0 %v162
  %465 = vmatprep.subr.mxu0 0.0
  %466 = vmatpush1.msra.mxu0 %v163
  %467 = vmatprep.subr.mxu0 0.0
  %468 = vmatpush1.msra.mxu0 %v164
  %469 = vmatprep.subr.mxu0 0.0
  %470 = vmatpush1.msra.mxu0 %v165
  %471 = vmatprep.subr.mxu0 0.0
  %472 = vmatpush1.msra.mxu0 %v166
  %473 = vmatprep.subr.mxu0 0.0
  %474 = vmatpush1.msra.mxu0 %v167
  %475 = vmatprep.subr.mxu0 0.0
  %476 = vmatpush1.msra.mxu0 %v168
  %477 = vmatprep.subr.mxu0 0.0
  %478 = vmatpush1.msra.mxu0 %v169
  %479 = vmatprep.subr.mxu0 0.0
  %480 = vmatpush1.msra.mxu0 %v170
  %481 = vmatprep.subr.mxu0 0.0
  %482 = vmatpush1.msra.mxu0 %v171
  %483 = vmatprep.subr.mxu0 0.0
  %484 = vmatpush1.msra.mxu0 %v172
  %485 = vmatprep.subr.mxu0 0.0
  %486 = vmatpush1.msra.mxu0 %v173
  %487 = vmatprep.subr.mxu0 0.0
  %488 = vmatpush1.msra.mxu0 %v174
  %489 = vmatprep.subr.mxu0 0.0
  %490 = vmatpush1.msra.mxu0 %v175
  %491 = vmatprep.subr.mxu0 0.0
  %492 = vmatpush1.msra.mxu0 %v176
  %493 = vmatprep.subr.mxu0 0.0
  %494 = vmatpush1.msra.mxu0 %v177
  %495 = vmatprep.subr.mxu0 0.0
  %496 = vmatpush1.msra.mxu0 0.0
  %497 = vmatprep.subr.mxu0 0.0
  %498 = vmatpush1.msra.mxu0 0.0
  %499 = vmatprep.subr.mxu0 0.0
  %500 = vmatpush1.msra.mxu0 0.0
  %501 = vmatprep.subr.mxu0 0.0
  %502 = vmatpush1.msra.mxu0 0.0
  %503 = vmatprep.subr.mxu0 0.0
  %504 = vmatpush1.msra.mxu0 0.0
  %505 = vmatprep.subr.mxu0 0.0
  %506 = vmatpush1.msra.mxu0 0.0
  %507 = vmatprep.subr.mxu0 0.0
  %508 = vmatpush1.msra.mxu0 0.0
  %509 = vmatprep.subr.mxu0 0.0
  %510 = vmatpush1.msra.mxu0 0.0
  %511 = vmatprep.subr.mxu0 0.0
  %512 = vmatpush1.msra.mxu0 0.0
  %513 = vmatprep.subr.mxu0 0.0
  %514 = vmatpush1.msra.mxu0 0.0
  %515 = vmatprep.subr.mxu0 0.0
  %516 = vmatpush1.msra.mxu0 0.0
  %517 = vmatprep.subr.mxu0 0.0
  %518 = vmatpush1.msra.mxu0 0.0
  %519 = vmatprep.subr.mxu0 0.0
  %520 = vmatpush1.msra.mxu0 0.0
  %521 = vmatprep.subr.mxu0 0.0
  %522 = vmatpush1.msra.mxu0 0.0
  %523 = vmatprep.subr.mxu0 0.0
  %524 = vmatpush1.msra.mxu0 0.0
  %525 = vmatprep.subr.mxu0 0.0
  %526 = vmatpush1.msra.mxu0 0.0
  %527 = vmatprep.mubr.f32.mxu0 0.0
  %528 = vmatmul.mubr.f32.gmra.mrb[0].mxu0 %v462
  %v529 = vpop.f32.mrb[0].mxu0
  %v530 = vadd.f32 0.0, %v529
  %v531 = vpop.f32.mrb[0].mxu0
  %532 = vdwg.mxu0
  %v533 = vrsqrt.pop %v530
  %v534 = vmul.f32 %v530, %v533
  %vm535 = vcmp.eq.f32.partialorder %v530, inf
  %v536 = vsel %vm535, %v530, %v534
  %vm537 = vcmp.eq.f32.partialorder %v530, 0.0
  %v538 = vand.u32 %v530, 2147483648
  %v539 = vsel %vm537, %v538, %v536
  %v540 = vadd.f32 %v530, 1.0
  %v541 = vadd.f32 %v539, 1e-08
  %v542 = vmul.f32 %v540, %v541
  %v543 = vrcp.pop %v542
  %v544 = vmul.f32 %v539, %v543
  %v545 = vmul.f32 %v245, %v544
  %v546 = vmul.f32 %v247, %v247
  %547 = vmatprep.subr.mxu0 0.0
  %548 = vmatpush1.msra.mxu0 %v162
  %549 = vmatprep.subr.mxu0 0.0
  %550 = vmatpush1.msra.mxu0 %v163
  %551 = vmatprep.subr.mxu0 0.0
  %552 = vmatpush1.msra.mxu0 %v164
  %553 = vmatprep.subr.mxu0 0.0
  %554 = vmatpush1.msra.mxu0 %v165
  %555 = vmatprep.subr.mxu0 0.0
  %556 = vmatpush1.msra.mxu0 %v166
  %557 = vmatprep.subr.mxu0 0.0
  %558 = vmatpush1.msra.mxu0 %v167
  %559 = vmatprep.subr.mxu0 0.0
  %560 = vmatpush1.msra.mxu0 %v168
  %561 = vmatprep.subr.mxu0 0.0
  %562 = vmatpush1.msra.mxu0 %v169
  %563 = vmatprep.subr.mxu0 0.0
  %564 = vmatpush1.msra.mxu0 %v170
  %565 = vmatprep.subr.mxu0 0.0
  %566 = vmatpush1.msra.mxu0 %v171
  %567 = vmatprep.subr.mxu0 0.0
  %568 = vmatpush1.msra.mxu0 %v172
  %569 = vmatprep.subr.mxu0 0.0
  %570 = vmatpush1.msra.mxu0 %v173
  %571 = vmatprep.subr.mxu0 0.0
  %572 = vmatpush1.msra.mxu0 %v174
  %573 = vmatprep.subr.mxu0 0.0
  %574 = vmatpush1.msra.mxu0 %v175
  %575 = vmatprep.subr.mxu0 0.0
  %576 = vmatpush1.msra.mxu0 %v176
  %577 = vmatprep.subr.mxu0 0.0
  %578 = vmatpush1.msra.mxu0 %v177
  %579 = vmatprep.subr.mxu0 0.0
  %580 = vmatpush1.msra.mxu0 0.0
  %581 = vmatprep.subr.mxu0 0.0
  %582 = vmatpush1.msra.mxu0 0.0
  %583 = vmatprep.subr.mxu0 0.0
  %584 = vmatpush1.msra.mxu0 0.0
  %585 = vmatprep.subr.mxu0 0.0
  %586 = vmatpush1.msra.mxu0 0.0
  %587 = vmatprep.subr.mxu0 0.0
  %588 = vmatpush1.msra.mxu0 0.0
  %589 = vmatprep.subr.mxu0 0.0
  %590 = vmatpush1.msra.mxu0 0.0
  %591 = vmatprep.subr.mxu0 0.0
  %592 = vmatpush1.msra.mxu0 0.0
  %593 = vmatprep.subr.mxu0 0.0
  %594 = vmatpush1.msra.mxu0 0.0
  %595 = vmatprep.subr.mxu0 0.0
  %596 = vmatpush1.msra.mxu0 0.0
  %597 = vmatprep.subr.mxu0 0.0
  %598 = vmatpush1.msra.mxu0 0.0
  %599 = vmatprep.subr.mxu0 0.0
  %600 = vmatpush1.msra.mxu0 0.0
  %601 = vmatprep.subr.mxu0 0.0
  %602 = vmatpush1.msra.mxu0 0.0
  %603 = vmatprep.subr.mxu0 0.0
  %604 = vmatpush1.msra.mxu0 0.0
  %605 = vmatprep.subr.mxu0 0.0
  %606 = vmatpush1.msra.mxu0 0.0
  %607 = vmatprep.subr.mxu0 0.0
  %608 = vmatpush1.msra.mxu0 0.0
  %609 = vmatprep.subr.mxu0 0.0
  %610 = vmatpush1.msra.mxu0 0.0
  %611 = vmatprep.mubr.f32.mxu0 0.0
  %612 = vmatmul.mubr.f32.gmra.mrb[0].mxu0 %v546
  %v613 = vpop.f32.mrb[0].mxu0
  %v614 = vadd.f32 0.0, %v613
  %v615 = vpop.f32.mrb[0].mxu0
  %616 = vdwg.mxu0
  %v617 = vrsqrt.pop %v614
  %v618 = vmul.f32 %v614, %v617
  %vm619 = vcmp.eq.f32.partialorder %v614, inf
  %v620 = vsel %vm619, %v614, %v618
  %vm621 = vcmp.eq.f32.partialorder %v614, 0.0
  %v622 = vand.u32 %v614, 2147483648
  %v623 = vsel %vm621, %v622, %v620
  %v624 = vadd.f32 %v614, 1.0
  %v625 = vadd.f32 %v623, 1e-08
  %v626 = vmul.f32 %v624, %v625
  %v627 = vrcp.pop %v626
  %v628 = vmul.f32 %v623, %v627
  %v629 = vmul.f32 %v247, %v628
  %v630 = vmul.f32 %v316, %v316
  %631 = vmatprep.subr.mxu0 0.0
  %632 = vmatpush1.msra.mxu0 %v162
  %633 = vmatprep.subr.mxu0 0.0
  %634 = vmatpush1.msra.mxu0 %v163
  %635 = vmatprep.subr.mxu0 0.0
  %636 = vmatpush1.msra.mxu0 %v164
  %637 = vmatprep.subr.mxu0 0.0
  %638 = vmatpush1.msra.mxu0 %v165
  %639 = vmatprep.subr.mxu0 0.0
  %640 = vmatpush1.msra.mxu0 %v166
  %641 = vmatprep.subr.mxu0 0.0
  %642 = vmatpush1.msra.mxu0 %v167
  %643 = vmatprep.subr.mxu0 0.0
  %644 = vmatpush1.msra.mxu0 %v168
  %645 = vmatprep.subr.mxu0 0.0
  %646 = vmatpush1.msra.mxu0 %v169
  %647 = vmatprep.subr.mxu0 0.0
  %648 = vmatpush1.msra.mxu0 %v170
  %649 = vmatprep.subr.mxu0 0.0
  %650 = vmatpush1.msra.mxu0 %v171
  %651 = vmatprep.subr.mxu0 0.0
  %652 = vmatpush1.msra.mxu0 %v172
  %653 = vmatprep.subr.mxu0 0.0
  %654 = vmatpush1.msra.mxu0 %v173
  %655 = vmatprep.subr.mxu0 0.0
  %656 = vmatpush1.msra.mxu0 %v174
  %657 = vmatprep.subr.mxu0 0.0
  %658 = vmatpush1.msra.mxu0 %v175
  %659 = vmatprep.subr.mxu0 0.0
  %660 = vmatpush1.msra.mxu0 %v176
  %661 = vmatprep.subr.mxu0 0.0
  %662 = vmatpush1.msra.mxu0 %v177
  %663 = vmatprep.subr.mxu0 0.0
  %664 = vmatpush1.msra.mxu0 0.0
  %665 = vmatprep.subr.mxu0 0.0
  %666 = vmatpush1.msra.mxu0 0.0
  %667 = vmatprep.subr.mxu0 0.0
  %668 = vmatpush1.msra.mxu0 0.0
  %669 = vmatprep.subr.mxu0 0.0
  %670 = vmatpush1.msra.mxu0 0.0
  %671 = vmatprep.subr.mxu0 0.0
  %672 = vmatpush1.msra.mxu0 0.0
  %673 = vmatprep.subr.mxu0 0.0
  %674 = vmatpush1.msra.mxu0 0.0
  %675 = vmatprep.subr.mxu0 0.0
  %676 = vmatpush1.msra.mxu0 0.0
  %677 = vmatprep.subr.mxu0 0.0
  %678 = vmatpush1.msra.mxu0 0.0
  %679 = vmatprep.subr.mxu0 0.0
  %680 = vmatpush1.msra.mxu0 0.0
  %681 = vmatprep.subr.mxu0 0.0
  %682 = vmatpush1.msra.mxu0 0.0
  %683 = vmatprep.subr.mxu0 0.0
  %684 = vmatpush1.msra.mxu0 0.0
  %685 = vmatprep.subr.mxu0 0.0
  %686 = vmatpush1.msra.mxu0 0.0
  %687 = vmatprep.subr.mxu0 0.0
  %688 = vmatpush1.msra.mxu0 0.0
  %689 = vmatprep.subr.mxu0 0.0
  %690 = vmatpush1.msra.mxu0 0.0
  %691 = vmatprep.subr.mxu0 0.0
  %692 = vmatpush1.msra.mxu0 0.0
  %693 = vmatprep.subr.mxu0 0.0
  %694 = vmatpush1.msra.mxu0 0.0
  %695 = vmatprep.mubr.f32.mxu0 0.0
  %696 = vmatmul.mubr.f32.gmra.mrb[0].mxu0 %v630
  %v697 = vpop.f32.mrb[0].mxu0
  %v698 = vadd.f32 0.0, %v697
  %v699 = vpop.f32.mrb[0].mxu0
  %700 = vdwg.mxu0
  %v701 = vrsqrt.pop %v698
  %v702 = vmul.f32 %v698, %v701
  %vm703 = vcmp.eq.f32.partialorder %v698, inf
  %v704 = vsel %vm703, %v698, %v702
  %vm705 = vcmp.eq.f32.partialorder %v698, 0.0
  %v706 = vand.u32 %v698, 2147483648
  %v707 = vsel %vm705, %v706, %v704
  %v708 = vadd.f32 %v698, 1.0
  %v709 = vadd.f32 %v707, 1e-08
  %v710 = vmul.f32 %v708, %v709
  %v711 = vrcp.pop %v710
  %v712 = vmul.f32 %v707, %v711
  %v713 = vmul.f32 %v316, %v712
  %v714 = vmul.f32 %v318, %v318
  %715 = vmatprep.subr.mxu0 0.0
  %716 = vmatpush1.msra.mxu0 %v162
  %717 = vmatprep.subr.mxu0 0.0
  %718 = vmatpush1.msra.mxu0 %v163
  %719 = vmatprep.subr.mxu0 0.0
  %720 = vmatpush1.msra.mxu0 %v164
  %721 = vmatprep.subr.mxu0 0.0
  %722 = vmatpush1.msra.mxu0 %v165
  %723 = vmatprep.subr.mxu0 0.0
  %724 = vmatpush1.msra.mxu0 %v166
  %725 = vmatprep.subr.mxu0 0.0
  %726 = vmatpush1.msra.mxu0 %v167
  %727 = vmatprep.subr.mxu0 0.0
  %728 = vmatpush1.msra.mxu0 %v168
  %729 = vmatprep.subr.mxu0 0.0
  %730 = vmatpush1.msra.mxu0 %v169
  %731 = vmatprep.subr.mxu0 0.0
  %732 = vmatpush1.msra.mxu0 %v170
  %733 = vmatprep.subr.mxu0 0.0
  %734 = vmatpush1.msra.mxu0 %v171
  %735 = vmatprep.subr.mxu0 0.0
  %736 = vmatpush1.msra.mxu0 %v172
  %737 = vmatprep.subr.mxu0 0.0
  %738 = vmatpush1.msra.mxu0 %v173
  %739 = vmatprep.subr.mxu0 0.0
  %740 = vmatpush1.msra.mxu0 %v174
  %741 = vmatprep.subr.mxu0 0.0
  %742 = vmatpush1.msra.mxu0 %v175
  %743 = vmatprep.subr.mxu0 0.0
  %744 = vmatpush1.msra.mxu0 %v176
  %745 = vmatprep.subr.mxu0 0.0
  %746 = vmatpush1.msra.mxu0 %v177
  %747 = vmatprep.subr.mxu0 0.0
  %748 = vmatpush1.msra.mxu0 0.0
  %749 = vmatprep.subr.mxu0 0.0
  %750 = vmatpush1.msra.mxu0 0.0
  %751 = vmatprep.subr.mxu0 0.0
  %752 = vmatpush1.msra.mxu0 0.0
  %753 = vmatprep.subr.mxu0 0.0
  %754 = vmatpush1.msra.mxu0 0.0
  %755 = vmatprep.subr.mxu0 0.0
  %756 = vmatpush1.msra.mxu0 0.0
  %757 = vmatprep.subr.mxu0 0.0
  %758 = vmatpush1.msra.mxu0 0.0
  %759 = vmatprep.subr.mxu0 0.0
  %760 = vmatpush1.msra.mxu0 0.0
  %761 = vmatprep.subr.mxu0 0.0
  %762 = vmatpush1.msra.mxu0 0.0
  %763 = vmatprep.subr.mxu0 0.0
  %764 = vmatpush1.msra.mxu0 0.0
  %765 = vmatprep.subr.mxu0 0.0
  %766 = vmatpush1.msra.mxu0 0.0
  %767 = vmatprep.subr.mxu0 0.0
  %768 = vmatpush1.msra.mxu0 0.0
  %769 = vmatprep.subr.mxu0 0.0
  %770 = vmatpush1.msra.mxu0 0.0
  %771 = vmatprep.subr.mxu0 0.0
  %772 = vmatpush1.msra.mxu0 0.0
  %773 = vmatprep.subr.mxu0 0.0
  %774 = vmatpush1.msra.mxu0 0.0
  %775 = vmatprep.subr.mxu0 0.0
  %776 = vmatpush1.msra.mxu0 0.0
  %777 = vmatprep.subr.mxu0 0.0
  %778 = vmatpush1.msra.mxu0 0.0
  %779 = vmatprep.mubr.f32.mxu0 0.0
  %780 = vmatmul.mubr.f32.gmra.mrb[0].mxu0 %v714
  %v781 = vpop.f32.mrb[0].mxu0
  %v782 = vadd.f32 0.0, %v781
  %v783 = vpop.f32.mrb[0].mxu0
  %784 = vdwg.mxu0
  %v785 = vrsqrt.pop %v782
  %v786 = vmul.f32 %v782, %v785
  %vm787 = vcmp.eq.f32.partialorder %v782, inf
  %v788 = vsel %vm787, %v782, %v786
  %vm789 = vcmp.eq.f32.partialorder %v782, 0.0
  %v790 = vand.u32 %v782, 2147483648
  %v791 = vsel %vm789, %v790, %v788
  %v792 = vadd.f32 %v782, 1.0
  %v793 = vadd.f32 %v791, 1e-08
  %v794 = vmul.f32 %v792, %v793
  %v795 = vrcp.pop %v794
  %v796 = vmul.f32 %v791, %v795
  %v797 = vmul.f32 %v318, %v796
  %v798 = vmul.f32 %v387, %v387
  %799 = vmatprep.subr.mxu0 0.0
  %800 = vmatpush1.msra.mxu0 %v162
  %801 = vmatprep.subr.mxu0 0.0
  %802 = vmatpush1.msra.mxu0 %v163
  %803 = vmatprep.subr.mxu0 0.0
  %804 = vmatpush1.msra.mxu0 %v164
  %805 = vmatprep.subr.mxu0 0.0
  %806 = vmatpush1.msra.mxu0 %v165
  %807 = vmatprep.subr.mxu0 0.0
  %808 = vmatpush1.msra.mxu0 %v166
  %809 = vmatprep.subr.mxu0 0.0
  %810 = vmatpush1.msra.mxu0 %v167
  %811 = vmatprep.subr.mxu0 0.0
  %812 = vmatpush1.msra.mxu0 %v168
  %813 = vmatprep.subr.mxu0 0.0
  %814 = vmatpush1.msra.mxu0 %v169
  %815 = vmatprep.subr.mxu0 0.0
  %816 = vmatpush1.msra.mxu0 %v170
  %817 = vmatprep.subr.mxu0 0.0
  %818 = vmatpush1.msra.mxu0 %v171
  %819 = vmatprep.subr.mxu0 0.0
  %820 = vmatpush1.msra.mxu0 %v172
  %821 = vmatprep.subr.mxu0 0.0
  %822 = vmatpush1.msra.mxu0 %v173
  %823 = vmatprep.subr.mxu0 0.0
  %824 = vmatpush1.msra.mxu0 %v174
  %825 = vmatprep.subr.mxu0 0.0
  %826 = vmatpush1.msra.mxu0 %v175
  %827 = vmatprep.subr.mxu0 0.0
  %828 = vmatpush1.msra.mxu0 %v176
  %829 = vmatprep.subr.mxu0 0.0
  %830 = vmatpush1.msra.mxu0 %v177
  %831 = vmatprep.subr.mxu0 0.0
  %832 = vmatpush1.msra.mxu0 0.0
  %833 = vmatprep.subr.mxu0 0.0
  %834 = vmatpush1.msra.mxu0 0.0
  %835 = vmatprep.subr.mxu0 0.0
  %836 = vmatpush1.msra.mxu0 0.0
  %837 = vmatprep.subr.mxu0 0.0
  %838 = vmatpush1.msra.mxu0 0.0
  %839 = vmatprep.subr.mxu0 0.0
  %840 = vmatpush1.msra.mxu0 0.0
  %841 = vmatprep.subr.mxu0 0.0
  %842 = vmatpush1.msra.mxu0 0.0
  %843 = vmatprep.subr.mxu0 0.0
  %844 = vmatpush1.msra.mxu0 0.0
  %845 = vmatprep.subr.mxu0 0.0
  %846 = vmatpush1.msra.mxu0 0.0
  %847 = vmatprep.subr.mxu0 0.0
  %848 = vmatpush1.msra.mxu0 0.0
  %849 = vmatprep.subr.mxu0 0.0
  %850 = vmatpush1.msra.mxu0 0.0
  %851 = vmatprep.subr.mxu0 0.0
  %852 = vmatpush1.msra.mxu0 0.0
  %853 = vmatprep.subr.mxu0 0.0
  %854 = vmatpush1.msra.mxu0 0.0
  %855 = vmatprep.subr.mxu0 0.0
  %856 = vmatpush1.msra.mxu0 0.0
  %857 = vmatprep.subr.mxu0 0.0
  %858 = vmatpush1.msra.mxu0 0.0
  %859 = vmatprep.subr.mxu0 0.0
  %860 = vmatpush1.msra.mxu0 0.0
  %861 = vmatprep.subr.mxu0 0.0
  %862 = vmatpush1.msra.mxu0 0.0
  %863 = vmatprep.mubr.f32.mxu0 0.0
  %864 = vmatmul.mubr.f32.gmra.mrb[0].mxu0 %v798
  %v865 = vpop.f32.mrb[0].mxu0
  %v866 = vadd.f32 0.0, %v865
  %v867 = vpop.f32.mrb[0].mxu0
  %868 = vdwg.mxu0
  %v869 = vrsqrt.pop %v866
  %v870 = vmul.f32 %v866, %v869
  %vm871 = vcmp.eq.f32.partialorder %v866, inf
  %v872 = vsel %vm871, %v866, %v870
  %vm873 = vcmp.eq.f32.partialorder %v866, 0.0
  %v874 = vand.u32 %v866, 2147483648
  %v875 = vsel %vm873, %v874, %v872
  %v876 = vadd.f32 %v866, 1.0
  %v877 = vadd.f32 %v875, 1e-08
  %v878 = vmul.f32 %v876, %v877
  %v879 = vrcp.pop %v878
  %v880 = vmul.f32 %v875, %v879
  %v881 = vmul.f32 %v387, %v880
  %v882 = vmul.f32 %v389, %v389
  %883 = vmatprep.subr.mxu0 0.0
  %884 = vmatpush1.msra.mxu0 %v162
  %885 = vmatprep.subr.mxu0 0.0
  %886 = vmatpush1.msra.mxu0 %v163
  %887 = vmatprep.subr.mxu0 0.0
  %888 = vmatpush1.msra.mxu0 %v164
  %889 = vmatprep.subr.mxu0 0.0
  %890 = vmatpush1.msra.mxu0 %v165
  %891 = vmatprep.subr.mxu0 0.0
  %892 = vmatpush1.msra.mxu0 %v166
  %893 = vmatprep.subr.mxu0 0.0
  %894 = vmatpush1.msra.mxu0 %v167
  %895 = vmatprep.subr.mxu0 0.0
  %896 = vmatpush1.msra.mxu0 %v168
  %897 = vmatprep.subr.mxu0 0.0
  %898 = vmatpush1.msra.mxu0 %v169
  %899 = vmatprep.subr.mxu0 0.0
  %900 = vmatpush1.msra.mxu0 %v170
  %901 = vmatprep.subr.mxu0 0.0
  %902 = vmatpush1.msra.mxu0 %v171
  %903 = vmatprep.subr.mxu0 0.0
  %904 = vmatpush1.msra.mxu0 %v172
  %905 = vmatprep.subr.mxu0 0.0
  %906 = vmatpush1.msra.mxu0 %v173
  %907 = vmatprep.subr.mxu0 0.0
  %908 = vmatpush1.msra.mxu0 %v174
  %909 = vmatprep.subr.mxu0 0.0
  %910 = vmatpush1.msra.mxu0 %v175
  %911 = vmatprep.subr.mxu0 0.0
  %912 = vmatpush1.msra.mxu0 %v176
  %913 = vmatprep.subr.mxu0 0.0
  %914 = vmatpush1.msra.mxu0 %v177
  %915 = vmatprep.subr.mxu0 0.0
  %916 = vmatpush1.msra.mxu0 0.0
  %917 = vmatprep.subr.mxu0 0.0
  %918 = vmatpush1.msra.mxu0 0.0
  %919 = vmatprep.subr.mxu0 0.0
  %920 = vmatpush1.msra.mxu0 0.0
  %921 = vmatprep.subr.mxu0 0.0
  %922 = vmatpush1.msra.mxu0 0.0
  %923 = vmatprep.subr.mxu0 0.0
  %924 = vmatpush1.msra.mxu0 0.0
  %925 = vmatprep.subr.mxu0 0.0
  %926 = vmatpush1.msra.mxu0 0.0
  %927 = vmatprep.subr.mxu0 0.0
  %928 = vmatpush1.msra.mxu0 0.0
  %929 = vmatprep.subr.mxu0 0.0
  %930 = vmatpush1.msra.mxu0 0.0
  %931 = vmatprep.subr.mxu0 0.0
  %932 = vmatpush1.msra.mxu0 0.0
  %933 = vmatprep.subr.mxu0 0.0
  %934 = vmatpush1.msra.mxu0 0.0
  %935 = vmatprep.subr.mxu0 0.0
  %936 = vmatpush1.msra.mxu0 0.0
  %937 = vmatprep.subr.mxu0 0.0
  %938 = vmatpush1.msra.mxu0 0.0
  %939 = vmatprep.subr.mxu0 0.0
  %940 = vmatpush1.msra.mxu0 0.0
  %941 = vmatprep.subr.mxu0 0.0
  %942 = vmatpush1.msra.mxu0 0.0
  %943 = vmatprep.subr.mxu0 0.0
  %944 = vmatpush1.msra.mxu0 0.0
  %945 = vmatprep.subr.mxu0 0.0
  %946 = vmatpush1.msra.mxu0 0.0
  %947 = vmatprep.mubr.f32.mxu0 0.0
  %948 = vmatmul.mubr.f32.gmra.mrb[0].mxu0 %v882
  %v949 = vpop.f32.mrb[0].mxu0
  %v950 = vadd.f32 0.0, %v949
  %v951 = vpop.f32.mrb[0].mxu0
  %952 = vdwg.mxu0
  %v953 = vrsqrt.pop %v950
  %v954 = vmul.f32 %v950, %v953
  %vm955 = vcmp.eq.f32.partialorder %v950, inf
  %v956 = vsel %vm955, %v950, %v954
  %vm957 = vcmp.eq.f32.partialorder %v950, 0.0
  %v958 = vand.u32 %v950, 2147483648
  %v959 = vsel %vm957, %v958, %v956
  %v960 = vadd.f32 %v950, 1.0
  %v961 = vadd.f32 %v959, 1e-08
  %v962 = vmul.f32 %v960, %v961
  %v963 = vrcp.pop %v962
  %v964 = vmul.f32 %v959, %v963
  %v965 = vmul.f32 %v389, %v964
  %v966 = vmul.f32 %v458, %v458
  %967 = vmatprep.subr.mxu0 0.0
  %968 = vmatpush1.msra.mxu0 %v162
  %969 = vmatprep.subr.mxu0 0.0
  %970 = vmatpush1.msra.mxu0 %v163
  %971 = vmatprep.subr.mxu0 0.0
  %972 = vmatpush1.msra.mxu0 %v164
  %973 = vmatprep.subr.mxu0 0.0
  %974 = vmatpush1.msra.mxu0 %v165
  %975 = vmatprep.subr.mxu0 0.0
  %976 = vmatpush1.msra.mxu0 %v166
  %977 = vmatprep.subr.mxu0 0.0
  %978 = vmatpush1.msra.mxu0 %v167
  %979 = vmatprep.subr.mxu0 0.0
  %980 = vmatpush1.msra.mxu0 %v168
  %981 = vmatprep.subr.mxu0 0.0
  %982 = vmatpush1.msra.mxu0 %v169
  %983 = vmatprep.subr.mxu0 0.0
  %984 = vmatpush1.msra.mxu0 %v170
  %985 = vmatprep.subr.mxu0 0.0
  %986 = vmatpush1.msra.mxu0 %v171
  %987 = vmatprep.subr.mxu0 0.0
  %988 = vmatpush1.msra.mxu0 %v172
  %989 = vmatprep.subr.mxu0 0.0
  %990 = vmatpush1.msra.mxu0 %v173
  %991 = vmatprep.subr.mxu0 0.0
  %992 = vmatpush1.msra.mxu0 %v174
  %993 = vmatprep.subr.mxu0 0.0
  %994 = vmatpush1.msra.mxu0 %v175
  %995 = vmatprep.subr.mxu0 0.0
  %996 = vmatpush1.msra.mxu0 %v176
  %997 = vmatprep.subr.mxu0 0.0
  %998 = vmatpush1.msra.mxu0 %v177
  %999 = vmatprep.subr.mxu0 0.0
  %1000 = vmatpush1.msra.mxu0 0.0
  %1001 = vmatprep.subr.mxu0 0.0
  %1002 = vmatpush1.msra.mxu0 0.0
  %1003 = vmatprep.subr.mxu0 0.0
  %1004 = vmatpush1.msra.mxu0 0.0
  %1005 = vmatprep.subr.mxu0 0.0
  %1006 = vmatpush1.msra.mxu0 0.0
  %1007 = vmatprep.subr.mxu0 0.0
  %1008 = vmatpush1.msra.mxu0 0.0
  %1009 = vmatprep.subr.mxu0 0.0
  %1010 = vmatpush1.msra.mxu0 0.0
  %1011 = vmatprep.subr.mxu0 0.0
  %1012 = vmatpush1.msra.mxu0 0.0
  %1013 = vmatprep.subr.mxu0 0.0
  %1014 = vmatpush1.msra.mxu0 0.0
  %1015 = vmatprep.subr.mxu0 0.0
  %1016 = vmatpush1.msra.mxu0 0.0
  %1017 = vmatprep.subr.mxu0 0.0
  %1018 = vmatpush1.msra.mxu0 0.0
  %1019 = vmatprep.subr.mxu0 0.0
  %1020 = vmatpush1.msra.mxu0 0.0
  %1021 = vmatprep.subr.mxu0 0.0
  %1022 = vmatpush1.msra.mxu0 0.0
  %1023 = vmatprep.subr.mxu0 0.0
  %1024 = vmatpush1.msra.mxu0 0.0
  %1025 = vmatprep.subr.mxu0 0.0
  %1026 = vmatpush1.msra.mxu0 0.0
  %1027 = vmatprep.subr.mxu0 0.0
  %1028 = vmatpush1.msra.mxu0 0.0
  %1029 = vmatprep.subr.mxu0 0.0
  %1030 = vmatpush1.msra.mxu0 0.0
  %1031 = vmatprep.mubr.f32.mxu0 0.0
  %1032 = vmatmul.mubr.f32.gmra.mrb[0].mxu0 %v966
  %v1033 = vpop.f32.mrb[0].mxu0
  %v1034 = vadd.f32 0.0, %v1033
  %v1035 = vpop.f32.mrb[0].mxu0
  %1036 = vdwg.mxu0
  %v1037 = vrsqrt.pop %v1034
  %v1038 = vmul.f32 %v1034, %v1037
  %vm1039 = vcmp.eq.f32.partialorder %v1034, inf
  %v1040 = vsel %vm1039, %v1034, %v1038
  %vm1041 = vcmp.eq.f32.partialorder %v1034, 0.0
  %v1042 = vand.u32 %v1034, 2147483648
  %v1043 = vsel %vm1041, %v1042, %v1040
  %v1044 = vadd.f32 %v1034, 1.0
  %v1045 = vadd.f32 %v1043, 1e-08
  %v1046 = vmul.f32 %v1044, %v1045
  %v1047 = vrcp.pop %v1046
  %v1048 = vmul.f32 %v1043, %v1047
  %v1049 = vmul.f32 %v458, %v1048
  %v1050 = vmul.f32 %v460, %v460
  %1051 = vmatprep.subr.mxu0 0.0
  %1052 = vmatpush1.msra.mxu0 %v162
  %1053 = vmatprep.subr.mxu0 0.0
  %1054 = vmatpush1.msra.mxu0 %v163
  %1055 = vmatprep.subr.mxu0 0.0
  %1056 = vmatpush1.msra.mxu0 %v164
  %1057 = vmatprep.subr.mxu0 0.0
  %1058 = vmatpush1.msra.mxu0 %v165
  %1059 = vmatprep.subr.mxu0 0.0
  %1060 = vmatpush1.msra.mxu0 %v166
  %1061 = vmatprep.subr.mxu0 0.0
  %1062 = vmatpush1.msra.mxu0 %v167
  %1063 = vmatprep.subr.mxu0 0.0
  %1064 = vmatpush1.msra.mxu0 %v168
  %1065 = vmatprep.subr.mxu0 0.0
  %1066 = vmatpush1.msra.mxu0 %v169
  %1067 = vmatprep.subr.mxu0 0.0
  %1068 = vmatpush1.msra.mxu0 %v170
  %1069 = vmatprep.subr.mxu0 0.0
  %1070 = vmatpush1.msra.mxu0 %v171
  %1071 = vmatprep.subr.mxu0 0.0
  %1072 = vmatpush1.msra.mxu0 %v172
  %1073 = vmatprep.subr.mxu0 0.0
  %1074 = vmatpush1.msra.mxu0 %v173
  %1075 = vmatprep.subr.mxu0 0.0
  %1076 = vmatpush1.msra.mxu0 %v174
  %1077 = vmatprep.subr.mxu0 0.0
  %1078 = vmatpush1.msra.mxu0 %v175
  %1079 = vmatprep.subr.mxu0 0.0
  %1080 = vmatpush1.msra.mxu0 %v176
  %1081 = vmatprep.subr.mxu0 0.0
  %1082 = vmatpush1.msra.mxu0 %v177
  %1083 = vmatprep.subr.mxu0 0.0
  %1084 = vmatpush1.msra.mxu0 0.0
  %1085 = vmatprep.subr.mxu0 0.0
  %1086 = vmatpush1.msra.mxu0 0.0
  %1087 = vmatprep.subr.mxu0 0.0
  %1088 = vmatpush1.msra.mxu0 0.0
  %1089 = vmatprep.subr.mxu0 0.0
  %1090 = vmatpush1.msra.mxu0 0.0
  %1091 = vmatprep.subr.mxu0 0.0
  %1092 = vmatpush1.msra.mxu0 0.0
  %1093 = vmatprep.subr.mxu0 0.0
  %1094 = vmatpush1.msra.mxu0 0.0
  %1095 = vmatprep.subr.mxu0 0.0
  %1096 = vmatpush1.msra.mxu0 0.0
  %1097 = vmatprep.subr.mxu0 0.0
  %1098 = vmatpush1.msra.mxu0 0.0
  %1099 = vmatprep.subr.mxu0 0.0
  %1100 = vmatpush1.msra.mxu0 0.0
  %1101 = vmatprep.subr.mxu0 0.0
  %1102 = vmatpush1.msra.mxu0 0.0
  %1103 = vmatprep.subr.mxu0 0.0
  %1104 = vmatpush1.msra.mxu0 0.0
  %1105 = vmatprep.subr.mxu0 0.0
  %1106 = vmatpush1.msra.mxu0 0.0
  %1107 = vmatprep.subr.mxu0 0.0
  %1108 = vmatpush1.msra.mxu0 0.0
  %1109 = vmatprep.subr.mxu0 0.0
  %1110 = vmatpush1.msra.mxu0 0.0
  %1111 = vmatprep.subr.mxu0 0.0
  %1112 = vmatpush1.msra.mxu0 0.0
  %1113 = vmatprep.subr.mxu0 0.0
  %1114 = vmatpush1.msra.mxu0 0.0
  %1115 = vmatprep.mubr.f32.mxu0 0.0
  %1116 = vmatmul.mubr.f32.gmra.mrb[0].mxu0 %v1050
  %v1117 = vpop.f32.mrb[0].mxu0
  %v1118 = vadd.f32 0.0, %v1117
  %v1119 = vpop.f32.mrb[0].mxu0
  %1120 = vdwg.mxu0
  %v1121 = vrsqrt.pop %v1118
  %v1122 = vmul.f32 %v1118, %v1121
  %vm1123 = vcmp.eq.f32.partialorder %v1118, inf
  %v1124 = vsel %vm1123, %v1118, %v1122
  %vm1125 = vcmp.eq.f32.partialorder %v1118, 0.0
  %v1126 = vand.u32 %v1118, 2147483648
  %v1127 = vsel %vm1125, %v1126, %v1124
  %v1128 = vadd.f32 %v1118, 1.0
  %v1129 = vadd.f32 %v1127, 1e-08
  %v1130 = vmul.f32 %v1128, %v1129
  %v1131 = vrcp.pop %v1130
  %v1132 = vmul.f32 %v1127, %v1131
  %v1133 = vmul.f32 %v460, %v1132
  %v1134 = vadd.f32 %v545, %v629
  %v1135 = vadd.f32 %v1134, %v713
  %v1136 = vadd.f32 %v1135, %v797
  %v1137 = vadd.f32 %v1136, %v881
  %v1138 = vadd.f32 %v1137, %v965
  %v1139 = vadd.f32 %v1138, %v1049
  %v1140 = vadd.f32 %v1139, %v1133
  %v1141 = vmul.f32 %v1140, 0.25
  %v1142 = vmul.f32 %v1141, %v1141
  %1143 = vmatprep.subr.mxu0 0.0
  %1144 = vmatpush1.msra.mxu0 %v146
  %1145 = vmatprep.subr.mxu0 0.0
  %1146 = vmatpush1.msra.mxu0 %v147
  %1147 = vmatprep.subr.mxu0 0.0
  %1148 = vmatpush1.msra.mxu0 %v148
  %1149 = vmatprep.subr.mxu0 0.0
  %1150 = vmatpush1.msra.mxu0 %v149
  %1151 = vmatprep.subr.mxu0 0.0
  %1152 = vmatpush1.msra.mxu0 %v150
  %1153 = vmatprep.subr.mxu0 0.0
  %1154 = vmatpush1.msra.mxu0 %v151
  %1155 = vmatprep.subr.mxu0 0.0
  %1156 = vmatpush1.msra.mxu0 %v152
  %1157 = vmatprep.subr.mxu0 0.0
  %1158 = vmatpush1.msra.mxu0 %v153
  %1159 = vmatprep.subr.mxu0 0.0
  %1160 = vmatpush1.msra.mxu0 %v154
  %1161 = vmatprep.subr.mxu0 0.0
  %1162 = vmatpush1.msra.mxu0 %v155
  %1163 = vmatprep.subr.mxu0 0.0
  %1164 = vmatpush1.msra.mxu0 %v156
  %1165 = vmatprep.subr.mxu0 0.0
  %1166 = vmatpush1.msra.mxu0 %v157
  %1167 = vmatprep.subr.mxu0 0.0
  %1168 = vmatpush1.msra.mxu0 %v158
  %1169 = vmatprep.subr.mxu0 0.0
  %1170 = vmatpush1.msra.mxu0 %v159
  %1171 = vmatprep.subr.mxu0 0.0
  %1172 = vmatpush1.msra.mxu0 %v160
  %1173 = vmatprep.subr.mxu0 0.0
  %1174 = vmatpush1.msra.mxu0 %v161
  %1175 = vmatprep.subr.mxu0 0.0
  %1176 = vmatpush1.msra.mxu0 0.0
  %1177 = vmatprep.subr.mxu0 0.0
  %1178 = vmatpush1.msra.mxu0 0.0
  %1179 = vmatprep.subr.mxu0 0.0
  %1180 = vmatpush1.msra.mxu0 0.0
  %1181 = vmatprep.subr.mxu0 0.0
  %1182 = vmatpush1.msra.mxu0 0.0
  %1183 = vmatprep.subr.mxu0 0.0
  %1184 = vmatpush1.msra.mxu0 0.0
  %1185 = vmatprep.subr.mxu0 0.0
  %1186 = vmatpush1.msra.mxu0 0.0
  %1187 = vmatprep.subr.mxu0 0.0
  %1188 = vmatpush1.msra.mxu0 0.0
  %1189 = vmatprep.subr.mxu0 0.0
  %1190 = vmatpush1.msra.mxu0 0.0
  %1191 = vmatprep.subr.mxu0 0.0
  %1192 = vmatpush1.msra.mxu0 0.0
  %1193 = vmatprep.subr.mxu0 0.0
  %1194 = vmatpush1.msra.mxu0 0.0
  %1195 = vmatprep.subr.mxu0 0.0
  %1196 = vmatpush1.msra.mxu0 0.0
  %1197 = vmatprep.subr.mxu0 0.0
  %1198 = vmatpush1.msra.mxu0 0.0
  %1199 = vmatprep.subr.mxu0 0.0
  %1200 = vmatpush1.msra.mxu0 0.0
  %1201 = vmatprep.subr.mxu0 0.0
  %1202 = vmatpush1.msra.mxu0 0.0
  %1203 = vmatprep.subr.mxu0 0.0
  %1204 = vmatpush1.msra.mxu0 0.0
  %1205 = vmatprep.subr.mxu0 0.0
  %1206 = vmatpush1.msra.mxu0 0.0
  %1207 = vmatprep.mubr.f32.mxu0 0.0
  %1208 = vmatmul.mubr.f32.gmra.mrb[0].mxu0 %v1142
  %v1209 = vpop.f32.mrb[0].mxu0
  %v1210 = vadd.f32 0.0, %v1209
  %v1211 = vpop.f32.mrb[0].mxu0
  %1212 = vdwg.mxu0
  %v1213 = vrsqrt.pop %v1210
  %v1214 = vmul.f32 %v1210, %v1213
  %vm1215 = vcmp.eq.f32.partialorder %v1210, inf
  %v1216 = vsel %vm1215, %v1210, %v1214
  %vm1217 = vcmp.eq.f32.partialorder %v1210, 0.0
  %v1218 = vand.u32 %v1210, 2147483648
  %v1219 = vsel %vm1217, %v1218, %v1216
  %v1220 = vadd.f32 %v1210, 1.0
  %v1221 = vadd.f32 %v1219, 1e-08
  %v1222 = vmul.f32 %v1220, %v1221
  %v1223 = vrcp.pop %v1222
  %v1224 = vmul.f32 %v1219, %v1223
  %v1225 = vmul.f32 %v1141, %v1224
  %v1226 = vmul.f32 %v545, %v1225
  %1227 = vmatprep.subr.mxu0 0.0
  %1228 = vmatpush1.msra.mxu0 %v162
  %1229 = vmatprep.subr.mxu0 0.0
  %1230 = vmatpush1.msra.mxu0 %v163
  %1231 = vmatprep.subr.mxu0 0.0
  %1232 = vmatpush1.msra.mxu0 %v164
  %1233 = vmatprep.subr.mxu0 0.0
  %1234 = vmatpush1.msra.mxu0 %v165
  %1235 = vmatprep.subr.mxu0 0.0
  %1236 = vmatpush1.msra.mxu0 %v166
  %1237 = vmatprep.subr.mxu0 0.0
  %1238 = vmatpush1.msra.mxu0 %v167
  %1239 = vmatprep.subr.mxu0 0.0
  %1240 = vmatpush1.msra.mxu0 %v168
  %1241 = vmatprep.subr.mxu0 0.0
  %1242 = vmatpush1.msra.mxu0 %v169
  %1243 = vmatprep.subr.mxu0 0.0
  %1244 = vmatpush1.msra.mxu0 %v170
  %1245 = vmatprep.subr.mxu0 0.0
  %1246 = vmatpush1.msra.mxu0 %v171
  %1247 = vmatprep.subr.mxu0 0.0
  %1248 = vmatpush1.msra.mxu0 %v172
  %1249 = vmatprep.subr.mxu0 0.0
  %1250 = vmatpush1.msra.mxu0 %v173
  %1251 = vmatprep.subr.mxu0 0.0
  %1252 = vmatpush1.msra.mxu0 %v174
  %1253 = vmatprep.subr.mxu0 0.0
  %1254 = vmatpush1.msra.mxu0 %v175
  %1255 = vmatprep.subr.mxu0 0.0
  %1256 = vmatpush1.msra.mxu0 %v176
  %1257 = vmatprep.subr.mxu0 0.0
  %1258 = vmatpush1.msra.mxu0 %v177
  %1259 = vmatprep.subr.mxu0 0.0
  %1260 = vmatpush1.msra.mxu0 0.0
  %1261 = vmatprep.subr.mxu0 0.0
  %1262 = vmatpush1.msra.mxu0 0.0
  %1263 = vmatprep.subr.mxu0 0.0
  %1264 = vmatpush1.msra.mxu0 0.0
  %1265 = vmatprep.subr.mxu0 0.0
  %1266 = vmatpush1.msra.mxu0 0.0
  %1267 = vmatprep.subr.mxu0 0.0
  %1268 = vmatpush1.msra.mxu0 0.0
  %1269 = vmatprep.subr.mxu0 0.0
  %1270 = vmatpush1.msra.mxu0 0.0
  %1271 = vmatprep.subr.mxu0 0.0
  %1272 = vmatpush1.msra.mxu0 0.0
  %1273 = vmatprep.subr.mxu0 0.0
  %1274 = vmatpush1.msra.mxu0 0.0
  %1275 = vmatprep.subr.mxu0 0.0
  %1276 = vmatpush1.msra.mxu0 0.0
  %1277 = vmatprep.subr.mxu0 0.0
  %1278 = vmatpush1.msra.mxu0 0.0
  %1279 = vmatprep.subr.mxu0 0.0
  %1280 = vmatpush1.msra.mxu0 0.0
  %1281 = vmatprep.subr.mxu0 0.0
  %1282 = vmatpush1.msra.mxu0 0.0
  %1283 = vmatprep.subr.mxu0 0.0
  %1284 = vmatpush1.msra.mxu0 0.0
  %1285 = vmatprep.subr.mxu0 0.0
  %1286 = vmatpush1.msra.mxu0 0.0
  %1287 = vmatprep.subr.mxu0 0.0
  %1288 = vmatpush1.msra.mxu0 0.0
  %1289 = vmatprep.subr.mxu0 0.0
  %1290 = vmatpush1.msra.mxu0 0.0
  %1291 = vmatprep.mubr.f32.mxu0 0.0
  %1292 = vmatmul.mubr.f32.gmra.mrb[0].mxu0 %v1226
  %v1293 = vpop.f32.mrb[0].mxu0
  %v1294 = vadd.f32 0.0, %v1293
  %v1295 = vpop.f32.mrb[0].mxu0
  %1296 = vdwg.mxu0
  %v1297 = vmul.f32 %v629, %v1225
  %1298 = vmatprep.subr.mxu0 0.0
  %1299 = vmatpush1.msra.mxu0 %v162
  %1300 = vmatprep.subr.mxu0 0.0
  %1301 = vmatpush1.msra.mxu0 %v163
  %1302 = vmatprep.subr.mxu0 0.0
  %1303 = vmatpush1.msra.mxu0 %v164
  %1304 = vmatprep.subr.mxu0 0.0
  %1305 = vmatpush1.msra.mxu0 %v165
  %1306 = vmatprep.subr.mxu0 0.0
  %1307 = vmatpush1.msra.mxu0 %v166
  %1308 = vmatprep.subr.mxu0 0.0
  %1309 = vmatpush1.msra.mxu0 %v167
  %1310 = vmatprep.subr.mxu0 0.0
  %1311 = vmatpush1.msra.mxu0 %v168
  %1312 = vmatprep.subr.mxu0 0.0
  %1313 = vmatpush1.msra.mxu0 %v169
  %1314 = vmatprep.subr.mxu0 0.0
  %1315 = vmatpush1.msra.mxu0 %v170
  %1316 = vmatprep.subr.mxu0 0.0
  %1317 = vmatpush1.msra.mxu0 %v171
  %1318 = vmatprep.subr.mxu0 0.0
  %1319 = vmatpush1.msra.mxu0 %v172
  %1320 = vmatprep.subr.mxu0 0.0
  %1321 = vmatpush1.msra.mxu0 %v173
  %1322 = vmatprep.subr.mxu0 0.0
  %1323 = vmatpush1.msra.mxu0 %v174
  %1324 = vmatprep.subr.mxu0 0.0
  %1325 = vmatpush1.msra.mxu0 %v175
  %1326 = vmatprep.subr.mxu0 0.0
  %1327 = vmatpush1.msra.mxu0 %v176
  %1328 = vmatprep.subr.mxu0 0.0
  %1329 = vmatpush1.msra.mxu0 %v177
  %1330 = vmatprep.subr.mxu0 0.0
  %1331 = vmatpush1.msra.mxu0 0.0
  %1332 = vmatprep.subr.mxu0 0.0
  %1333 = vmatpush1.msra.mxu0 0.0
  %1334 = vmatprep.subr.mxu0 0.0
  %1335 = vmatpush1.msra.mxu0 0.0
  %1336 = vmatprep.subr.mxu0 0.0
  %1337 = vmatpush1.msra.mxu0 0.0
  %1338 = vmatprep.subr.mxu0 0.0
  %1339 = vmatpush1.msra.mxu0 0.0
  %1340 = vmatprep.subr.mxu0 0.0
  %1341 = vmatpush1.msra.mxu0 0.0
  %1342 = vmatprep.subr.mxu0 0.0
  %1343 = vmatpush1.msra.mxu0 0.0
  %1344 = vmatprep.subr.mxu0 0.0
  %1345 = vmatpush1.msra.mxu0 0.0
  %1346 = vmatprep.subr.mxu0 0.0
  %1347 = vmatpush1.msra.mxu0 0.0
  %1348 = vmatprep.subr.mxu0 0.0
  %1349 = vmatpush1.msra.mxu0 0.0
  %1350 = vmatprep.subr.mxu0 0.0
  %1351 = vmatpush1.msra.mxu0 0.0
  %1352 = vmatprep.subr.mxu0 0.0
  %1353 = vmatpush1.msra.mxu0 0.0
  %1354 = vmatprep.subr.mxu0 0.0
  %1355 = vmatpush1.msra.mxu0 0.0
  %1356 = vmatprep.subr.mxu0 0.0
  %1357 = vmatpush1.msra.mxu0 0.0
  %1358 = vmatprep.subr.mxu0 0.0
  %1359 = vmatpush1.msra.mxu0 0.0
  %1360 = vmatprep.subr.mxu0 0.0
  %1361 = vmatpush1.msra.mxu0 0.0
  %1362 = vmatprep.mubr.f32.mxu0 0.0
  %1363 = vmatmul.mubr.f32.gmra.mrb[0].mxu0 %v1297
  %v1364 = vpop.f32.mrb[0].mxu0
  %v1365 = vadd.f32 0.0, %v1364
  %v1366 = vpop.f32.mrb[0].mxu0
  %1367 = vdwg.mxu0
  %v1368 = vmul.f32 %v713, %v1225
  %1369 = vmatprep.subr.mxu0 0.0
  %1370 = vmatpush1.msra.mxu0 %v162
  %1371 = vmatprep.subr.mxu0 0.0
  %1372 = vmatpush1.msra.mxu0 %v163
  %1373 = vmatprep.subr.mxu0 0.0
  %1374 = vmatpush1.msra.mxu0 %v164
  %1375 = vmatprep.subr.mxu0 0.0
  %1376 = vmatpush1.msra.mxu0 %v165
  %1377 = vmatprep.subr.mxu0 0.0
  %1378 = vmatpush1.msra.mxu0 %v166
  %1379 = vmatprep.subr.mxu0 0.0
  %1380 = vmatpush1.msra.mxu0 %v167
  %1381 = vmatprep.subr.mxu0 0.0
  %1382 = vmatpush1.msra.mxu0 %v168
  %1383 = vmatprep.subr.mxu0 0.0
  %1384 = vmatpush1.msra.mxu0 %v169
  %1385 = vmatprep.subr.mxu0 0.0
  %1386 = vmatpush1.msra.mxu0 %v170
  %1387 = vmatprep.subr.mxu0 0.0
  %1388 = vmatpush1.msra.mxu0 %v171
  %1389 = vmatprep.subr.mxu0 0.0
  %1390 = vmatpush1.msra.mxu0 %v172
  %1391 = vmatprep.subr.mxu0 0.0
  %1392 = vmatpush1.msra.mxu0 %v173
  %1393 = vmatprep.subr.mxu0 0.0
  %1394 = vmatpush1.msra.mxu0 %v174
  %1395 = vmatprep.subr.mxu0 0.0
  %1396 = vmatpush1.msra.mxu0 %v175
  %1397 = vmatprep.subr.mxu0 0.0
  %1398 = vmatpush1.msra.mxu0 %v176
  %1399 = vmatprep.subr.mxu0 0.0
  %1400 = vmatpush1.msra.mxu0 %v177
  %1401 = vmatprep.subr.mxu0 0.0
  %1402 = vmatpush1.msra.mxu0 0.0
  %1403 = vmatprep.subr.mxu0 0.0
  %1404 = vmatpush1.msra.mxu0 0.0
  %1405 = vmatprep.subr.mxu0 0.0
  %1406 = vmatpush1.msra.mxu0 0.0
  %1407 = vmatprep.subr.mxu0 0.0
  %1408 = vmatpush1.msra.mxu0 0.0
  %1409 = vmatprep.subr.mxu0 0.0
  %1410 = vmatpush1.msra.mxu0 0.0
  %1411 = vmatprep.subr.mxu0 0.0
  %1412 = vmatpush1.msra.mxu0 0.0
  %1413 = vmatprep.subr.mxu0 0.0
  %1414 = vmatpush1.msra.mxu0 0.0
  %1415 = vmatprep.subr.mxu0 0.0
  %1416 = vmatpush1.msra.mxu0 0.0
  %1417 = vmatprep.subr.mxu0 0.0
  %1418 = vmatpush1.msra.mxu0 0.0
  %1419 = vmatprep.subr.mxu0 0.0
  %1420 = vmatpush1.msra.mxu0 0.0
  %1421 = vmatprep.subr.mxu0 0.0
  %1422 = vmatpush1.msra.mxu0 0.0
  %1423 = vmatprep.subr.mxu0 0.0
  %1424 = vmatpush1.msra.mxu0 0.0
  %1425 = vmatprep.subr.mxu0 0.0
  %1426 = vmatpush1.msra.mxu0 0.0
  %1427 = vmatprep.subr.mxu0 0.0
  %1428 = vmatpush1.msra.mxu0 0.0
  %1429 = vmatprep.subr.mxu0 0.0
  %1430 = vmatpush1.msra.mxu0 0.0
  %1431 = vmatprep.subr.mxu0 0.0
  %1432 = vmatpush1.msra.mxu0 0.0
  %1433 = vmatprep.mubr.f32.mxu0 0.0
  %1434 = vmatmul.mubr.f32.gmra.mrb[0].mxu0 %v1368
  %v1435 = vpop.f32.mrb[0].mxu0
  %v1436 = vadd.f32 0.0, %v1435
  %v1437 = vpop.f32.mrb[0].mxu0
  %1438 = vdwg.mxu0
  %v1439 = vmul.f32 %v797, %v1225
  %1440 = vmatprep.subr.mxu0 0.0
  %1441 = vmatpush1.msra.mxu0 %v162
  %1442 = vmatprep.subr.mxu0 0.0
  %1443 = vmatpush1.msra.mxu0 %v163
  %1444 = vmatprep.subr.mxu0 0.0
  %1445 = vmatpush1.msra.mxu0 %v164
  %1446 = vmatprep.subr.mxu0 0.0
  %1447 = vmatpush1.msra.mxu0 %v165
  %1448 = vmatprep.subr.mxu0 0.0
  %1449 = vmatpush1.msra.mxu0 %v166
  %1450 = vmatprep.subr.mxu0 0.0
  %1451 = vmatpush1.msra.mxu0 %v167
  %1452 = vmatprep.subr.mxu0 0.0
  %1453 = vmatpush1.msra.mxu0 %v168
  %1454 = vmatprep.subr.mxu0 0.0
  %1455 = vmatpush1.msra.mxu0 %v169
  %1456 = vmatprep.subr.mxu0 0.0
  %1457 = vmatpush1.msra.mxu0 %v170
  %1458 = vmatprep.subr.mxu0 0.0
  %1459 = vmatpush1.msra.mxu0 %v171
  %1460 = vmatprep.subr.mxu0 0.0
  %1461 = vmatpush1.msra.mxu0 %v172
  %1462 = vmatprep.subr.mxu0 0.0
  %1463 = vmatpush1.msra.mxu0 %v173
  %1464 = vmatprep.subr.mxu0 0.0
  %1465 = vmatpush1.msra.mxu0 %v174
  %1466 = vmatprep.subr.mxu0 0.0
  %1467 = vmatpush1.msra.mxu0 %v175
  %1468 = vmatprep.subr.mxu0 0.0
  %1469 = vmatpush1.msra.mxu0 %v176
  %1470 = vmatprep.subr.mxu0 0.0
  %1471 = vmatpush1.msra.mxu0 %v177
  %1472 = vmatprep.subr.mxu0 0.0
  %1473 = vmatpush1.msra.mxu0 0.0
  %1474 = vmatprep.subr.mxu0 0.0
  %1475 = vmatpush1.msra.mxu0 0.0
  %1476 = vmatprep.subr.mxu0 0.0
  %1477 = vmatpush1.msra.mxu0 0.0
  %1478 = vmatprep.subr.mxu0 0.0
  %1479 = vmatpush1.msra.mxu0 0.0
  %1480 = vmatprep.subr.mxu0 0.0
  %1481 = vmatpush1.msra.mxu0 0.0
  %1482 = vmatprep.subr.mxu0 0.0
  %1483 = vmatpush1.msra.mxu0 0.0
  %1484 = vmatprep.subr.mxu0 0.0
  %1485 = vmatpush1.msra.mxu0 0.0
  %1486 = vmatprep.subr.mxu0 0.0
  %1487 = vmatpush1.msra.mxu0 0.0
  %1488 = vmatprep.subr.mxu0 0.0
  %1489 = vmatpush1.msra.mxu0 0.0
  %1490 = vmatprep.subr.mxu0 0.0
  %1491 = vmatpush1.msra.mxu0 0.0
  %1492 = vmatprep.subr.mxu0 0.0
  %1493 = vmatpush1.msra.mxu0 0.0
  %1494 = vmatprep.subr.mxu0 0.0
  %1495 = vmatpush1.msra.mxu0 0.0
  %1496 = vmatprep.subr.mxu0 0.0
  %1497 = vmatpush1.msra.mxu0 0.0
  %1498 = vmatprep.subr.mxu0 0.0
  %1499 = vmatpush1.msra.mxu0 0.0
  %1500 = vmatprep.subr.mxu0 0.0
  %1501 = vmatpush1.msra.mxu0 0.0
  %1502 = vmatprep.subr.mxu0 0.0
  %1503 = vmatpush1.msra.mxu0 0.0
  %1504 = vmatprep.mubr.f32.mxu0 0.0
  %1505 = vmatmul.mubr.f32.gmra.mrb[0].mxu0 %v1439
  %v1506 = vpop.f32.mrb[0].mxu0
  %v1507 = vadd.f32 0.0, %v1506
  %v1508 = vpop.f32.mrb[0].mxu0
  %1509 = vdwg.mxu0
  %v1510 = vmul.f32 %v881, %v1225
  %1511 = vmatprep.subr.mxu0 0.0
  %1512 = vmatpush1.msra.mxu0 %v162
  %1513 = vmatprep.subr.mxu0 0.0
  %1514 = vmatpush1.msra.mxu0 %v163
  %1515 = vmatprep.subr.mxu0 0.0
  %1516 = vmatpush1.msra.mxu0 %v164
  %1517 = vmatprep.subr.mxu0 0.0
  %1518 = vmatpush1.msra.mxu0 %v165
  %1519 = vmatprep.subr.mxu0 0.0
  %1520 = vmatpush1.msra.mxu0 %v166
  %1521 = vmatprep.subr.mxu0 0.0
  %1522 = vmatpush1.msra.mxu0 %v167
  %1523 = vmatprep.subr.mxu0 0.0
  %1524 = vmatpush1.msra.mxu0 %v168
  %1525 = vmatprep.subr.mxu0 0.0
  %1526 = vmatpush1.msra.mxu0 %v169
  %1527 = vmatprep.subr.mxu0 0.0
  %1528 = vmatpush1.msra.mxu0 %v170
  %1529 = vmatprep.subr.mxu0 0.0
  %1530 = vmatpush1.msra.mxu0 %v171
  %1531 = vmatprep.subr.mxu0 0.0
  %1532 = vmatpush1.msra.mxu0 %v172
  %1533 = vmatprep.subr.mxu0 0.0
  %1534 = vmatpush1.msra.mxu0 %v173
  %1535 = vmatprep.subr.mxu0 0.0
  %1536 = vmatpush1.msra.mxu0 %v174
  %1537 = vmatprep.subr.mxu0 0.0
  %1538 = vmatpush1.msra.mxu0 %v175
  %1539 = vmatprep.subr.mxu0 0.0
  %1540 = vmatpush1.msra.mxu0 %v176
  %1541 = vmatprep.subr.mxu0 0.0
  %1542 = vmatpush1.msra.mxu0 %v177
  %1543 = vmatprep.subr.mxu0 0.0
  %1544 = vmatpush1.msra.mxu0 0.0
  %1545 = vmatprep.subr.mxu0 0.0
  %1546 = vmatpush1.msra.mxu0 0.0
  %1547 = vmatprep.subr.mxu0 0.0
  %1548 = vmatpush1.msra.mxu0 0.0
  %1549 = vmatprep.subr.mxu0 0.0
  %1550 = vmatpush1.msra.mxu0 0.0
  %1551 = vmatprep.subr.mxu0 0.0
  %1552 = vmatpush1.msra.mxu0 0.0
  %1553 = vmatprep.subr.mxu0 0.0
  %1554 = vmatpush1.msra.mxu0 0.0
  %1555 = vmatprep.subr.mxu0 0.0
  %1556 = vmatpush1.msra.mxu0 0.0
  %1557 = vmatprep.subr.mxu0 0.0
  %1558 = vmatpush1.msra.mxu0 0.0
  %1559 = vmatprep.subr.mxu0 0.0
  %1560 = vmatpush1.msra.mxu0 0.0
  %1561 = vmatprep.subr.mxu0 0.0
  %1562 = vmatpush1.msra.mxu0 0.0
  %1563 = vmatprep.subr.mxu0 0.0
  %1564 = vmatpush1.msra.mxu0 0.0
  %1565 = vmatprep.subr.mxu0 0.0
  %1566 = vmatpush1.msra.mxu0 0.0
  %1567 = vmatprep.subr.mxu0 0.0
  %1568 = vmatpush1.msra.mxu0 0.0
  %1569 = vmatprep.subr.mxu0 0.0
  %1570 = vmatpush1.msra.mxu0 0.0
  %1571 = vmatprep.subr.mxu0 0.0
  %1572 = vmatpush1.msra.mxu0 0.0
  %1573 = vmatprep.subr.mxu0 0.0
  %1574 = vmatpush1.msra.mxu0 0.0
  %1575 = vmatprep.mubr.f32.mxu0 0.0
  %1576 = vmatmul.mubr.f32.gmra.mrb[0].mxu0 %v1510
  %v1577 = vpop.f32.mrb[0].mxu0
  %v1578 = vadd.f32 0.0, %v1577
  %v1579 = vpop.f32.mrb[0].mxu0
  %1580 = vdwg.mxu0
  %v1581 = vmul.f32 %v965, %v1225
  %1582 = vmatprep.subr.mxu0 0.0
  %1583 = vmatpush1.msra.mxu0 %v162
  %1584 = vmatprep.subr.mxu0 0.0
  %1585 = vmatpush1.msra.mxu0 %v163
  %1586 = vmatprep.subr.mxu0 0.0
  %1587 = vmatpush1.msra.mxu0 %v164
  %1588 = vmatprep.subr.mxu0 0.0
  %1589 = vmatpush1.msra.mxu0 %v165
  %1590 = vmatprep.subr.mxu0 0.0
  %1591 = vmatpush1.msra.mxu0 %v166
  %1592 = vmatprep.subr.mxu0 0.0
  %1593 = vmatpush1.msra.mxu0 %v167
  %1594 = vmatprep.subr.mxu0 0.0
  %1595 = vmatpush1.msra.mxu0 %v168
  %1596 = vmatprep.subr.mxu0 0.0
  %1597 = vmatpush1.msra.mxu0 %v169
  %1598 = vmatprep.subr.mxu0 0.0
  %1599 = vmatpush1.msra.mxu0 %v170
  %1600 = vmatprep.subr.mxu0 0.0
  %1601 = vmatpush1.msra.mxu0 %v171
  %1602 = vmatprep.subr.mxu0 0.0
  %1603 = vmatpush1.msra.mxu0 %v172
  %1604 = vmatprep.subr.mxu0 0.0
  %1605 = vmatpush1.msra.mxu0 %v173
  %1606 = vmatprep.subr.mxu0 0.0
  %1607 = vmatpush1.msra.mxu0 %v174
  %1608 = vmatprep.subr.mxu0 0.0
  %1609 = vmatpush1.msra.mxu0 %v175
  %1610 = vmatprep.subr.mxu0 0.0
  %1611 = vmatpush1.msra.mxu0 %v176
  %1612 = vmatprep.subr.mxu0 0.0
  %1613 = vmatpush1.msra.mxu0 %v177
  %1614 = vmatprep.subr.mxu0 0.0
  %1615 = vmatpush1.msra.mxu0 0.0
  %1616 = vmatprep.subr.mxu0 0.0
  %1617 = vmatpush1.msra.mxu0 0.0
  %1618 = vmatprep.subr.mxu0 0.0
  %1619 = vmatpush1.msra.mxu0 0.0
  %1620 = vmatprep.subr.mxu0 0.0
  %1621 = vmatpush1.msra.mxu0 0.0
  %1622 = vmatprep.subr.mxu0 0.0
  %1623 = vmatpush1.msra.mxu0 0.0
  %1624 = vmatprep.subr.mxu0 0.0
  %1625 = vmatpush1.msra.mxu0 0.0
  %1626 = vmatprep.subr.mxu0 0.0
  %1627 = vmatpush1.msra.mxu0 0.0
  %1628 = vmatprep.subr.mxu0 0.0
  %1629 = vmatpush1.msra.mxu0 0.0
  %1630 = vmatprep.subr.mxu0 0.0
  %1631 = vmatpush1.msra.mxu0 0.0
  %1632 = vmatprep.subr.mxu0 0.0
  %1633 = vmatpush1.msra.mxu0 0.0
  %1634 = vmatprep.subr.mxu0 0.0
  %1635 = vmatpush1.msra.mxu0 0.0
  %1636 = vmatprep.subr.mxu0 0.0
  %1637 = vmatpush1.msra.mxu0 0.0
  %1638 = vmatprep.subr.mxu0 0.0
  %1639 = vmatpush1.msra.mxu0 0.0
  %1640 = vmatprep.subr.mxu0 0.0
  %1641 = vmatpush1.msra.mxu0 0.0
  %1642 = vmatprep.subr.mxu0 0.0
  %1643 = vmatpush1.msra.mxu0 0.0
  %1644 = vmatprep.subr.mxu0 0.0
  %1645 = vmatpush1.msra.mxu0 0.0
  %1646 = vmatprep.mubr.f32.mxu0 0.0
  %1647 = vmatmul.mubr.f32.gmra.mrb[0].mxu0 %v1581
  %v1648 = vpop.f32.mrb[0].mxu0
  %v1649 = vadd.f32 0.0, %v1648
  %v1650 = vpop.f32.mrb[0].mxu0
  %1651 = vdwg.mxu0
  %v1652 = vmul.f32 %v1049, %v1225
  %1653 = vmatprep.subr.mxu0 0.0
  %1654 = vmatpush1.msra.mxu0 %v162
  %1655 = vmatprep.subr.mxu0 0.0
  %1656 = vmatpush1.msra.mxu0 %v163
  %1657 = vmatprep.subr.mxu0 0.0
  %1658 = vmatpush1.msra.mxu0 %v164
  %1659 = vmatprep.subr.mxu0 0.0
  %1660 = vmatpush1.msra.mxu0 %v165
  %1661 = vmatprep.subr.mxu0 0.0
  %1662 = vmatpush1.msra.mxu0 %v166
  %1663 = vmatprep.subr.mxu0 0.0
  %1664 = vmatpush1.msra.mxu0 %v167
  %1665 = vmatprep.subr.mxu0 0.0
  %1666 = vmatpush1.msra.mxu0 %v168
  %1667 = vmatprep.subr.mxu0 0.0
  %1668 = vmatpush1.msra.mxu0 %v169
  %1669 = vmatprep.subr.mxu0 0.0
  %1670 = vmatpush1.msra.mxu0 %v170
  %1671 = vmatprep.subr.mxu0 0.0
  %1672 = vmatpush1.msra.mxu0 %v171
  %1673 = vmatprep.subr.mxu0 0.0
  %1674 = vmatpush1.msra.mxu0 %v172
  %1675 = vmatprep.subr.mxu0 0.0
  %1676 = vmatpush1.msra.mxu0 %v173
  %1677 = vmatprep.subr.mxu0 0.0
  %1678 = vmatpush1.msra.mxu0 %v174
  %1679 = vmatprep.subr.mxu0 0.0
  %1680 = vmatpush1.msra.mxu0 %v175
  %1681 = vmatprep.subr.mxu0 0.0
  %1682 = vmatpush1.msra.mxu0 %v176
  %1683 = vmatprep.subr.mxu0 0.0
  %1684 = vmatpush1.msra.mxu0 %v177
  %1685 = vmatprep.subr.mxu0 0.0
  %1686 = vmatpush1.msra.mxu0 0.0
  %1687 = vmatprep.subr.mxu0 0.0
  %1688 = vmatpush1.msra.mxu0 0.0
  %1689 = vmatprep.subr.mxu0 0.0
  %1690 = vmatpush1.msra.mxu0 0.0
  %1691 = vmatprep.subr.mxu0 0.0
  %1692 = vmatpush1.msra.mxu0 0.0
  %1693 = vmatprep.subr.mxu0 0.0
  %1694 = vmatpush1.msra.mxu0 0.0
  %1695 = vmatprep.subr.mxu0 0.0
  %1696 = vmatpush1.msra.mxu0 0.0
  %1697 = vmatprep.subr.mxu0 0.0
  %1698 = vmatpush1.msra.mxu0 0.0
  %1699 = vmatprep.subr.mxu0 0.0
  %1700 = vmatpush1.msra.mxu0 0.0
  %1701 = vmatprep.subr.mxu0 0.0
  %1702 = vmatpush1.msra.mxu0 0.0
  %1703 = vmatprep.subr.mxu0 0.0
  %1704 = vmatpush1.msra.mxu0 0.0
  %1705 = vmatprep.subr.mxu0 0.0
  %1706 = vmatpush1.msra.mxu0 0.0
  %1707 = vmatprep.subr.mxu0 0.0
  %1708 = vmatpush1.msra.mxu0 0.0
  %1709 = vmatprep.subr.mxu0 0.0
  %1710 = vmatpush1.msra.mxu0 0.0
  %1711 = vmatprep.subr.mxu0 0.0
  %1712 = vmatpush1.msra.mxu0 0.0
  %1713 = vmatprep.subr.mxu0 0.0
  %1714 = vmatpush1.msra.mxu0 0.0
  %1715 = vmatprep.subr.mxu0 0.0
  %1716 = vmatpush1.msra.mxu0 0.0
  %1717 = vmatprep.mubr.f32.mxu0 0.0
  %1718 = vmatmul.mubr.f32.gmra.mrb[0].mxu0 %v1652
  %v1719 = vpop.f32.mrb[0].mxu0
  %v1720 = vadd.f32 0.0, %v1719
  %v1721 = vpop.f32.mrb[0].mxu0
  %1722 = vdwg.mxu0
  %v1723 = vmul.f32 %v1133, %v1225
  %1724 = vmatprep.subr.mxu0 0.0
  %1725 = vmatpush1.msra.mxu0 %v162
  %1726 = vmatprep.subr.mxu0 0.0
  %1727 = vmatpush1.msra.mxu0 %v163
  %1728 = vmatprep.subr.mxu0 0.0
  %1729 = vmatpush1.msra.mxu0 %v164
  %1730 = vmatprep.subr.mxu0 0.0
  %1731 = vmatpush1.msra.mxu0 %v165
  %1732 = vmatprep.subr.mxu0 0.0
  %1733 = vmatpush1.msra.mxu0 %v166
  %1734 = vmatprep.subr.mxu0 0.0
  %1735 = vmatpush1.msra.mxu0 %v167
  %1736 = vmatprep.subr.mxu0 0.0
  %1737 = vmatpush1.msra.mxu0 %v168
  %1738 = vmatprep.subr.mxu0 0.0
  %1739 = vmatpush1.msra.mxu0 %v169
  %1740 = vmatprep.subr.mxu0 0.0
  %1741 = vmatpush1.msra.mxu0 %v170
  %1742 = vmatprep.subr.mxu0 0.0
  %1743 = vmatpush1.msra.mxu0 %v171
  %1744 = vmatprep.subr.mxu0 0.0
  %1745 = vmatpush1.msra.mxu0 %v172
  %1746 = vmatprep.subr.mxu0 0.0
  %1747 = vmatpush1.msra.mxu0 %v173
  %1748 = vmatprep.subr.mxu0 0.0
  %1749 = vmatpush1.msra.mxu0 %v174
  %1750 = vmatprep.subr.mxu0 0.0
  %1751 = vmatpush1.msra.mxu0 %v175
  %1752 = vmatprep.subr.mxu0 0.0
  %1753 = vmatpush1.msra.mxu0 %v176
  %1754 = vmatprep.subr.mxu0 0.0
  %1755 = vmatpush1.msra.mxu0 %v177
  %1756 = vmatprep.subr.mxu0 0.0
  %1757 = vmatpush1.msra.mxu0 0.0
  %1758 = vmatprep.subr.mxu0 0.0
  %1759 = vmatpush1.msra.mxu0 0.0
  %1760 = vmatprep.subr.mxu0 0.0
  %1761 = vmatpush1.msra.mxu0 0.0
  %1762 = vmatprep.subr.mxu0 0.0
  %1763 = vmatpush1.msra.mxu0 0.0
  %1764 = vmatprep.subr.mxu0 0.0
  %1765 = vmatpush1.msra.mxu0 0.0
  %1766 = vmatprep.subr.mxu0 0.0
  %1767 = vmatpush1.msra.mxu0 0.0
  %1768 = vmatprep.subr.mxu0 0.0
  %1769 = vmatpush1.msra.mxu0 0.0
  %1770 = vmatprep.subr.mxu0 0.0
  %1771 = vmatpush1.msra.mxu0 0.0
  %1772 = vmatprep.subr.mxu0 0.0
  %1773 = vmatpush1.msra.mxu0 0.0
  %1774 = vmatprep.subr.mxu0 0.0
  %1775 = vmatpush1.msra.mxu0 0.0
  %1776 = vmatprep.subr.mxu0 0.0
  %1777 = vmatpush1.msra.mxu0 0.0
  %1778 = vmatprep.subr.mxu0 0.0
  %1779 = vmatpush1.msra.mxu0 0.0
  %1780 = vmatprep.subr.mxu0 0.0
  %1781 = vmatpush1.msra.mxu0 0.0
  %1782 = vmatprep.subr.mxu0 0.0
  %1783 = vmatpush1.msra.mxu0 0.0
  %1784 = vmatprep.subr.mxu0 0.0
  %1785 = vmatpush1.msra.mxu0 0.0
  %1786 = vmatprep.subr.mxu0 0.0
  %1787 = vmatpush1.msra.mxu0 0.0
  %1788 = vmatprep.mubr.f32.mxu0 0.0
  %1789 = vmatmul.mubr.f32.gmra.mrb[0].mxu0 %v1723
  %v1790 = vpop.f32.mrb[0].mxu0
  %v1791 = vadd.f32 0.0, %v1790
  %v1792 = vpop.f32.mrb[0].mxu0
  %1793 = vdwg.mxu0
  %v1794 = vmul.f32 %v1294, 1.442695
  %v1795 = vpow.pop %v1794
  %1796 = vrot.lane.b32.xlu0 %v1795, 32
  %v1797 = vpop.permute.xlu0 %1796
  %v1798 = vadd.f32 %v1795, %v1797
  %1799 = vrot.lane.b32.xlu0 %v1798, 64
  %v1800 = vpop.permute.xlu0 %1799
  %v1801 = vadd.f32 %v1798, %v1800
  %v1802 = vrcp.pop %v1801
  %v1803 = vmul.f32 %v1795, %v1802
  %v1804 = vmul.f32 %v1803, %v545
  %v1805 = vmul.f32 %v1365, 1.442695
  %v1806 = vpow.pop %v1805
  %1807 = vrot.lane.b32.xlu0 %v1806, 32
  %v1808 = vpop.permute.xlu0 %1807
  %v1809 = vadd.f32 %v1806, %v1808
  %1810 = vrot.lane.b32.xlu0 %v1809, 64
  %v1811 = vpop.permute.xlu0 %1810
  %v1812 = vadd.f32 %v1809, %v1811
  %v1813 = vrcp.pop %v1812
  %v1814 = vmul.f32 %v1806, %v1813
  %v1815 = vmul.f32 %v1814, %v629
  %v1816 = vadd.f32 %v1804, %v1815
  %v1817 = vmul.f32 %v1436, 1.442695
  %v1818 = vpow.pop %v1817
  %1819 = vrot.lane.b32.xlu0 %v1818, 32
  %v1820 = vpop.permute.xlu0 %1819
  %v1821 = vadd.f32 %v1818, %v1820
  %1822 = vrot.lane.b32.xlu0 %v1821, 64
  %v1823 = vpop.permute.xlu0 %1822
  %v1824 = vadd.f32 %v1821, %v1823
  %v1825 = vrcp.pop %v1824
  %v1826 = vmul.f32 %v1818, %v1825
  %v1827 = vmul.f32 %v1826, %v713
  %v1828 = vadd.f32 %v1816, %v1827
  %v1829 = vmul.f32 %v1507, 1.442695
  %v1830 = vpow.pop %v1829
  %1831 = vrot.lane.b32.xlu0 %v1830, 32
  %v1832 = vpop.permute.xlu0 %1831
  %v1833 = vadd.f32 %v1830, %v1832
  %1834 = vrot.lane.b32.xlu0 %v1833, 64
  %v1835 = vpop.permute.xlu0 %1834
  %v1836 = vadd.f32 %v1833, %v1835
  %v1837 = vrcp.pop %v1836
  %v1838 = vmul.f32 %v1830, %v1837
  %v1839 = vmul.f32 %v1838, %v797
  %v1840 = vadd.f32 %v1828, %v1839
  %v1841 = vmul.f32 %v1578, 1.442695
  %v1842 = vpow.pop %v1841
  %1843 = vrot.lane.b32.xlu0 %v1842, 32
  %v1844 = vpop.permute.xlu0 %1843
  %v1845 = vadd.f32 %v1842, %v1844
  %1846 = vrot.lane.b32.xlu0 %v1845, 64
  %v1847 = vpop.permute.xlu0 %1846
  %v1848 = vadd.f32 %v1845, %v1847
  %v1849 = vrcp.pop %v1848
  %v1850 = vmul.f32 %v1842, %v1849
  %v1851 = vmul.f32 %v1850, %v881
  %v1852 = vadd.f32 %v1840, %v1851
  %v1853 = vmul.f32 %v1649, 1.442695
  %v1854 = vpow.pop %v1853
  %1855 = vrot.lane.b32.xlu0 %v1854, 32
  %v1856 = vpop.permute.xlu0 %1855
  %v1857 = vadd.f32 %v1854, %v1856
  %1858 = vrot.lane.b32.xlu0 %v1857, 64
  %v1859 = vpop.permute.xlu0 %1858
  %v1860 = vadd.f32 %v1857, %v1859
  %v1861 = vrcp.pop %v1860
  %v1862 = vmul.f32 %v1854, %v1861
  %v1863 = vmul.f32 %v1862, %v965
  %v1864 = vadd.f32 %v1852, %v1863
  %v1865 = vmul.f32 %v1720, 1.442695
  %v1866 = vpow.pop %v1865
  %1867 = vrot.lane.b32.xlu0 %v1866, 32
  %v1868 = vpop.permute.xlu0 %1867
  %v1869 = vadd.f32 %v1866, %v1868
  %1870 = vrot.lane.b32.xlu0 %v1869, 64
  %v1871 = vpop.permute.xlu0 %1870
  %v1872 = vadd.f32 %v1869, %v1871
  %v1873 = vrcp.pop %v1872
  %v1874 = vmul.f32 %v1866, %v1873
  %v1875 = vmul.f32 %v1874, %v1049
  %v1876 = vadd.f32 %v1864, %v1875
  %v1877 = vmul.f32 %v1791, 1.442695
  %v1878 = vpow.pop %v1877
  %1879 = vrot.lane.b32.xlu0 %v1878, 32
  %v1880 = vpop.permute.xlu0 %1879
  %v1881 = vadd.f32 %v1878, %v1880
  %1882 = vrot.lane.b32.xlu0 %v1881, 64
  %v1883 = vpop.permute.xlu0 %1882
  %v1884 = vadd.f32 %v1881, %v1883
  %v1885 = vrcp.pop %v1884
  %v1886 = vmul.f32 %v1878, %v1885
  %v1887 = vmul.f32 %v1886, %v1133
  %v1888 = vadd.f32 %v1876, %v1887
  %v1889 = vmul.f32 %v1888, %v1888
  %1890 = vmatprep.subr.mxu0 0.0
  %1891 = vmatpush1.msra.mxu0 %v146
  %1892 = vmatprep.subr.mxu0 0.0
  %1893 = vmatpush1.msra.mxu0 %v147
  %1894 = vmatprep.subr.mxu0 0.0
  %1895 = vmatpush1.msra.mxu0 %v148
  %1896 = vmatprep.subr.mxu0 0.0
  %1897 = vmatpush1.msra.mxu0 %v149
  %1898 = vmatprep.subr.mxu0 0.0
  %1899 = vmatpush1.msra.mxu0 %v150
  %1900 = vmatprep.subr.mxu0 0.0
  %1901 = vmatpush1.msra.mxu0 %v151
  %1902 = vmatprep.subr.mxu0 0.0
  %1903 = vmatpush1.msra.mxu0 %v152
  %1904 = vmatprep.subr.mxu0 0.0
  %1905 = vmatpush1.msra.mxu0 %v153
  %1906 = vmatprep.subr.mxu0 0.0
  %1907 = vmatpush1.msra.mxu0 %v154
  %1908 = vmatprep.subr.mxu0 0.0
  %1909 = vmatpush1.msra.mxu0 %v155
  %1910 = vmatprep.subr.mxu0 0.0
  %1911 = vmatpush1.msra.mxu0 %v156
  %1912 = vmatprep.subr.mxu0 0.0
  %1913 = vmatpush1.msra.mxu0 %v157
  %1914 = vmatprep.subr.mxu0 0.0
  %1915 = vmatpush1.msra.mxu0 %v158
  %1916 = vmatprep.subr.mxu0 0.0
  %1917 = vmatpush1.msra.mxu0 %v159
  %1918 = vmatprep.subr.mxu0 0.0
  %1919 = vmatpush1.msra.mxu0 %v160
  %1920 = vmatprep.subr.mxu0 0.0
  %1921 = vmatpush1.msra.mxu0 %v161
  %1922 = vmatprep.subr.mxu0 0.0
  %1923 = vmatpush1.msra.mxu0 0.0
  %1924 = vmatprep.subr.mxu0 0.0
  %1925 = vmatpush1.msra.mxu0 0.0
  %1926 = vmatprep.subr.mxu0 0.0
  %1927 = vmatpush1.msra.mxu0 0.0
  %1928 = vmatprep.subr.mxu0 0.0
  %1929 = vmatpush1.msra.mxu0 0.0
  %1930 = vmatprep.subr.mxu0 0.0
  %1931 = vmatpush1.msra.mxu0 0.0
  %1932 = vmatprep.subr.mxu0 0.0
  %1933 = vmatpush1.msra.mxu0 0.0
  %1934 = vmatprep.subr.mxu0 0.0
  %1935 = vmatpush1.msra.mxu0 0.0
  %1936 = vmatprep.subr.mxu0 0.0
  %1937 = vmatpush1.msra.mxu0 0.0
  %1938 = vmatprep.subr.mxu0 0.0
  %1939 = vmatpush1.msra.mxu0 0.0
  %1940 = vmatprep.subr.mxu0 0.0
  %1941 = vmatpush1.msra.mxu0 0.0
  %1942 = vmatprep.subr.mxu0 0.0
  %1943 = vmatpush1.msra.mxu0 0.0
  %1944 = vmatprep.subr.mxu0 0.0
  %1945 = vmatpush1.msra.mxu0 0.0
  %1946 = vmatprep.subr.mxu0 0.0
  %1947 = vmatpush1.msra.mxu0 0.0
  %1948 = vmatprep.subr.mxu0 0.0
  %1949 = vmatpush1.msra.mxu0 0.0
  %1950 = vmatprep.subr.mxu0 0.0
  %1951 = vmatpush1.msra.mxu0 0.0
  %1952 = vmatprep.subr.mxu0 0.0
  %1953 = vmatpush1.msra.mxu0 0.0
  %1954 = vmatprep.mubr.f32.mxu0 0.0
  %1955 = vmatmul.mubr.f32.gmra.mrb[0].mxu0 %v1889
  %v1956 = vpop.f32.mrb[0].mxu0
  %v1957 = vadd.f32 0.0, %v1956
  %v1958 = vpop.f32.mrb[0].mxu0
  %1959 = vdwg.mxu0
  %v1960 = vrsqrt.pop %v1957
  %v1961 = vmul.f32 %v1957, %v1960
  %vm1962 = vcmp.eq.f32.partialorder %v1957, inf
  %v1963 = vsel %vm1962, %v1957, %v1961
  %vm1964 = vcmp.eq.f32.partialorder %v1957, 0.0
  %v1965 = vand.u32 %v1957, 2147483648
  %v1966 = vsel %vm1964, %v1965, %v1963
  %v1967 = vadd.f32 %v1957, 1.0
  %v1968 = vadd.f32 %v1966, 1e-08
  %v1969 = vmul.f32 %v1967, %v1968
  %v1970 = vrcp.pop %v1969
  %v1971 = vmul.f32 %v1966, %v1970
  %v1972 = vmul.f32 %v1888, %v1971
  %v1973 = vmul.f32 %v545, %v1972
  %1974 = vmatprep.subr.mxu0 0.0
  %1975 = vmatpush1.msra.mxu0 %v162
  %1976 = vmatprep.subr.mxu0 0.0
  %1977 = vmatpush1.msra.mxu0 %v163
  %1978 = vmatprep.subr.mxu0 0.0
  %1979 = vmatpush1.msra.mxu0 %v164
  %1980 = vmatprep.subr.mxu0 0.0
  %1981 = vmatpush1.msra.mxu0 %v165
  %1982 = vmatprep.subr.mxu0 0.0
  %1983 = vmatpush1.msra.mxu0 %v166
  %1984 = vmatprep.subr.mxu0 0.0
  %1985 = vmatpush1.msra.mxu0 %v167
  %1986 = vmatprep.subr.mxu0 0.0
  %1987 = vmatpush1.msra.mxu0 %v168
  %1988 = vmatprep.subr.mxu0 0.0
  %1989 = vmatpush1.msra.mxu0 %v169
  %1990 = vmatprep.subr.mxu0 0.0
  %1991 = vmatpush1.msra.mxu0 %v170
  %1992 = vmatprep.subr.mxu0 0.0
  %1993 = vmatpush1.msra.mxu0 %v171
  %1994 = vmatprep.subr.mxu0 0.0
  %1995 = vmatpush1.msra.mxu0 %v172
  %1996 = vmatprep.subr.mxu0 0.0
  %1997 = vmatpush1.msra.mxu0 %v173
  %1998 = vmatprep.subr.mxu0 0.0
  %1999 = vmatpush1.msra.mxu0 %v174
  %2000 = vmatprep.subr.mxu0 0.0
  %2001 = vmatpush1.msra.mxu0 %v175
  %2002 = vmatprep.subr.mxu0 0.0
  %2003 = vmatpush1.msra.mxu0 %v176
  %2004 = vmatprep.subr.mxu0 0.0
  %2005 = vmatpush1.msra.mxu0 %v177
  %2006 = vmatprep.subr.mxu0 0.0
  %2007 = vmatpush1.msra.mxu0 0.0
  %2008 = vmatprep.subr.mxu0 0.0
  %2009 = vmatpush1.msra.mxu0 0.0
  %2010 = vmatprep.subr.mxu0 0.0
  %2011 = vmatpush1.msra.mxu0 0.0
  %2012 = vmatprep.subr.mxu0 0.0
  %2013 = vmatpush1.msra.mxu0 0.0
  %2014 = vmatprep.subr.mxu0 0.0
  %2015 = vmatpush1.msra.mxu0 0.0
  %2016 = vmatprep.subr.mxu0 0.0
  %2017 = vmatpush1.msra.mxu0 0.0
  %2018 = vmatprep.subr.mxu0 0.0
  %2019 = vmatpush1.msra.mxu0 0.0
  %2020 = vmatprep.subr.mxu0 0.0
  %2021 = vmatpush1.msra.mxu0 0.0
  %2022 = vmatprep.subr.mxu0 0.0
  %2023 = vmatpush1.msra.mxu0 0.0
  %2024 = vmatprep.subr.mxu0 0.0
  %2025 = vmatpush1.msra.mxu0 0.0
  %2026 = vmatprep.subr.mxu0 0.0
  %2027 = vmatpush1.msra.mxu0 0.0
  %2028 = vmatprep.subr.mxu0 0.0
  %2029 = vmatpush1.msra.mxu0 0.0
  %2030 = vmatprep.subr.mxu0 0.0
  %2031 = vmatpush1.msra.mxu0 0.0
  %2032 = vmatprep.subr.mxu0 0.0
  %2033 = vmatpush1.msra.mxu0 0.0
  %2034 = vmatprep.subr.mxu0 0.0
  %2035 = vmatpush1.msra.mxu0 0.0
  %2036 = vmatprep.subr.mxu0 0.0
  %2037 = vmatpush1.msra.mxu0 0.0
  %2038 = vmatprep.mubr.f32.mxu0 0.0
  %2039 = vmatmul.mubr.f32.gmra.mrb[0].mxu0 %v1973
  %v2040 = vpop.f32.mrb[0].mxu0
  %v2041 = vadd.f32 0.0, %v2040
  %v2042 = vpop.f32.mrb[0].mxu0
  %2043 = vdwg.mxu0
  %v2044 = vadd.f32 %v1294, %v2041
  %v2045 = vmul.f32 %v629, %v1972
  %2046 = vmatprep.subr.mxu0 0.0
  %2047 = vmatpush1.msra.mxu0 %v162
  %2048 = vmatprep.subr.mxu0 0.0
  %2049 = vmatpush1.msra.mxu0 %v163
  %2050 = vmatprep.subr.mxu0 0.0
  %2051 = vmatpush1.msra.mxu0 %v164
  %2052 = vmatprep.subr.mxu0 0.0
  %2053 = vmatpush1.msra.mxu0 %v165
  %2054 = vmatprep.subr.mxu0 0.0
  %2055 = vmatpush1.msra.mxu0 %v166
  %2056 = vmatprep.subr.mxu0 0.0
  %2057 = vmatpush1.msra.mxu0 %v167
  %2058 = vmatprep.subr.mxu0 0.0
  %2059 = vmatpush1.msra.mxu0 %v168
  %2060 = vmatprep.subr.mxu0 0.0
  %2061 = vmatpush1.msra.mxu0 %v169
  %2062 = vmatprep.subr.mxu0 0.0
  %2063 = vmatpush1.msra.mxu0 %v170
  %2064 = vmatprep.subr.mxu0 0.0
  %2065 = vmatpush1.msra.mxu0 %v171
  %2066 = vmatprep.subr.mxu0 0.0
  %2067 = vmatpush1.msra.mxu0 %v172
  %2068 = vmatprep.subr.mxu0 0.0
  %2069 = vmatpush1.msra.mxu0 %v173
  %2070 = vmatprep.subr.mxu0 0.0
  %2071 = vmatpush1.msra.mxu0 %v174
  %2072 = vmatprep.subr.mxu0 0.0
  %2073 = vmatpush1.msra.mxu0 %v175
  %2074 = vmatprep.subr.mxu0 0.0
  %2075 = vmatpush1.msra.mxu0 %v176
  %2076 = vmatprep.subr.mxu0 0.0
  %2077 = vmatpush1.msra.mxu0 %v177
  %2078 = vmatprep.subr.mxu0 0.0
  %2079 = vmatpush1.msra.mxu0 0.0
  %2080 = vmatprep.subr.mxu0 0.0
  %2081 = vmatpush1.msra.mxu0 0.0
  %2082 = vmatprep.subr.mxu0 0.0
  %2083 = vmatpush1.msra.mxu0 0.0
  %2084 = vmatprep.subr.mxu0 0.0
  %2085 = vmatpush1.msra.mxu0 0.0
  %2086 = vmatprep.subr.mxu0 0.0
  %2087 = vmatpush1.msra.mxu0 0.0
  %2088 = vmatprep.subr.mxu0 0.0
  %2089 = vmatpush1.msra.mxu0 0.0
  %2090 = vmatprep.subr.mxu0 0.0
  %2091 = vmatpush1.msra.mxu0 0.0
  %2092 = vmatprep.subr.mxu0 0.0
  %2093 = vmatpush1.msra.mxu0 0.0
  %2094 = vmatprep.subr.mxu0 0.0
  %2095 = vmatpush1.msra.mxu0 0.0
  %2096 = vmatprep.subr.mxu0 0.0
  %2097 = vmatpush1.msra.mxu0 0.0
  %2098 = vmatprep.subr.mxu0 0.0
  %2099 = vmatpush1.msra.mxu0 0.0
  %2100 = vmatprep.subr.mxu0 0.0
  %2101 = vmatpush1.msra.mxu0 0.0
  %2102 = vmatprep.subr.mxu0 0.0
  %2103 = vmatpush1.msra.mxu0 0.0
  %2104 = vmatprep.subr.mxu0 0.0
  %2105 = vmatpush1.msra.mxu0 0.0
  %2106 = vmatprep.subr.mxu0 0.0
  %2107 = vmatpush1.msra.mxu0 0.0
  %2108 = vmatprep.subr.mxu0 0.0
  %2109 = vmatpush1.msra.mxu0 0.0
  %2110 = vmatprep.mubr.f32.mxu0 0.0
  %2111 = vmatmul.mubr.f32.gmra.mrb[0].mxu0 %v2045
  %v2112 = vpop.f32.mrb[0].mxu0
  %v2113 = vadd.f32 0.0, %v2112
  %v2114 = vpop.f32.mrb[0].mxu0
  %2115 = vdwg.mxu0
  %v2116 = vadd.f32 %v1365, %v2113
  %v2117 = vmul.f32 %v713, %v1972
  %2118 = vmatprep.subr.mxu0 0.0
  %2119 = vmatpush1.msra.mxu0 %v162
  %2120 = vmatprep.subr.mxu0 0.0
  %2121 = vmatpush1.msra.mxu0 %v163
  %2122 = vmatprep.subr.mxu0 0.0
  %2123 = vmatpush1.msra.mxu0 %v164
  %2124 = vmatprep.subr.mxu0 0.0
  %2125 = vmatpush1.msra.mxu0 %v165
  %2126 = vmatprep.subr.mxu0 0.0
  %2127 = vmatpush1.msra.mxu0 %v166
  %2128 = vmatprep.subr.mxu0 0.0
  %2129 = vmatpush1.msra.mxu0 %v167
  %2130 = vmatprep.subr.mxu0 0.0
  %2131 = vmatpush1.msra.mxu0 %v168
  %2132 = vmatprep.subr.mxu0 0.0
  %2133 = vmatpush1.msra.mxu0 %v169
  %2134 = vmatprep.subr.mxu0 0.0
  %2135 = vmatpush1.msra.mxu0 %v170
  %2136 = vmatprep.subr.mxu0 0.0
  %2137 = vmatpush1.msra.mxu0 %v171
  %2138 = vmatprep.subr.mxu0 0.0
  %2139 = vmatpush1.msra.mxu0 %v172
  %2140 = vmatprep.subr.mxu0 0.0
  %2141 = vmatpush1.msra.mxu0 %v173
  %2142 = vmatprep.subr.mxu0 0.0
  %2143 = vmatpush1.msra.mxu0 %v174
  %2144 = vmatprep.subr.mxu0 0.0
  %2145 = vmatpush1.msra.mxu0 %v175
  %2146 = vmatprep.subr.mxu0 0.0
  %2147 = vmatpush1.msra.mxu0 %v176
  %2148 = vmatprep.subr.mxu0 0.0
  %2149 = vmatpush1.msra.mxu0 %v177
  %2150 = vmatprep.subr.mxu0 0.0
  %2151 = vmatpush1.msra.mxu0 0.0
  %2152 = vmatprep.subr.mxu0 0.0
  %2153 = vmatpush1.msra.mxu0 0.0
  %2154 = vmatprep.subr.mxu0 0.0
  %2155 = vmatpush1.msra.mxu0 0.0
  %2156 = vmatprep.subr.mxu0 0.0
  %2157 = vmatpush1.msra.mxu0 0.0
  %2158 = vmatprep.subr.mxu0 0.0
  %2159 = vmatpush1.msra.mxu0 0.0
  %2160 = vmatprep.subr.mxu0 0.0
  %2161 = vmatpush1.msra.mxu0 0.0
  %2162 = vmatprep.subr.mxu0 0.0
  %2163 = vmatpush1.msra.mxu0 0.0
  %2164 = vmatprep.subr.mxu0 0.0
  %2165 = vmatpush1.msra.mxu0 0.0
  %2166 = vmatprep.subr.mxu0 0.0
  %2167 = vmatpush1.msra.mxu0 0.0
  %2168 = vmatprep.subr.mxu0 0.0
  %2169 = vmatpush1.msra.mxu0 0.0
  %2170 = vmatprep.subr.mxu0 0.0
  %2171 = vmatpush1.msra.mxu0 0.0
  %2172 = vmatprep.subr.mxu0 0.0
  %2173 = vmatpush1.msra.mxu0 0.0
  %2174 = vmatprep.subr.mxu0 0.0
  %2175 = vmatpush1.msra.mxu0 0.0
  %2176 = vmatprep.subr.mxu0 0.0
  %2177 = vmatpush1.msra.mxu0 0.0
  %2178 = vmatprep.subr.mxu0 0.0
  %2179 = vmatpush1.msra.mxu0 0.0
  %2180 = vmatprep.subr.mxu0 0.0
  %2181 = vmatpush1.msra.mxu0 0.0
  %2182 = vmatprep.mubr.f32.mxu0 0.0
  %2183 = vmatmul.mubr.f32.gmra.mrb[0].mxu0 %v2117
  %v2184 = vpop.f32.mrb[0].mxu0
  %v2185 = vadd.f32 0.0, %v2184
  %v2186 = vpop.f32.mrb[0].mxu0
  %2187 = vdwg.mxu0
  %v2188 = vadd.f32 %v1436, %v2185
  %v2189 = vmul.f32 %v797, %v1972
  %2190 = vmatprep.subr.mxu0 0.0
  %2191 = vmatpush1.msra.mxu0 %v162
  %2192 = vmatprep.subr.mxu0 0.0
  %2193 = vmatpush1.msra.mxu0 %v163
  %2194 = vmatprep.subr.mxu0 0.0
  %2195 = vmatpush1.msra.mxu0 %v164
  %2196 = vmatprep.subr.mxu0 0.0
  %2197 = vmatpush1.msra.mxu0 %v165
  %2198 = vmatprep.subr.mxu0 0.0
  %2199 = vmatpush1.msra.mxu0 %v166
  %2200 = vmatprep.subr.mxu0 0.0
  %2201 = vmatpush1.msra.mxu0 %v167
  %2202 = vmatprep.subr.mxu0 0.0
  %2203 = vmatpush1.msra.mxu0 %v168
  %2204 = vmatprep.subr.mxu0 0.0
  %2205 = vmatpush1.msra.mxu0 %v169
  %2206 = vmatprep.subr.mxu0 0.0
  %2207 = vmatpush1.msra.mxu0 %v170
  %2208 = vmatprep.subr.mxu0 0.0
  %2209 = vmatpush1.msra.mxu0 %v171
  %2210 = vmatprep.subr.mxu0 0.0
  %2211 = vmatpush1.msra.mxu0 %v172
  %2212 = vmatprep.subr.mxu0 0.0
  %2213 = vmatpush1.msra.mxu0 %v173
  %2214 = vmatprep.subr.mxu0 0.0
  %2215 = vmatpush1.msra.mxu0 %v174
  %2216 = vmatprep.subr.mxu0 0.0
  %2217 = vmatpush1.msra.mxu0 %v175
  %2218 = vmatprep.subr.mxu0 0.0
  %2219 = vmatpush1.msra.mxu0 %v176
  %2220 = vmatprep.subr.mxu0 0.0
  %2221 = vmatpush1.msra.mxu0 %v177
  %2222 = vmatprep.subr.mxu0 0.0
  %2223 = vmatpush1.msra.mxu0 0.0
  %2224 = vmatprep.subr.mxu0 0.0
  %2225 = vmatpush1.msra.mxu0 0.0
  %2226 = vmatprep.subr.mxu0 0.0
  %2227 = vmatpush1.msra.mxu0 0.0
  %2228 = vmatprep.subr.mxu0 0.0
  %2229 = vmatpush1.msra.mxu0 0.0
  %2230 = vmatprep.subr.mxu0 0.0
  %2231 = vmatpush1.msra.mxu0 0.0
  %2232 = vmatprep.subr.mxu0 0.0
  %2233 = vmatpush1.msra.mxu0 0.0
  %2234 = vmatprep.subr.mxu0 0.0
  %2235 = vmatpush1.msra.mxu0 0.0
  %2236 = vmatprep.subr.mxu0 0.0
  %2237 = vmatpush1.msra.mxu0 0.0
  %2238 = vmatprep.subr.mxu0 0.0
  %2239 = vmatpush1.msra.mxu0 0.0
  %2240 = vmatprep.subr.mxu0 0.0
  %2241 = vmatpush1.msra.mxu0 0.0
  %2242 = vmatprep.subr.mxu0 0.0
  %2243 = vmatpush1.msra.mxu0 0.0
  %2244 = vmatprep.subr.mxu0 0.0
  %2245 = vmatpush1.msra.mxu0 0.0
  %2246 = vmatprep.subr.mxu0 0.0
  %2247 = vmatpush1.msra.mxu0 0.0
  %2248 = vmatprep.subr.mxu0 0.0
  %2249 = vmatpush1.msra.mxu0 0.0
  %2250 = vmatprep.subr.mxu0 0.0
  %2251 = vmatpush1.msra.mxu0 0.0
  %2252 = vmatprep.subr.mxu0 0.0
  %2253 = vmatpush1.msra.mxu0 0.0
  %2254 = vmatprep.mubr.f32.mxu0 0.0
  %2255 = vmatmul.mubr.f32.gmra.mrb[0].mxu0 %v2189
  %v2256 = vpop.f32.mrb[0].mxu0
  %v2257 = vadd.f32 0.0, %v2256
  %v2258 = vpop.f32.mrb[0].mxu0
  %2259 = vdwg.mxu0
  %v2260 = vadd.f32 %v1507, %v2257
  %v2261 = vmul.f32 %v881, %v1972
  %2262 = vmatprep.subr.mxu0 0.0
  %2263 = vmatpush1.msra.mxu0 %v162
  %2264 = vmatprep.subr.mxu0 0.0
  %2265 = vmatpush1.msra.mxu0 %v163
  %2266 = vmatprep.subr.mxu0 0.0
  %2267 = vmatpush1.msra.mxu0 %v164
  %2268 = vmatprep.subr.mxu0 0.0
  %2269 = vmatpush1.msra.mxu0 %v165
  %2270 = vmatprep.subr.mxu0 0.0
  %2271 = vmatpush1.msra.mxu0 %v166
  %2272 = vmatprep.subr.mxu0 0.0
  %2273 = vmatpush1.msra.mxu0 %v167
  %2274 = vmatprep.subr.mxu0 0.0
  %2275 = vmatpush1.msra.mxu0 %v168
  %2276 = vmatprep.subr.mxu0 0.0
  %2277 = vmatpush1.msra.mxu0 %v169
  %2278 = vmatprep.subr.mxu0 0.0
  %2279 = vmatpush1.msra.mxu0 %v170
  %2280 = vmatprep.subr.mxu0 0.0
  %2281 = vmatpush1.msra.mxu0 %v171
  %2282 = vmatprep.subr.mxu0 0.0
  %2283 = vmatpush1.msra.mxu0 %v172
  %2284 = vmatprep.subr.mxu0 0.0
  %2285 = vmatpush1.msra.mxu0 %v173
  %2286 = vmatprep.subr.mxu0 0.0
  %2287 = vmatpush1.msra.mxu0 %v174
  %2288 = vmatprep.subr.mxu0 0.0
  %2289 = vmatpush1.msra.mxu0 %v175
  %2290 = vmatprep.subr.mxu0 0.0
  %2291 = vmatpush1.msra.mxu0 %v176
  %2292 = vmatprep.subr.mxu0 0.0
  %2293 = vmatpush1.msra.mxu0 %v177
  %2294 = vmatprep.subr.mxu0 0.0
  %2295 = vmatpush1.msra.mxu0 0.0
  %2296 = vmatprep.subr.mxu0 0.0
  %2297 = vmatpush1.msra.mxu0 0.0
  %2298 = vmatprep.subr.mxu0 0.0
  %2299 = vmatpush1.msra.mxu0 0.0
  %2300 = vmatprep.subr.mxu0 0.0
  %2301 = vmatpush1.msra.mxu0 0.0
  %2302 = vmatprep.subr.mxu0 0.0
  %2303 = vmatpush1.msra.mxu0 0.0
  %2304 = vmatprep.subr.mxu0 0.0
  %2305 = vmatpush1.msra.mxu0 0.0
  %2306 = vmatprep.subr.mxu0 0.0
  %2307 = vmatpush1.msra.mxu0 0.0
  %2308 = vmatprep.subr.mxu0 0.0
  %2309 = vmatpush1.msra.mxu0 0.0
  %2310 = vmatprep.subr.mxu0 0.0
  %2311 = vmatpush1.msra.mxu0 0.0
  %2312 = vmatprep.subr.mxu0 0.0
  %2313 = vmatpush1.msra.mxu0 0.0
  %2314 = vmatprep.subr.mxu0 0.0
  %2315 = vmatpush1.msra.mxu0 0.0
  %2316 = vmatprep.subr.mxu0 0.0
  %2317 = vmatpush1.msra.mxu0 0.0
  %2318 = vmatprep.subr.mxu0 0.0
  %2319 = vmatpush1.msra.mxu0 0.0
  %2320 = vmatprep.subr.mxu0 0.0
  %2321 = vmatpush1.msra.mxu0 0.0
  %2322 = vmatprep.subr.mxu0 0.0
  %2323 = vmatpush1.msra.mxu0 0.0
  %2324 = vmatprep.subr.mxu0 0.0
  %2325 = vmatpush1.msra.mxu0 0.0
  %2326 = vmatprep.mubr.f32.mxu0 0.0
  %2327 = vmatmul.mubr.f32.gmra.mrb[0].mxu0 %v2261
  %v2328 = vpop.f32.mrb[0].mxu0
  %v2329 = vadd.f32 0.0, %v2328
  %v2330 = vpop.f32.mrb[0].mxu0
  %2331 = vdwg.mxu0
  %v2332 = vadd.f32 %v1578, %v2329
  %v2333 = vmul.f32 %v965, %v1972
  %2334 = vmatprep.subr.mxu0 0.0
  %2335 = vmatpush1.msra.mxu0 %v162
  %2336 = vmatprep.subr.mxu0 0.0
  %2337 = vmatpush1.msra.mxu0 %v163
  %2338 = vmatprep.subr.mxu0 0.0
  %2339 = vmatpush1.msra.mxu0 %v164
  %2340 = vmatprep.subr.mxu0 0.0
  %2341 = vmatpush1.msra.mxu0 %v165
  %2342 = vmatprep.subr.mxu0 0.0
  %2343 = vmatpush1.msra.mxu0 %v166
  %2344 = vmatprep.subr.mxu0 0.0
  %2345 = vmatpush1.msra.mxu0 %v167
  %2346 = vmatprep.subr.mxu0 0.0
  %2347 = vmatpush1.msra.mxu0 %v168
  %2348 = vmatprep.subr.mxu0 0.0
  %2349 = vmatpush1.msra.mxu0 %v169
  %2350 = vmatprep.subr.mxu0 0.0
  %2351 = vmatpush1.msra.mxu0 %v170
  %2352 = vmatprep.subr.mxu0 0.0
  %2353 = vmatpush1.msra.mxu0 %v171
  %2354 = vmatprep.subr.mxu0 0.0
  %2355 = vmatpush1.msra.mxu0 %v172
  %2356 = vmatprep.subr.mxu0 0.0
  %2357 = vmatpush1.msra.mxu0 %v173
  %2358 = vmatprep.subr.mxu0 0.0
  %2359 = vmatpush1.msra.mxu0 %v174
  %2360 = vmatprep.subr.mxu0 0.0
  %2361 = vmatpush1.msra.mxu0 %v175
  %2362 = vmatprep.subr.mxu0 0.0
  %2363 = vmatpush1.msra.mxu0 %v176
  %2364 = vmatprep.subr.mxu0 0.0
  %2365 = vmatpush1.msra.mxu0 %v177
  %2366 = vmatprep.subr.mxu0 0.0
  %2367 = vmatpush1.msra.mxu0 0.0
  %2368 = vmatprep.subr.mxu0 0.0
  %2369 = vmatpush1.msra.mxu0 0.0
  %2370 = vmatprep.subr.mxu0 0.0
  %2371 = vmatpush1.msra.mxu0 0.0
  %2372 = vmatprep.subr.mxu0 0.0
  %2373 = vmatpush1.msra.mxu0 0.0
  %2374 = vmatprep.subr.mxu0 0.0
  %2375 = vmatpush1.msra.mxu0 0.0
  %2376 = vmatprep.subr.mxu0 0.0
  %2377 = vmatpush1.msra.mxu0 0.0
  %2378 = vmatprep.subr.mxu0 0.0
  %2379 = vmatpush1.msra.mxu0 0.0
  %2380 = vmatprep.subr.mxu0 0.0
  %2381 = vmatpush1.msra.mxu0 0.0
  %2382 = vmatprep.subr.mxu0 0.0
  %2383 = vmatpush1.msra.mxu0 0.0
  %2384 = vmatprep.subr.mxu0 0.0
  %2385 = vmatpush1.msra.mxu0 0.0
  %2386 = vmatprep.subr.mxu0 0.0
  %2387 = vmatpush1.msra.mxu0 0.0
  %2388 = vmatprep.subr.mxu0 0.0
  %2389 = vmatpush1.msra.mxu0 0.0
  %2390 = vmatprep.subr.mxu0 0.0
  %2391 = vmatpush1.msra.mxu0 0.0
  %2392 = vmatprep.subr.mxu0 0.0
  %2393 = vmatpush1.msra.mxu0 0.0
  %2394 = vmatprep.subr.mxu0 0.0
  %2395 = vmatpush1.msra.mxu0 0.0
  %2396 = vmatprep.subr.mxu0 0.0
  %2397 = vmatpush1.msra.mxu0 0.0
  %2398 = vmatprep.mubr.f32.mxu0 0.0
  %2399 = vmatmul.mubr.f32.gmra.mrb[0].mxu0 %v2333
  %v2400 = vpop.f32.mrb[0].mxu0
  %v2401 = vadd.f32 0.0, %v2400
  %v2402 = vpop.f32.mrb[0].mxu0
  %2403 = vdwg.mxu0
  %v2404 = vadd.f32 %v1649, %v2401
  %v2405 = vmul.f32 %v1049, %v1972
  %2406 = vmatprep.subr.mxu0 0.0
  %2407 = vmatpush1.msra.mxu0 %v162
  %2408 = vmatprep.subr.mxu0 0.0
  %2409 = vmatpush1.msra.mxu0 %v163
  %2410 = vmatprep.subr.mxu0 0.0
  %2411 = vmatpush1.msra.mxu0 %v164
  %2412 = vmatprep.subr.mxu0 0.0
  %2413 = vmatpush1.msra.mxu0 %v165
  %2414 = vmatprep.subr.mxu0 0.0
  %2415 = vmatpush1.msra.mxu0 %v166
  %2416 = vmatprep.subr.mxu0 0.0
  %2417 = vmatpush1.msra.mxu0 %v167
  %2418 = vmatprep.subr.mxu0 0.0
  %2419 = vmatpush1.msra.mxu0 %v168
  %2420 = vmatprep.subr.mxu0 0.0
  %2421 = vmatpush1.msra.mxu0 %v169
  %2422 = vmatprep.subr.mxu0 0.0
  %2423 = vmatpush1.msra.mxu0 %v170
  %2424 = vmatprep.subr.mxu0 0.0
  %2425 = vmatpush1.msra.mxu0 %v171
  %2426 = vmatprep.subr.mxu0 0.0
  %2427 = vmatpush1.msra.mxu0 %v172
  %2428 = vmatprep.subr.mxu0 0.0
  %2429 = vmatpush1.msra.mxu0 %v173
  %2430 = vmatprep.subr.mxu0 0.0
  %2431 = vmatpush1.msra.mxu0 %v174
  %2432 = vmatprep.subr.mxu0 0.0
  %2433 = vmatpush1.msra.mxu0 %v175
  %2434 = vmatprep.subr.mxu0 0.0
  %2435 = vmatpush1.msra.mxu0 %v176
  %2436 = vmatprep.subr.mxu0 0.0
  %2437 = vmatpush1.msra.mxu0 %v177
  %2438 = vmatprep.subr.mxu0 0.0
  %2439 = vmatpush1.msra.mxu0 0.0
  %2440 = vmatprep.subr.mxu0 0.0
  %2441 = vmatpush1.msra.mxu0 0.0
  %2442 = vmatprep.subr.mxu0 0.0
  %2443 = vmatpush1.msra.mxu0 0.0
  %2444 = vmatprep.subr.mxu0 0.0
  %2445 = vmatpush1.msra.mxu0 0.0
  %2446 = vmatprep.subr.mxu0 0.0
  %2447 = vmatpush1.msra.mxu0 0.0
  %2448 = vmatprep.subr.mxu0 0.0
  %2449 = vmatpush1.msra.mxu0 0.0
  %2450 = vmatprep.subr.mxu0 0.0
  %2451 = vmatpush1.msra.mxu0 0.0
  %2452 = vmatprep.subr.mxu0 0.0
  %2453 = vmatpush1.msra.mxu0 0.0
  %2454 = vmatprep.subr.mxu0 0.0
  %2455 = vmatpush1.msra.mxu0 0.0
  %2456 = vmatprep.subr.mxu0 0.0
  %2457 = vmatpush1.msra.mxu0 0.0
  %2458 = vmatprep.subr.mxu0 0.0
  %2459 = vmatpush1.msra.mxu0 0.0
  %2460 = vmatprep.subr.mxu0 0.0
  %2461 = vmatpush1.msra.mxu0 0.0
  %2462 = vmatprep.subr.mxu0 0.0
  %2463 = vmatpush1.msra.mxu0 0.0
  %2464 = vmatprep.subr.mxu0 0.0
  %2465 = vmatpush1.msra.mxu0 0.0
  %2466 = vmatprep.subr.mxu0 0.0
  %2467 = vmatpush1.msra.mxu0 0.0
  %2468 = vmatprep.subr.mxu0 0.0
  %2469 = vmatpush1.msra.mxu0 0.0
  %2470 = vmatprep.mubr.f32.mxu0 0.0
  %2471 = vmatmul.mubr.f32.gmra.mrb[0].mxu0 %v2405
  %v2472 = vpop.f32.mrb[0].mxu0
  %v2473 = vadd.f32 0.0, %v2472
  %v2474 = vpop.f32.mrb[0].mxu0
  %2475 = vdwg.mxu0
  %v2476 = vadd.f32 %v1720, %v2473
  %v2477 = vmul.f32 %v1133, %v1972
  %2478 = vmatprep.subr.mxu0 0.0
  %2479 = vmatpush1.msra.mxu0 %v162
  %2480 = vmatprep.subr.mxu0 0.0
  %2481 = vmatpush1.msra.mxu0 %v163
  %2482 = vmatprep.subr.mxu0 0.0
  %2483 = vmatpush1.msra.mxu0 %v164
  %2484 = vmatprep.subr.mxu0 0.0
  %2485 = vmatpush1.msra.mxu0 %v165
  %2486 = vmatprep.subr.mxu0 0.0
  %2487 = vmatpush1.msra.mxu0 %v166
  %2488 = vmatprep.subr.mxu0 0.0
  %2489 = vmatpush1.msra.mxu0 %v167
  %2490 = vmatprep.subr.mxu0 0.0
  %2491 = vmatpush1.msra.mxu0 %v168
  %2492 = vmatprep.subr.mxu0 0.0
  %2493 = vmatpush1.msra.mxu0 %v169
  %2494 = vmatprep.subr.mxu0 0.0
  %2495 = vmatpush1.msra.mxu0 %v170
  %2496 = vmatprep.subr.mxu0 0.0
  %2497 = vmatpush1.msra.mxu0 %v171
  %2498 = vmatprep.subr.mxu0 0.0
  %2499 = vmatpush1.msra.mxu0 %v172
  %2500 = vmatprep.subr.mxu0 0.0
  %2501 = vmatpush1.msra.mxu0 %v173
  %2502 = vmatprep.subr.mxu0 0.0
  %2503 = vmatpush1.msra.mxu0 %v174
  %2504 = vmatprep.subr.mxu0 0.0
  %2505 = vmatpush1.msra.mxu0 %v175
  %2506 = vmatprep.subr.mxu0 0.0
  %2507 = vmatpush1.msra.mxu0 %v176
  %2508 = vmatprep.subr.mxu0 0.0
  %2509 = vmatpush1.msra.mxu0 %v177
  %2510 = vmatprep.subr.mxu0 0.0
  %2511 = vmatpush1.msra.mxu0 0.0
  %2512 = vmatprep.subr.mxu0 0.0
  %2513 = vmatpush1.msra.mxu0 0.0
  %2514 = vmatprep.subr.mxu0 0.0
  %2515 = vmatpush1.msra.mxu0 0.0
  %2516 = vmatprep.subr.mxu0 0.0
  %2517 = vmatpush1.msra.mxu0 0.0
  %2518 = vmatprep.subr.mxu0 0.0
  %2519 = vmatpush1.msra.mxu0 0.0
  %2520 = vmatprep.subr.mxu0 0.0
  %2521 = vmatpush1.msra.mxu0 0.0
  %2522 = vmatprep.subr.mxu0 0.0
  %2523 = vmatpush1.msra.mxu0 0.0
  %2524 = vmatprep.subr.mxu0 0.0
  %2525 = vmatpush1.msra.mxu0 0.0
  %2526 = vmatprep.subr.mxu0 0.0
  %2527 = vmatpush1.msra.mxu0 0.0
  %2528 = vmatprep.subr.mxu0 0.0
  %2529 = vmatpush1.msra.mxu0 0.0
  %2530 = vmatprep.subr.mxu0 0.0
  %2531 = vmatpush1.msra.mxu0 0.0
  %2532 = vmatprep.subr.mxu0 0.0
  %2533 = vmatpush1.msra.mxu0 0.0
  %2534 = vmatprep.subr.mxu0 0.0
  %2535 = vmatpush1.msra.mxu0 0.0
  %2536 = vmatprep.subr.mxu0 0.0
  %2537 = vmatpush1.msra.mxu0 0.0
  %2538 = vmatprep.subr.mxu0 0.0
  %2539 = vmatpush1.msra.mxu0 0.0
  %2540 = vmatprep.subr.mxu0 0.0
  %2541 = vmatpush1.msra.mxu0 0.0
  %2542 = vmatprep.mubr.f32.mxu0 0.0
  %2543 = vmatmul.mubr.f32.gmra.mrb[0].mxu0 %v2477
  %v2544 = vpop.f32.mrb[0].mxu0
  %v2545 = vadd.f32 0.0, %v2544
  %v2546 = vpop.f32.mrb[0].mxu0
  %2547 = vdwg.mxu0
  %v2548 = vadd.f32 %v1791, %v2545
  %v2549 = vmul.f32 %v2044, 1.442695
  %v2550 = vpow.pop %v2549
  %2551 = vrot.lane.b32.xlu0 %v2550, 32
  %v2552 = vpop.permute.xlu0 %2551
  %v2553 = vadd.f32 %v2550, %v2552
  %2554 = vrot.lane.b32.xlu0 %v2553, 64
  %v2555 = vpop.permute.xlu0 %2554
  %v2556 = vadd.f32 %v2553, %v2555
  %v2557 = vrcp.pop %v2556
  %v2558 = vmul.f32 %v2550, %v2557
  %v2559 = vmul.f32 %v2558, %v545
  %v2560 = vmul.f32 %v2116, 1.442695
  %v2561 = vpow.pop %v2560
  %2562 = vrot.lane.b32.xlu0 %v2561, 32
  %v2563 = vpop.permute.xlu0 %2562
  %v2564 = vadd.f32 %v2561, %v2563
  %2565 = vrot.lane.b32.xlu0 %v2564, 64
  %v2566 = vpop.permute.xlu0 %2565
  %v2567 = vadd.f32 %v2564, %v2566
  %v2568 = vrcp.pop %v2567
  %v2569 = vmul.f32 %v2561, %v2568
  %v2570 = vmul.f32 %v2569, %v629
  %v2571 = vadd.f32 %v2559, %v2570
  %v2572 = vmul.f32 %v2188, 1.442695
  %v2573 = vpow.pop %v2572
  %2574 = vrot.lane.b32.xlu0 %v2573, 32
  %v2575 = vpop.permute.xlu0 %2574
  %v2576 = vadd.f32 %v2573, %v2575
  %2577 = vrot.lane.b32.xlu0 %v2576, 64
  %v2578 = vpop.permute.xlu0 %2577
  %v2579 = vadd.f32 %v2576, %v2578
  %v2580 = vrcp.pop %v2579
  %v2581 = vmul.f32 %v2573, %v2580
  %v2582 = vmul.f32 %v2581, %v713
  %v2583 = vadd.f32 %v2571, %v2582
  %v2584 = vmul.f32 %v2260, 1.442695
  %v2585 = vpow.pop %v2584
  %2586 = vrot.lane.b32.xlu0 %v2585, 32
  %v2587 = vpop.permute.xlu0 %2586
  %v2588 = vadd.f32 %v2585, %v2587
  %2589 = vrot.lane.b32.xlu0 %v2588, 64
  %v2590 = vpop.permute.xlu0 %2589
  %v2591 = vadd.f32 %v2588, %v2590
  %v2592 = vrcp.pop %v2591
  %v2593 = vmul.f32 %v2585, %v2592
  %v2594 = vmul.f32 %v2593, %v797
  %v2595 = vadd.f32 %v2583, %v2594
  %v2596 = vmul.f32 %v2332, 1.442695
  %v2597 = vpow.pop %v2596
  %2598 = vrot.lane.b32.xlu0 %v2597, 32
  %v2599 = vpop.permute.xlu0 %2598
  %v2600 = vadd.f32 %v2597, %v2599
  %2601 = vrot.lane.b32.xlu0 %v2600, 64
  %v2602 = vpop.permute.xlu0 %2601
  %v2603 = vadd.f32 %v2600, %v2602
  %v2604 = vrcp.pop %v2603
  %v2605 = vmul.f32 %v2597, %v2604
  %v2606 = vmul.f32 %v2605, %v881
  %v2607 = vadd.f32 %v2595, %v2606
  %v2608 = vmul.f32 %v2404, 1.442695
  %v2609 = vpow.pop %v2608
  %2610 = vrot.lane.b32.xlu0 %v2609, 32
  %v2611 = vpop.permute.xlu0 %2610
  %v2612 = vadd.f32 %v2609, %v2611
  %2613 = vrot.lane.b32.xlu0 %v2612, 64
  %v2614 = vpop.permute.xlu0 %2613
  %v2615 = vadd.f32 %v2612, %v2614
  %v2616 = vrcp.pop %v2615
  %v2617 = vmul.f32 %v2609, %v2616
  %v2618 = vmul.f32 %v2617, %v965
  %v2619 = vadd.f32 %v2607, %v2618
  %v2620 = vmul.f32 %v2476, 1.442695
  %v2621 = vpow.pop %v2620
  %2622 = vrot.lane.b32.xlu0 %v2621, 32
  %v2623 = vpop.permute.xlu0 %2622
  %v2624 = vadd.f32 %v2621, %v2623
  %2625 = vrot.lane.b32.xlu0 %v2624, 64
  %v2626 = vpop.permute.xlu0 %2625
  %v2627 = vadd.f32 %v2624, %v2626
  %v2628 = vrcp.pop %v2627
  %v2629 = vmul.f32 %v2621, %v2628
  %v2630 = vmul.f32 %v2629, %v1049
  %v2631 = vadd.f32 %v2619, %v2630
  %v2632 = vmul.f32 %v2548, 1.442695
  %v2633 = vpow.pop %v2632
  %2634 = vrot.lane.b32.xlu0 %v2633, 32
  %v2635 = vpop.permute.xlu0 %2634
  %v2636 = vadd.f32 %v2633, %v2635
  %2637 = vrot.lane.b32.xlu0 %v2636, 64
  %v2638 = vpop.permute.xlu0 %2637
  %v2639 = vadd.f32 %v2636, %v2638
  %v2640 = vrcp.pop %v2639
  %v2641 = vmul.f32 %v2633, %v2640
  %v2642 = vmul.f32 %v2641, %v1133
  %v2643 = vadd.f32 %v2631, %v2642
  %v2644 = vmul.f32 %v2643, %v2643
  %2645 = vmatprep.subr.mxu0 0.0
  %2646 = vmatpush1.msra.mxu0 %v146
  %2647 = vmatprep.subr.mxu0 0.0
  %2648 = vmatpush1.msra.mxu0 %v147
  %2649 = vmatprep.subr.mxu0 0.0
  %2650 = vmatpush1.msra.mxu0 %v148
  %2651 = vmatprep.subr.mxu0 0.0
  %2652 = vmatpush1.msra.mxu0 %v149
  %2653 = vmatprep.subr.mxu0 0.0
  %2654 = vmatpush1.msra.mxu0 %v150
  %2655 = vmatprep.subr.mxu0 0.0
  %2656 = vmatpush1.msra.mxu0 %v151
  %2657 = vmatprep.subr.mxu0 0.0
  %2658 = vmatpush1.msra.mxu0 %v152
  %2659 = vmatprep.subr.mxu0 0.0
  %2660 = vmatpush1.msra.mxu0 %v153
  %2661 = vmatprep.subr.mxu0 0.0
  %2662 = vmatpush1.msra.mxu0 %v154
  %2663 = vmatprep.subr.mxu0 0.0
  %2664 = vmatpush1.msra.mxu0 %v155
  %2665 = vmatprep.subr.mxu0 0.0
  %2666 = vmatpush1.msra.mxu0 %v156
  %2667 = vmatprep.subr.mxu0 0.0
  %2668 = vmatpush1.msra.mxu0 %v157
  %2669 = vmatprep.subr.mxu0 0.0
  %2670 = vmatpush1.msra.mxu0 %v158
  %2671 = vmatprep.subr.mxu0 0.0
  %2672 = vmatpush1.msra.mxu0 %v159
  %2673 = vmatprep.subr.mxu0 0.0
  %2674 = vmatpush1.msra.mxu0 %v160
  %2675 = vmatprep.subr.mxu0 0.0
  %2676 = vmatpush1.msra.mxu0 %v161
  %2677 = vmatprep.subr.mxu0 0.0
  %2678 = vmatpush1.msra.mxu0 0.0
  %2679 = vmatprep.subr.mxu0 0.0
  %2680 = vmatpush1.msra.mxu0 0.0
  %2681 = vmatprep.subr.mxu0 0.0
  %2682 = vmatpush1.msra.mxu0 0.0
  %2683 = vmatprep.subr.mxu0 0.0
  %2684 = vmatpush1.msra.mxu0 0.0
  %2685 = vmatprep.subr.mxu0 0.0
  %2686 = vmatpush1.msra.mxu0 0.0
  %2687 = vmatprep.subr.mxu0 0.0
  %2688 = vmatpush1.msra.mxu0 0.0
  %2689 = vmatprep.subr.mxu0 0.0
  %2690 = vmatpush1.msra.mxu0 0.0
  %2691 = vmatprep.subr.mxu0 0.0
  %2692 = vmatpush1.msra.mxu0 0.0
  %2693 = vmatprep.subr.mxu0 0.0
  %2694 = vmatpush1.msra.mxu0 0.0
  %2695 = vmatprep.subr.mxu0 0.0
  %2696 = vmatpush1.msra.mxu0 0.0
  %2697 = vmatprep.subr.mxu0 0.0
  %2698 = vmatpush1.msra.mxu0 0.0
  %2699 = vmatprep.subr.mxu0 0.0
  %2700 = vmatpush1.msra.mxu0 0.0
  %2701 = vmatprep.subr.mxu0 0.0
  %2702 = vmatpush1.msra.mxu0 0.0
  %2703 = vmatprep.subr.mxu0 0.0
  %2704 = vmatpush1.msra.mxu0 0.0
  %2705 = vmatprep.subr.mxu0 0.0
  %2706 = vmatpush1.msra.mxu0 0.0
  %2707 = vmatprep.subr.mxu0 0.0
  %2708 = vmatpush1.msra.mxu0 0.0
  %2709 = vmatprep.mubr.f32.mxu0 0.0
  %2710 = vmatmul.mubr.f32.gmra.mrb[0].mxu0 %v2644
  %v2711 = vpop.f32.mrb[0].mxu0
  %v2712 = vadd.f32 0.0, %v2711
  %v2713 = vpop.f32.mrb[0].mxu0
  %2714 = vdwg.mxu0
  %v2715 = vrsqrt.pop %v2712
  %v2716 = vmul.f32 %v2712, %v2715
  %vm2717 = vcmp.eq.f32.partialorder %v2712, inf
  %v2718 = vsel %vm2717, %v2712, %v2716
  %vm2719 = vcmp.eq.f32.partialorder %v2712, 0.0
  %v2720 = vand.u32 %v2712, 2147483648
  %v2721 = vsel %vm2719, %v2720, %v2718
  %v2722 = vadd.f32 %v2712, 1.0
  %v2723 = vadd.f32 %v2721, 1e-08
  %v2724 = vmul.f32 %v2722, %v2723
  %v2725 = vrcp.pop %v2724
  %v2726 = vmul.f32 %v2721, %v2725
  %v2727 = vmul.f32 %v2643, %v2726
  %2728 = vst [vmem:[%s4] sm:$0x3] %v2727
  // Predicated region
  $region18: #{capsule_layer.1} parent=0 // pred_check
    _
  $region19: #{capsule_layer.1} parent=0 // pred_check_branch
    %2730 = sbr.rel (0) target = $region21
  $region20: #{capsule_layer.1} parent=0 // pred_region
    _
  $region21: #{capsule_layer.1} parent=0 // pred_fallthru
    _
  // Predicated region
  $region22: #{capsule_layer.1} parent=0 // pred_check
    _
  $region23: #{capsule_layer.1} parent=0 // pred_check_branch
    %2732 = sbr.rel (0) target = $region25
  $region24: #{capsule_layer.1} parent=0 // pred_region
    _
  $region25: #{capsule_layer.1} parent=0 // pred_fallthru
    _

</llo_original>
